<compile_context>
chip_gen: v5e
topology: v5e:2x2
jax: 0.10.0
libtpu: 0.0.40
codegen_flags: <defaults>
</compile_context>

<pallas_src>
import functools

import jax
import jax.numpy as jnp
import numpy as np
from jax.experimental import pallas as pl
from jax.experimental.pallas import tpu as pltpu

EMBED_DIM = 32      # stand-in for 1936 at small test scale
NHEAD = 4
DIM_FF = 64         # stand-in for 2048
SEQ_LEN = 8
BATCH = 2
LN_EPS = 1e-5
LANE = 128


def _round_up(x, m):
    return ((x + m - 1) // m) * m


# --------------------------------------------------------------------------- #
# Kernel
# --------------------------------------------------------------------------- #
def _encoder_layer_kernel(src_ref, mask_ref,
                          wq_ref, wk_ref, wv_ref, bq_ref, bk_ref, bv_ref,
                          wo_ref, bo_ref,
                          w1_ref, b1_ref, w2_ref, b2_ref,
                          g1_ref, be1_ref, g2_ref, be2_ref,
                          out_ref, attnw_ref=None, *, nhead, e_real):
    Bt, L, Ex = src_ref.shape
    Eh = wq_ref.shape[1]
    dh = Eh // nhead
    rows = Bt * L

    # Lane-validity mask so LayerNorm statistics cover only the real E columns.
    col = jax.lax.broadcasted_iota(jnp.int32, (1, Ex), 1)
    valid = (col < e_real).astype(jnp.float32)
    inv_e = 1.0 / float(e_real)

    def layer_norm(x, gamma, beta):
        mu = jnp.sum(x, axis=-1, keepdims=True) * inv_e
        d = (x - mu) * valid                       # padded columns forced to 0
        var = jnp.sum(d * d, axis=-1, keepdims=True) * inv_e
        return d * jax.lax.rsqrt(var + LN_EPS) * gamma + beta

    x3 = src_ref[...].astype(jnp.float32)          # (Bt, L, Ex)
    x2 = x3.reshape(rows, Ex)                      # tall slab for the MXU
    xb = x2.astype(jnp.bfloat16)
    mask = mask_ref[...]                           # (Bt, 1, L) additive f32 bias

    # ---- QKV projections: bf16 operands, f32 accumulation -------------------
    # 1/sqrt(dh) already folded into wq / bq host-side.
    q = jnp.dot(xb, wq_ref[...], preferred_element_type=jnp.float32) + bq_ref[...]
    k = jnp.dot(xb, wk_ref[...], preferred_element_type=jnp.float32) + bk_ref[...]
    v = jnp.dot(xb, wv_ref[...], preferred_element_type=jnp.float32) + bv_ref[...]

    # One whole-slab bf16 cast each (no per-head casts), then the head split.
    def to_heads(t):
        t = t.astype(jnp.bfloat16).reshape(Bt, L, nhead, dh)
        return t.transpose(0, 2, 1, 3).reshape(Bt * nhead, L, dh)

    qh = to_heads(q)
    kh = to_heads(k)
    vh = to_heads(v)

    # Key-padding bias, broadcast over heads once per grid step.
    maskh = jnp.broadcast_to(mask.reshape(Bt, 1, 1, L),
                             (Bt, nhead, 1, L)).reshape(Bt * nhead, 1, L)

    # ---- scaled dot-product attention, f32 softmax ---------------------------
    s = jnp.einsum("bqd,bkd->bqk", qh, kh,
                   preferred_element_type=jnp.float32)       # (Bt*H, L, L)
    s = s + maskh
    s = s - jnp.max(s, axis=-1, keepdims=True)
    p = jnp.exp(s)
    # approx reciprocal (EUP slot): rows sum to ~1, not exactly 1.
    # NOTE: a fully key-padded row yields uniform 1/L here (PyTorch returns NaN).
    p = p * pl.reciprocal(jnp.sum(p, axis=-1, keepdims=True), approx=True)

    ctx = jnp.einsum("bqk,bkd->bqd", p.astype(jnp.bfloat16), vh,
                     preferred_element_type=jnp.float32)     # (Bt*H, L, dh)
    ctx = ctx.reshape(Bt, nhead, L, dh).transpose(0, 2, 1, 3).reshape(rows, Eh)

    # Single out-projection matmul over the concatenated-head slab (no per-head
    # W_o row slicing).
    attn_out = jnp.dot(ctx.astype(jnp.bfloat16), wo_ref[...],
                       preferred_element_type=jnp.float32) + bo_ref[...]

    # ---- residual + LayerNorm1 (dropout1 == identity in eval) ---------------
    h1 = layer_norm(x2 + attn_out, g1_ref[...], be1_ref[...])

    # ---- feed-forward: linear1 -> relu -> (dropout == id) -> linear2 --------
    ff = jnp.dot(h1.astype(jnp.bfloat16), w1_ref[...],
                 preferred_element_type=jnp.float32) + b1_ref[...]
    ff = jnp.maximum(ff, 0.0)
    ff = jnp.dot(ff.astype(jnp.bfloat16), w2_ref[...],
                 preferred_element_type=jnp.float32) + b2_ref[...]

    # ---- residual + LayerNorm2 (dropout2 == identity in eval) ---------------
    h2 = layer_norm(h1 + ff, g2_ref[...], be2_ref[...])

    out_ref[...] = h2.reshape(Bt, L, Ex).astype(out_ref.dtype)

    if attnw_ref is not None:
        # Attention weights averaged over heads (nn.MultiheadAttention default),
        # zero-padded on the lane axis so the store is a dense vst stream.
        Lp = attnw_ref.shape[-1]
        attn_avg = jnp.sum(p.reshape(Bt, nhead, L, L), axis=1) * (1.0 / nhead)
        if Lp > L:
            attn_avg = jnp.concatenate(
                [attn_avg, jnp.zeros((Bt, L, Lp - L), jnp.float32)], axis=-1)
        attnw_ref[...] = attn_avg.astype(attnw_ref.dtype)


# --------------------------------------------------------------------------- #
# Host-side parameter prep (padding / head re-layout / bf16 / scale folding)
# --------------------------------------------------------------------------- #
def init_params(key, embed_dim=EMBED_DIM, dim_ff=DIM_FF):
    ks = jax.random.split(key, 8)
    s = 0.02
    p = {
        # already transposed so that projection is x @ W (i.e. W == torch_weight.T)
        "wq": jax.random.normal(ks[0], (embed_dim, embed_dim), jnp.float32) * s,
        "wk": jax.random.normal(ks[1], (embed_dim, embed_dim), jnp.float32) * s,
        "wv": jax.random.normal(ks[2], (embed_dim, embed_dim), jnp.float32) * s,
        "bq": jnp.zeros((1, embed_dim), jnp.float32),
        "bk": jnp.zeros((1, embed_dim), jnp.float32),
        "bv": jnp.zeros((1, embed_dim), jnp.float32),
        "wo": jax.random.normal(ks[3], (embed_dim, embed_dim), jnp.float32) * s,
        "bo": jax.random.normal(ks[4], (1, embed_dim), jnp.float32) * s,
        "w1": jax.random.normal(ks[5], (embed_dim, dim_ff), jnp.float32) * s,
        "b1": jnp.zeros((1, dim_ff), jnp.float32),
        "w2": jax.random.normal(ks[6], (dim_ff, embed_dim), jnp.float32) * s,
        "b2": jax.random.normal(ks[7], (1, embed_dim), jnp.float32) * s,
        "g1": jnp.ones((1, embed_dim), jnp.float32),
        "be1": jnp.zeros((1, embed_dim), jnp.float32),
        "g2": jnp.ones((1, embed_dim), jnp.float32),
        "be2": jnp.zeros((1, embed_dim), jnp.float32),
    }
    return p


_PARAM_ORDER = ["wq", "wk", "wv", "bq", "bk", "bv", "wo", "bo",
                "w1", "b1", "w2", "b2", "g1", "be1", "g2", "be2"]


def _pad_last(a, new):
    pad = new - a.shape[-1]
    if pad == 0:
        return a
    widths = [(0, 0)] * (a.ndim - 1) + [(0, pad)]
    return jnp.pad(a, widths)


def _pad_axis(a, axis, new):
    pad = new - a.shape[axis]
    if pad == 0:
        return a
    widths = [(0, 0)] * a.ndim
    widths[axis] = (0, pad)
    return jnp.pad(a, widths)


def _head_pad_cols(a, nhead, dh, dh_pad):
    """(rows, nhead*dh) -> (rows, nhead*dh_pad), zero-padding inside each head."""
    rows = a.shape[0]
    a = a.reshape(rows, nhead, dh)
    a = jnp.pad(a, ((0, 0), (0, 0), (0, dh_pad - dh)))
    return a.reshape(rows, nhead * dh_pad)


def _head_pad_rows(a, nhead, dh, dh_pad):
    """(nhead*dh, cols) -> (nhead*dh_pad, cols), zero-padding inside each head."""
    cols = a.shape[1]
    a = a.reshape(nhead, dh, cols)
    a = jnp.pad(a, ((0, 0), (0, dh_pad - dh), (0, 0)))
    return a.reshape(nhead * dh_pad, cols)


def _kernel_params(params, nhead):
    """Pad to lane-aligned dims, fold 1/sqrt(dh) into wq/bq, store weights bf16."""
    E = params["wq"].shape[0]
    dff = params["w1"].shape[1]
    dh = E // nhead
    dh_pad = _round_up(dh, LANE)
    Eh = nhead * dh_pad                 # head-structured (concat) dim
    Ex = _round_up(E, LANE)             # embedding / residual dim
    dffp = _round_up(dff, LANE)
    scale = 1.0 / float(np.sqrt(dh))

    def qkv_w(w, s=1.0):
        w = _pad_axis(w * s, 0, Ex)
        w = _head_pad_cols(w, nhead, dh, dh_pad)
        return w.astype(jnp.bfloat16)

    def qkv_b(b, s=1.0):
        return _head_pad_cols(b * s, nhead, dh, dh_pad)     # stays f32

    prep = {
        "wq": qkv_w(params["wq"], scale),
        "wk": qkv_w(params["wk"]),
        "wv": qkv_w(params["wv"]),
        "bq": qkv_b(params["bq"], scale),
        "bk": qkv_b(params["bk"]),
        "bv": qkv_b(params["bv"]),
        "wo": _pad_axis(_head_pad_rows(params["wo"], nhead, dh, dh_pad),
                        1, Ex).astype(jnp.bfloat16),
        "bo": _pad_last(params["bo"], Ex),
        "w1": _pad_axis(_pad_last(params["w1"], dffp), 0, Ex).astype(jnp.bfloat16),
        "b1": _pad_last(params["b1"], dffp),
        "w2": _pad_axis(_pad_last(params["w2"], Ex), 0, dffp).astype(jnp.bfloat16),
        "b2": _pad_last(params["b2"], Ex),
        "g1": _pad_last(params["g1"], Ex),      # padded gammas/betas are zero
        "be1": _pad_last(params["be1"], Ex),
        "g2": _pad_last(params["g2"], Ex),
        "be2": _pad_last(params["be2"], Ex),
    }
    return [prep[k] for k in _PARAM_ORDER], (Ex, Eh, dffp)


# --------------------------------------------------------------------------- #
# Wrapper
# --------------------------------------------------------------------------- #
def _vmem_capacity_bytes():
    try:
        info = pltpu.get_tpu_info()
        return int(getattr(info, "vmem_capacity_bytes", 64 * 1024 * 1024))
    except Exception:
        return 64 * 1024 * 1024


def _choose_block_batch(n, seq_len, target_rows):
    bt = max(1, min(n, target_rows // max(seq_len, 1)))
    if n >= 2:
        # keep >= 2 grid steps so both v7x TensorCores get a "parallel" slice
        bt = min(bt, (n + 1) // 2)
    return max(bt, 1)


def transformer_encoder_layer(src, key_padding_mask, params, nhead=NHEAD,
                              need_weights=True):
    """src: (L, N, E) float32; key_padding_mask: (N, L) bool (True = pad).

    Returns (out (L, N, E), attn_weights (N, L, L) or None).
    Set need_weights=False in production to drop the attn-weight writeback.
    """
    L, N, E = src.shape
    param_arrays, (Ex, Eh, dffp) = _kernel_params(params, nhead)
    Lp = _round_up(L, LANE)                       # lane-dense attn-weight slab

    vmem_cap = _vmem_capacity_bytes()
    # Smaller activation slabs on v7x (64 MiB / TC), bigger on v5e/v6e (128 MiB).
    target_rows = 256 if vmem_cap <= 64 * 1024 * 1024 else 512
    bt = _choose_block_batch(N, L, target_rows)
    n_pad = pl.cdiv(N, bt) * bt                   # pad N instead of forcing bt=1
    grid = (n_pad // bt,)
    vmem_limit = min(int(vmem_cap * 0.9), 110 * 1024 * 1024)

    src_nle = jnp.transpose(src, (1, 0, 2))                       # (N, L, E)
    src_nle = _pad_axis(_pad_last(src_nle, Ex), 0, n_pad)         # (n_pad, L, Ex)
    mask_bias = jnp.where(key_padding_mask, -1e30, 0.0).astype(jnp.float32)
    mask_bias = _pad_axis(mask_bias.reshape(N, 1, L), 0, n_pad)   # (n_pad, 1, L)

    def build(single_buffer_weights):
        def weight_spec(arr):
            nd = arr.ndim
            idx = lambda b, _nd=nd: (0,) * _nd
            if single_buffer_weights:
                # constant index_map -> no need to double-buffer resident weights
                return pl.BlockSpec(arr.shape, idx, pipeline_mode=pl.Buffered(1))
            return pl.BlockSpec(arr.shape, idx)

        in_specs = [
            pl.BlockSpec((bt, L, Ex), lambda b: (b, 0, 0)),       # src block
            pl.BlockSpec((bt, 1, L), lambda b: (b, 0, 0)),        # mask block
        ] + [weight_spec(a) for a in param_arrays]

        out_spec_x = pl.BlockSpec((bt, L, Ex), lambda b: (b, 0, 0))
        if need_weights:
            out_specs = [out_spec_x,
                         pl.BlockSpec((bt, L, Lp), lambda b: (b, 0, 0))]
            out_shape = (jax.ShapeDtypeStruct((n_pad, L, Ex), src.dtype),
                         jax.ShapeDtypeStruct((n_pad, L, Lp), jnp.float32))
        else:
            out_specs = out_spec_x
            out_shape = jax.ShapeDtypeStruct((n_pad, L, Ex), src.dtype)

        grid_spec = pltpu.PrefetchScalarGridSpec(
            num_scalar_prefetch=0,
            grid=grid,
            in_specs=in_specs,
            out_specs=out_specs,
        )

        return pl.pallas_call(
            functools.partial(_encoder_layer_kernel, nhead=nhead, e_real=E),
            grid_spec=grid_spec,
            out_shape=out_shape,
            compiler_params=pltpu.CompilerParams(
                dimension_semantics=("parallel",),
                vmem_limit_bytes=vmem_limit),
        )(src_nle, mask_bias, *param_arrays)

    # Prefer single-buffered weight specs; fall back to default double-buffered
    # pipelining if the installed jax rejects pipeline_mode=pl.Buffered(1).
    try:
        result = jax.block_until_ready(build(True))
    except Exception:
        result = jax.block_until_ready(build(False))

    if need_weights:
        out_nle, attn_w = result
        attn_w = attn_w[:N, :, :L]
    else:
        out_nle, attn_w = result, None
    out = jnp.transpose(out_nle[:N, :, :E], (1, 0, 2))            # (L, N, E)
    return out, attn_w


# --------------------------------------------------------------------------- #
# Pure-JAX f32 reference (PyTorch semantics, eval mode)
# --------------------------------------------------------------------------- #
def reference(src, key_padding_mask, params, nhead=NHEAD):
    L, N, E = src.shape
    dh = E // nhead
    x = jnp.transpose(src, (1, 0, 2))                             # (N, L, E)
    P = params
    q = x @ P["wq"] + P["bq"]
    k = x @ P["wk"] + P["bk"]
    v = x @ P["wv"] + P["bv"]
    q = q.reshape(N, L, nhead, dh).transpose(0, 2, 1, 3) * (dh ** -0.5)
    k = k.reshape(N, L, nhead, dh).transpose(0, 2, 1, 3)
    v = v.reshape(N, L, nhead, dh).transpose(0, 2, 1, 3)
    s = jnp.einsum("nhqd,nhkd->nhqk", q, k)
    bias = jnp.where(key_padding_mask, -1e30, 0.0)[:, None, None, :]
    s = s + bias
    p = jax.nn.softmax(s, axis=-1)
    attn_w = jnp.mean(p, axis=1)                                  # (N, L, L)
    o = jnp.einsum("nhqk,nhkd->nhqd", p, v).transpose(0, 2, 1, 3).reshape(N, L, E)
    o = o @ P["wo"] + P["bo"]
    h1 = x + o
    mu = jnp.mean(h1, -1, keepdims=True)
    var = jnp.mean((h1 - mu) ** 2, -1, keepdims=True)
    h1 = (h1 - mu) / jnp.sqrt(var + LN_EPS) * P["g1"] + P["be1"]
    ff = jnp.maximum(h1 @ P["w1"] + P["b1"], 0.0) @ P["w2"] + P["b2"]
    h2 = h1 + ff
    mu2 = jnp.mean(h2, -1, keepdims=True)
    var2 = jnp.mean((h2 - mu2) ** 2, -1, keepdims=True)
    h2 = (h2 - mu2) / jnp.sqrt(var2 + LN_EPS) * P["g2"] + P["be2"]
    return jnp.transpose(h2, (1, 0, 2)), attn_w


if __name__ == "__main__":
    key = jax.random.PRNGKey(0)
    k_src, k_par = jax.random.split(key)

    src = jax.random.normal(k_src, (SEQ_LEN, BATCH, EMBED_DIM), jnp.float32)
    # batch 0: no padding; batch 1: last two positions padded
    key_padding_mask = jnp.array(
        [[False] * SEQ_LEN,
         [False] * (SEQ_LEN - 2) + [True, True]], dtype=bool)

    params = init_params(k_par)

    out, attn_w = transformer_encoder_layer(src, key_padding_mask, params)
    out = jax.block_until_ready(out)
    attn_w = jax.block_until_ready(attn_w)

    ref_out, ref_w = reference(src, key_padding_mask, params)
    assert out.shape == (SEQ_LEN, BATCH, EMBED_DIM)
    assert attn_w.shape == (BATCH, SEQ_LEN, SEQ_LEN)
    # Kernel runs matmuls with bf16 operands (f32 accumulation) and an approx
    # softmax reciprocal; reference is pure f32.
    np.testing.assert_allclose(np.asarray(out), np.asarray(ref_out),
                               rtol=2e-2, atol=2e-2)
    np.testing.assert_allclose(np.asarray(attn_w), np.asarray(ref_w),
                               rtol=2e-2, atol=5e-3)

    # Fast path without the attention-weight writeback stream.
    out_nw, attn_none = transformer_encoder_layer(
        src, key_padding_mask, params, need_weights=False)
    out_nw = jax.block_until_ready(out_nw)
    assert attn_none is None
    np.testing.assert_allclose(np.asarray(out_nw), np.asarray(out),
                               rtol=1e-5, atol=1e-5)

    print("KERNEL_OK")
</pallas_src>

<mosaic_0001>
module attributes {stable_mosaic.version = 11 : i64} {
  func.func @_encoder_layer_kernel(%arg0: i32, %arg1: memref<1x8x128xf32, #tpu.memory_space<vmem>>, %arg2: memref<1x1x8xf32, #tpu.memory_space<vmem>>, %arg3: memref<128x512xbf16, #tpu.memory_space<vmem>>, %arg4: memref<128x512xbf16, #tpu.memory_space<vmem>>, %arg5: memref<128x512xbf16, #tpu.memory_space<vmem>>, %arg6: memref<1x512xf32, #tpu.memory_space<vmem>>, %arg7: memref<1x512xf32, #tpu.memory_space<vmem>>, %arg8: memref<1x512xf32, #tpu.memory_space<vmem>>, %arg9: memref<512x128xbf16, #tpu.memory_space<vmem>>, %arg10: memref<1x128xf32, #tpu.memory_space<vmem>>, %arg11: memref<128x128xbf16, #tpu.memory_space<vmem>>, %arg12: memref<1x128xf32, #tpu.memory_space<vmem>>, %arg13: memref<128x128xbf16, #tpu.memory_space<vmem>>, %arg14: memref<1x128xf32, #tpu.memory_space<vmem>>, %arg15: memref<1x128xf32, #tpu.memory_space<vmem>>, %arg16: memref<1x128xf32, #tpu.memory_space<vmem>>, %arg17: memref<1x128xf32, #tpu.memory_space<vmem>>, %arg18: memref<1x128xf32, #tpu.memory_space<vmem>>, %arg19: memref<1x8x128xf32, #tpu.memory_space<vmem>>, %arg20: memref<1x8x128xf32, #tpu.memory_space<vmem>>) attributes {dimension_semantics = [#tpu.dimension_semantics<parallel>], iteration_bounds = array<i64: 2>, scalar_prefetch = 0 : i64, scratch_operands = 0 : i64, tpu.core_type = #tpu.core_type<tc>, window_params = [{transform_indices = @transform_0, window_bounds = array<i64: 1, 8, 128>}, {transform_indices = @transform_1, window_bounds = array<i64: 1, 1, 8>}, {pipeline_mode = #tpu.pipeline_mode<synchronous>, transform_indices = @transform_2, window_bounds = array<i64: 128, 512>}, {pipeline_mode = #tpu.pipeline_mode<synchronous>, transform_indices = @transform_3, window_bounds = array<i64: 128, 512>}, {pipeline_mode = #tpu.pipeline_mode<synchronous>, transform_indices = @transform_4, window_bounds = array<i64: 128, 512>}, {pipeline_mode = #tpu.pipeline_mode<synchronous>, transform_indices = @transform_5, window_bounds = array<i64: 1, 512>}, {pipeline_mode = #tpu.pipeline_mode<synchronous>, transform_indices = @transform_6, window_bounds = array<i64: 1, 512>}, {pipeline_mode = #tpu.pipeline_mode<synchronous>, transform_indices = @transform_7, window_bounds = array<i64: 1, 512>}, {pipeline_mode = #tpu.pipeline_mode<synchronous>, transform_indices = @transform_8, window_bounds = array<i64: 512, 128>}, {pipeline_mode = #tpu.pipeline_mode<synchronous>, transform_indices = @transform_9, window_bounds = array<i64: 1, 128>}, {pipeline_mode = #tpu.pipeline_mode<synchronous>, transform_indices = @transform_10, window_bounds = array<i64: 128, 128>}, {pipeline_mode = #tpu.pipeline_mode<synchronous>, transform_indices = @transform_11, window_bounds = array<i64: 1, 128>}, {pipeline_mode = #tpu.pipeline_mode<synchronous>, transform_indices = @transform_12, window_bounds = array<i64: 128, 128>}, {pipeline_mode = #tpu.pipeline_mode<synchronous>, transform_indices = @transform_13, window_bounds = array<i64: 1, 128>}, {pipeline_mode = #tpu.pipeline_mode<synchronous>, transform_indices = @transform_14, window_bounds = array<i64: 1, 128>}, {pipeline_mode = #tpu.pipeline_mode<synchronous>, transform_indices = @transform_15, window_bounds = array<i64: 1, 128>}, {pipeline_mode = #tpu.pipeline_mode<synchronous>, transform_indices = @transform_16, window_bounds = array<i64: 1, 128>}, {pipeline_mode = #tpu.pipeline_mode<synchronous>, transform_indices = @transform_17, window_bounds = array<i64: 1, 128>}, {transform_indices = @transform_18, window_bounds = array<i64: 1, 8, 128>}, {transform_indices = @transform_19, window_bounds = array<i64: 1, 8, 128>}]} {
    %0 = tpu.iota {dimensions = array<i32: 1>} : vector<1x128xi32>
    %c32_i32 = arith.constant 32 : i32
    %1 = vector.broadcast %c32_i32 : i32 to vector<1x128xi32>
    %2 = arith.cmpi slt, %0, %1 : vector<1x128xi32>
    %3 = arith.extui %2 : vector<1x128xi1> to vector<1x128xi32>
    %4 = arith.sitofp %3 : vector<1x128xi32> to vector<1x128xf32>
    %c0 = arith.constant 0 : index
    %c0_0 = arith.constant 0 : index
    %c0_1 = arith.constant 0 : index
    %5 = vector.load %arg1[%c0, %c0_0, %c0_1] : memref<1x8x128xf32, #tpu.memory_space<vmem>>, vector<1x8x128xf32>
    %6 = vector.shape_cast %5 : vector<1x8x128xf32> to vector<8x128xf32>
    %7 = arith.truncf %6 : vector<8x128xf32> to vector<8x128xbf16>
    %c0_2 = arith.constant 0 : index
    %c0_3 = arith.constant 0 : index
    %c0_4 = arith.constant 0 : index
    %8 = vector.load %arg2[%c0_2, %c0_3, %c0_4] : memref<1x1x8xf32, #tpu.memory_space<vmem>>, vector<1x1x8xf32>
    %c0_5 = arith.constant 0 : index
    %c0_6 = arith.constant 0 : index
    %9 = vector.load %arg3[%c0_5, %c0_6] : memref<128x512xbf16, #tpu.memory_space<vmem>>, vector<128x512xbf16>
    %cst = arith.constant dense<0.000000e+00> : vector<8x512xf32>
    %10 = tpu.matmul %7, %9, %cst {dimension_numbers = #tpu.dot_dimension_numbers<[1], [0], [0], [1], [0, 0, 1, 1], [], []>} : vector<8x128xbf16>, vector<128x512xbf16>, vector<8x512xf32> -> vector<8x512xf32>
    %c0_7 = arith.constant 0 : index
    %c0_8 = arith.constant 0 : index
    %11 = vector.load %arg6[%c0_7, %c0_8] : memref<1x512xf32, #tpu.memory_space<vmem>>, vector<1x512xf32>
    %12 = vector.broadcast %11 : vector<1x512xf32> to vector<8x512xf32>
    %13 = arith.addf %10, %12 : vector<8x512xf32>
    %c0_9 = arith.constant 0 : index
    %c0_10 = arith.constant 0 : index
    %14 = vector.load %arg4[%c0_9, %c0_10] : memref<128x512xbf16, #tpu.memory_space<vmem>>, vector<128x512xbf16>
    %cst_11 = arith.constant dense<0.000000e+00> : vector<8x512xf32>
    %15 = tpu.matmul %7, %14, %cst_11 {dimension_numbers = #tpu.dot_dimension_numbers<[1], [0], [0], [1], [0, 0, 1, 1], [], []>} : vector<8x128xbf16>, vector<128x512xbf16>, vector<8x512xf32> -> vector<8x512xf32>
    %c0_12 = arith.constant 0 : index
    %c0_13 = arith.constant 0 : index
    %16 = vector.load %arg7[%c0_12, %c0_13] : memref<1x512xf32, #tpu.memory_space<vmem>>, vector<1x512xf32>
    %17 = vector.broadcast %16 : vector<1x512xf32> to vector<8x512xf32>
    %18 = arith.addf %15, %17 : vector<8x512xf32>
    %c0_14 = arith.constant 0 : index
    %c0_15 = arith.constant 0 : index
    %19 = vector.load %arg5[%c0_14, %c0_15] : memref<128x512xbf16, #tpu.memory_space<vmem>>, vector<128x512xbf16>
    %cst_16 = arith.constant dense<0.000000e+00> : vector<8x512xf32>
    %20 = tpu.matmul %7, %19, %cst_16 {dimension_numbers = #tpu.dot_dimension_numbers<[1], [0], [0], [1], [0, 0, 1, 1], [], []>} : vector<8x128xbf16>, vector<128x512xbf16>, vector<8x512xf32> -> vector<8x512xf32>
    %c0_17 = arith.constant 0 : index
    %c0_18 = arith.constant 0 : index
    %21 = vector.load %arg8[%c0_17, %c0_18] : memref<1x512xf32, #tpu.memory_space<vmem>>, vector<1x512xf32>
    %22 = vector.broadcast %21 : vector<1x512xf32> to vector<8x512xf32>
    %23 = arith.addf %20, %22 : vector<8x512xf32>
    %24 = arith.truncf %13 : vector<8x512xf32> to vector<8x512xbf16>
    %25 = vector.shape_cast %24 : vector<8x512xbf16> to vector<1x8x4x128xbf16>
    %26 = tpu.transpose %25, [0, 2, 1, 3] : vector<1x8x4x128xbf16> -> vector<1x4x8x128xbf16>
    %27 = vector.shape_cast %26 : vector<1x4x8x128xbf16> to vector<4x8x128xbf16>
    %28 = arith.truncf %18 : vector<8x512xf32> to vector<8x512xbf16>
    %29 = vector.shape_cast %28 : vector<8x512xbf16> to vector<1x8x4x128xbf16>
    %30 = tpu.transpose %29, [0, 2, 1, 3] : vector<1x8x4x128xbf16> -> vector<1x4x8x128xbf16>
    %31 = vector.shape_cast %30 : vector<1x4x8x128xbf16> to vector<4x8x128xbf16>
    %32 = arith.truncf %23 : vector<8x512xf32> to vector<8x512xbf16>
    %33 = vector.shape_cast %32 : vector<8x512xbf16> to vector<1x8x4x128xbf16>
    %34 = tpu.transpose %33, [0, 2, 1, 3] : vector<1x8x4x128xbf16> -> vector<1x4x8x128xbf16>
    %35 = vector.shape_cast %34 : vector<1x4x8x128xbf16> to vector<4x8x128xbf16>
    %36 = vector.shape_cast %8 : vector<1x1x8xf32> to vector<1x1x1x8xf32>
    %37 = vector.shape_cast %36 : vector<1x1x1x8xf32> to vector<1x1x1x8xf32>
    %38 = vector.broadcast %37 : vector<1x1x1x8xf32> to vector<1x4x1x8xf32>
    %39 = vector.shape_cast %38 : vector<1x4x1x8xf32> to vector<4x1x8xf32>
    "tpu.trace_start"() <{level = 10 : i32, message = "bqd,bkd->bqk"}> : () -> ()
    %cst_19 = arith.constant dense<0.000000e+00> : vector<4x8x8xf32>
    %40 = tpu.matmul %27, %31, %cst_19 {dimension_numbers = #tpu.dot_dimension_numbers<[2], [2], [1], [1], [0, 0, 0, 1, 1, 1], [0], [0]>} : vector<4x8x128xbf16>, vector<4x8x128xbf16>, vector<4x8x8xf32> -> vector<4x8x8xf32>
    "tpu.trace_stop"() : () -> ()
    %41 = vector.broadcast %39 : vector<4x1x8xf32> to vector<4x8x8xf32>
    %42 = arith.addf %40, %41 : vector<4x8x8xf32>
    %cst_20 = arith.constant dense<0xFF800000> : vector<4x8xf32>
    %43 = vector.multi_reduction <maximumf>, %42, %cst_20 [2] : vector<4x8x8xf32> to vector<4x8xf32>
    %44 = vector.shape_cast %43 : vector<4x8xf32> to vector<4x8x1xf32>
    %45 = vector.broadcast %44 : vector<4x8x1xf32> to vector<4x8x8xf32>
    %46 = arith.subf %42, %45 : vector<4x8x8xf32>
    %47 = math.exp %46 : vector<4x8x8xf32>
    %cst_21 = arith.constant dense<0.000000e+00> : vector<4x8xf32>
    %48 = vector.multi_reduction <add>, %47, %cst_21 [2] : vector<4x8x8xf32> to vector<4x8xf32>
    %49 = vector.shape_cast %48 : vector<4x8xf32> to vector<4x8x1xf32>
    %50 = tpu.reciprocal %49 {approx = true} : vector<4x8x1xf32> -> vector<4x8x1xf32>
    %51 = vector.broadcast %50 : vector<4x8x1xf32> to vector<4x8x8xf32>
    %52 = arith.mulf %47, %51 : vector<4x8x8xf32>
    %53 = arith.truncf %52 : vector<4x8x8xf32> to vector<4x8x8xbf16>
    "tpu.trace_start"() <{level = 10 : i32, message = "bqk,bkd->bqd"}> : () -> ()
    %cst_22 = arith.constant dense<0.000000e+00> : vector<4x8x128xf32>
    %54 = tpu.matmul %53, %35, %cst_22 {dimension_numbers = #tpu.dot_dimension_numbers<[2], [1], [1], [2], [0, 0, 0, 1, 1, 2], [0], [0]>} : vector<4x8x8xbf16>, vector<4x8x128xbf16>, vector<4x8x128xf32> -> vector<4x8x128xf32>
    "tpu.trace_stop"() : () -> ()
    %55 = vector.shape_cast %54 : vector<4x8x128xf32> to vector<1x4x8x128xf32>
    %56 = tpu.transpose %55, [0, 2, 1, 3] : vector<1x4x8x128xf32> -> vector<1x8x4x128xf32>
    %57 = vector.shape_cast %56 : vector<1x8x4x128xf32> to vector<8x512xf32>
    %58 = arith.truncf %57 : vector<8x512xf32> to vector<8x512xbf16>
    %c0_23 = arith.constant 0 : index
    %c0_24 = arith.constant 0 : index
    %59 = vector.load %arg9[%c0_23, %c0_24] : memref<512x128xbf16, #tpu.memory_space<vmem>>, vector<512x128xbf16>
    %cst_25 = arith.constant dense<0.000000e+00> : vector<8x128xf32>
    %60 = tpu.matmul %58, %59, %cst_25 {dimension_numbers = #tpu.dot_dimension_numbers<[1], [0], [0], [1], [0, 0, 1, 1], [], []>} : vector<8x512xbf16>, vector<512x128xbf16>, vector<8x128xf32> -> vector<8x128xf32>
    %c0_26 = arith.constant 0 : index
    %c0_27 = arith.constant 0 : index
    %61 = vector.load %arg10[%c0_26, %c0_27] : memref<1x128xf32, #tpu.memory_space<vmem>>, vector<1x128xf32>
    %62 = vector.broadcast %61 : vector<1x128xf32> to vector<8x128xf32>
    %63 = arith.addf %60, %62 : vector<8x128xf32>
    %64 = arith.addf %6, %63 : vector<8x128xf32>
    %c0_28 = arith.constant 0 : index
    %c0_29 = arith.constant 0 : index
    %65 = vector.load %arg15[%c0_28, %c0_29] : memref<1x128xf32, #tpu.memory_space<vmem>>, vector<1x128xf32>
    %c0_30 = arith.constant 0 : index
    %c0_31 = arith.constant 0 : index
    %66 = vector.load %arg16[%c0_30, %c0_31] : memref<1x128xf32, #tpu.memory_space<vmem>>, vector<1x128xf32>
    %cst_32 = arith.constant dense<0.000000e+00> : vector<8xf32>
    %67 = vector.multi_reduction <add>, %64, %cst_32 [1] : vector<8x128xf32> to vector<8xf32>
    %68 = vector.shape_cast %67 : vector<8xf32> to vector<8x1xf32>
    %cst_33 = arith.constant 3.125000e-02 : f32
    %69 = vector.broadcast %cst_33 : f32 to vector<8x1xf32>
    %70 = arith.mulf %68, %69 : vector<8x1xf32>
    %71 = vector.broadcast %70 : vector<8x1xf32> to vector<8x128xf32>
    %72 = arith.subf %64, %71 : vector<8x128xf32>
    %73 = vector.broadcast %4 : vector<1x128xf32> to vector<8x128xf32>
    %74 = arith.mulf %72, %73 : vector<8x128xf32>
    %75 = arith.mulf %74, %74 : vector<8x128xf32>
    %cst_34 = arith.constant dense<0.000000e+00> : vector<8xf32>
    %76 = vector.multi_reduction <add>, %75, %cst_34 [1] : vector<8x128xf32> to vector<8xf32>
    %77 = vector.shape_cast %76 : vector<8xf32> to vector<8x1xf32>
    %cst_35 = arith.constant 3.125000e-02 : f32
    %78 = vector.broadcast %cst_35 : f32 to vector<8x1xf32>
    %79 = arith.mulf %77, %78 : vector<8x1xf32>
    %cst_36 = arith.constant 9.99999974E-6 : f32
    %80 = vector.broadcast %cst_36 : f32 to vector<8x1xf32>
    %81 = arith.addf %79, %80 : vector<8x1xf32>
    %82 = math.rsqrt %81 : vector<8x1xf32>
    %83 = vector.broadcast %82 : vector<8x1xf32> to vector<8x128xf32>
    %84 = arith.mulf %74, %83 : vector<8x128xf32>
    %85 = vector.broadcast %65 : vector<1x128xf32> to vector<8x128xf32>
    %86 = arith.mulf %84, %85 : vector<8x128xf32>
    %87 = vector.broadcast %66 : vector<1x128xf32> to vector<8x128xf32>
    %88 = arith.addf %86, %87 : vector<8x128xf32>
    %89 = arith.truncf %88 : vector<8x128xf32> to vector<8x128xbf16>
    %c0_37 = arith.constant 0 : index
    %c0_38 = arith.constant 0 : index
    %90 = vector.load %arg11[%c0_37, %c0_38] : memref<128x128xbf16, #tpu.memory_space<vmem>>, vector<128x128xbf16>
    %cst_39 = arith.constant dense<0.000000e+00> : vector<8x128xf32>
    %91 = tpu.matmul %89, %90, %cst_39 {dimension_numbers = #tpu.dot_dimension_numbers<[1], [0], [0], [1], [0, 0, 1, 1], [], []>} : vector<8x128xbf16>, vector<128x128xbf16>, vector<8x128xf32> -> vector<8x128xf32>
    %c0_40 = arith.constant 0 : index
    %c0_41 = arith.constant 0 : index
    %92 = vector.load %arg12[%c0_40, %c0_41] : memref<1x128xf32, #tpu.memory_space<vmem>>, vector<1x128xf32>
    %93 = vector.broadcast %92 : vector<1x128xf32> to vector<8x128xf32>
    %94 = arith.addf %91, %93 : vector<8x128xf32>
    %cst_42 = arith.constant 0.000000e+00 : f32
    %95 = vector.broadcast %cst_42 : f32 to vector<8x128xf32>
    %96 = arith.maximumf %94, %95 : vector<8x128xf32>
    %97 = arith.truncf %96 : vector<8x128xf32> to vector<8x128xbf16>
    %c0_43 = arith.constant 0 : index
    %c0_44 = arith.constant 0 : index
    %98 = vector.load %arg13[%c0_43, %c0_44] : memref<128x128xbf16, #tpu.memory_space<vmem>>, vector<128x128xbf16>
    %cst_45 = arith.constant dense<0.000000e+00> : vector<8x128xf32>
    %99 = tpu.matmul %97, %98, %cst_45 {dimension_numbers = #tpu.dot_dimension_numbers<[1], [0], [0], [1], [0, 0, 1, 1], [], []>} : vector<8x128xbf16>, vector<128x128xbf16>, vector<8x128xf32> -> vector<8x128xf32>
    %c0_46 = arith.constant 0 : index
    %c0_47 = arith.constant 0 : index
    %100 = vector.load %arg14[%c0_46, %c0_47] : memref<1x128xf32, #tpu.memory_space<vmem>>, vector<1x128xf32>
    %101 = vector.broadcast %100 : vector<1x128xf32> to vector<8x128xf32>
    %102 = arith.addf %99, %101 : vector<8x128xf32>
    %103 = arith.addf %88, %102 : vector<8x128xf32>
    %c0_48 = arith.constant 0 : index
    %c0_49 = arith.constant 0 : index
    %104 = vector.load %arg17[%c0_48, %c0_49] : memref<1x128xf32, #tpu.memory_space<vmem>>, vector<1x128xf32>
    %c0_50 = arith.constant 0 : index
    %c0_51 = arith.constant 0 : index
    %105 = vector.load %arg18[%c0_50, %c0_51] : memref<1x128xf32, #tpu.memory_space<vmem>>, vector<1x128xf32>
    %cst_52 = arith.constant dense<0.000000e+00> : vector<8xf32>
    %106 = vector.multi_reduction <add>, %103, %cst_52 [1] : vector<8x128xf32> to vector<8xf32>
    %107 = vector.shape_cast %106 : vector<8xf32> to vector<8x1xf32>
    %cst_53 = arith.constant 3.125000e-02 : f32
    %108 = vector.broadcast %cst_53 : f32 to vector<8x1xf32>
    %109 = arith.mulf %107, %108 : vector<8x1xf32>
    %110 = vector.broadcast %109 : vector<8x1xf32> to vector<8x128xf32>
    %111 = arith.subf %103, %110 : vector<8x128xf32>
    %112 = vector.broadcast %4 : vector<1x128xf32> to vector<8x128xf32>
    %113 = arith.mulf %111, %112 : vector<8x128xf32>
    %114 = arith.mulf %113, %113 : vector<8x128xf32>
    %cst_54 = arith.constant dense<0.000000e+00> : vector<8xf32>
    %115 = vector.multi_reduction <add>, %114, %cst_54 [1] : vector<8x128xf32> to vector<8xf32>
    %116 = vector.shape_cast %115 : vector<8xf32> to vector<8x1xf32>
    %cst_55 = arith.constant 3.125000e-02 : f32
    %117 = vector.broadcast %cst_55 : f32 to vector<8x1xf32>
    %118 = arith.mulf %116, %117 : vector<8x1xf32>
    %cst_56 = arith.constant 9.99999974E-6 : f32
    %119 = vector.broadcast %cst_56 : f32 to vector<8x1xf32>
    %120 = arith.addf %118, %119 : vector<8x1xf32>
    %121 = math.rsqrt %120 : vector<8x1xf32>
    %122 = vector.broadcast %121 : vector<8x1xf32> to vector<8x128xf32>
    %123 = arith.mulf %113, %122 : vector<8x128xf32>
    %124 = vector.broadcast %104 : vector<1x128xf32> to vector<8x128xf32>
    %125 = arith.mulf %123, %124 : vector<8x128xf32>
    %126 = vector.broadcast %105 : vector<1x128xf32> to vector<8x128xf32>
    %127 = arith.addf %125, %126 : vector<8x128xf32>
    %128 = vector.shape_cast %127 : vector<8x128xf32> to vector<1x8x128xf32>
    %c0_57 = arith.constant 0 : index
    %c0_58 = arith.constant 0 : index
    %c0_59 = arith.constant 0 : index
    %129 = vector.load %arg19[%c0_57, %c0_58, %c0_59] : memref<1x8x128xf32, #tpu.memory_space<vmem>>, vector<1x8x128xf32>
    tpu.vector_store %arg19[%c0_57, %c0_58, %c0_59], %128 {strides = array<i32>} : memref<1x8x128xf32, #tpu.memory_space<vmem>>, vector<1x8x128xf32>,
    %130 = vector.shape_cast %52 : vector<4x8x8xf32> to vector<1x4x8x8xf32>
    %cst_60 = arith.constant dense<0.000000e+00> : vector<1x8x8xf32>
    %131 = vector.multi_reduction <add>, %130, %cst_60 [1] : vector<1x4x8x8xf32> to vector<1x8x8xf32>
    %cst_61 = arith.constant 2.500000e-01 : f32
    %132 = vector.broadcast %cst_61 : f32 to vector<1x8x8xf32>
    %133 = arith.mulf %131, %132 : vector<1x8x8xf32>
    %cst_62 = arith.constant 0.000000e+00 : f32
    %134 = vector.broadcast %cst_62 : f32 to vector<1x8x120xf32>
    %135 = tpu.concatenate %133, %134 in 2 : vector<1x8x8xf32>, vector<1x8x120xf32> -> vector<1x8x128xf32>
    %c0_63 = arith.constant 0 : index
    %c0_64 = arith.constant 0 : index
    %c0_65 = arith.constant 0 : index
    %136 = vector.load %arg20[%c0_63, %c0_64, %c0_65] : memref<1x8x128xf32, #tpu.memory_space<vmem>>, vector<1x8x128xf32>
    tpu.vector_store %arg20[%c0_63, %c0_64, %c0_65], %135 {strides = array<i32>} : memref<1x8x128xf32, #tpu.memory_space<vmem>>, vector<1x8x128xf32>,
    return
  }
  func.func @transform_0(%arg0: i32) -> (i32, i32, i32) {
    %c0_i32 = arith.constant 0 : i32
    %c0_i32_0 = arith.constant 0 : i32
    %c0_i32_1 = arith.constant 0 : i32
    return %arg0, %c0_i32, %c0_i32_0 : i32, i32, i32
  }
  func.func @transform_1(%arg0: i32) -> (i32, i32, i32) {
    %c0_i32 = arith.constant 0 : i32
    %c0_i32_0 = arith.constant 0 : i32
    %c0_i32_1 = arith.constant 0 : i32
    return %arg0, %c0_i32, %c0_i32_0 : i32, i32, i32
  }
  func.func @transform_2(%arg0: i32) -> (i32, i32) {
    %c0_i32 = arith.constant 0 : i32
    %c0_i32_0 = arith.constant 0 : i32
    %c0_i32_1 = arith.constant 0 : i32
    return %c0_i32, %c0_i32_0 : i32, i32
  }
  func.func @transform_3(%arg0: i32) -> (i32, i32) {
    %c0_i32 = arith.constant 0 : i32
    %c0_i32_0 = arith.constant 0 : i32
    %c0_i32_1 = arith.constant 0 : i32
    return %c0_i32, %c0_i32_0 : i32, i32
  }
  func.func @transform_4(%arg0: i32) -> (i32, i32) {
    %c0_i32 = arith.constant 0 : i32
    %c0_i32_0 = arith.constant 0 : i32
    %c0_i32_1 = arith.constant 0 : i32
    return %c0_i32, %c0_i32_0 : i32, i32
  }
  func.func @transform_5(%arg0: i32) -> (i32, i32) {
    %c0_i32 = arith.constant 0 : i32
    %c0_i32_0 = arith.constant 0 : i32
    %c0_i32_1 = arith.constant 0 : i32
    return %c0_i32, %c0_i32_0 : i32, i32
  }
  func.func @transform_6(%arg0: i32) -> (i32, i32) {
    %c0_i32 = arith.constant 0 : i32
    %c0_i32_0 = arith.constant 0 : i32
    %c0_i32_1 = arith.constant 0 : i32
    return %c0_i32, %c0_i32_0 : i32, i32
  }
  func.func @transform_7(%arg0: i32) -> (i32, i32) {
    %c0_i32 = arith.constant 0 : i32
    %c0_i32_0 = arith.constant 0 : i32
    %c0_i32_1 = arith.constant 0 : i32
    return %c0_i32, %c0_i32_0 : i32, i32
  }
  func.func @transform_8(%arg0: i32) -> (i32, i32) {
    %c0_i32 = arith.constant 0 : i32
    %c0_i32_0 = arith.constant 0 : i32
    %c0_i32_1 = arith.constant 0 : i32
    return %c0_i32, %c0_i32_0 : i32, i32
  }
  func.func @transform_9(%arg0: i32) -> (i32, i32) {
    %c0_i32 = arith.constant 0 : i32
    %c0_i32_0 = arith.constant 0 : i32
    %c0_i32_1 = arith.constant 0 : i32
    return %c0_i32, %c0_i32_0 : i32, i32
  }
  func.func @transform_10(%arg0: i32) -> (i32, i32) {
    %c0_i32 = arith.constant 0 : i32
    %c0_i32_0 = arith.constant 0 : i32
    %c0_i32_1 = arith.constant 0 : i32
    return %c0_i32, %c0_i32_0 : i32, i32
  }
  func.func @transform_11(%arg0: i32) -> (i32, i32) {
    %c0_i32 = arith.constant 0 : i32
    %c0_i32_0 = arith.constant 0 : i32
    %c0_i32_1 = arith.constant 0 : i32
    return %c0_i32, %c0_i32_0 : i32, i32
  }
  func.func @transform_12(%arg0: i32) -> (i32, i32) {
    %c0_i32 = arith.constant 0 : i32
    %c0_i32_0 = arith.constant 0 : i32
    %c0_i32_1 = arith.constant 0 : i32
    return %c0_i32, %c0_i32_0 : i32, i32
  }
  func.func @transform_13(%arg0: i32) -> (i32, i32) {
    %c0_i32 = arith.constant 0 : i32
    %c0_i32_0 = arith.constant 0 : i32
    %c0_i32_1 = arith.constant 0 : i32
    return %c0_i32, %c0_i32_0 : i32, i32
  }
  func.func @transform_14(%arg0: i32) -> (i32, i32) {
    %c0_i32 = arith.constant 0 : i32
    %c0_i32_0 = arith.constant 0 : i32
    %c0_i32_1 = arith.constant 0 : i32
    return %c0_i32, %c0_i32_0 : i32, i32
  }
  func.func @transform_15(%arg0: i32) -> (i32, i32) {
    %c0_i32 = arith.constant 0 : i32
    %c0_i32_0 = arith.constant 0 : i32
    %c0_i32_1 = arith.constant 0 : i32
    return %c0_i32, %c0_i32_0 : i32, i32
  }
  func.func @transform_16(%arg0: i32) -> (i32, i32) {
    %c0_i32 = arith.constant 0 : i32
    %c0_i32_0 = arith.constant 0 : i32
    %c0_i32_1 = arith.constant 0 : i32
    return %c0_i32, %c0_i32_0 : i32, i32
  }
  func.func @transform_17(%arg0: i32) -> (i32, i32) {
    %c0_i32 = arith.constant 0 : i32
    %c0_i32_0 = arith.constant 0 : i32
    %c0_i32_1 = arith.constant 0 : i32
    return %c0_i32, %c0_i32_0 : i32, i32
  }
  func.func @transform_18(%arg0: i32) -> (i32, i32, i32) {
    %c0_i32 = arith.constant 0 : i32
    %c0_i32_0 = arith.constant 0 : i32
    %c0_i32_1 = arith.constant 0 : i32
    return %arg0, %c0_i32, %c0_i32_0 : i32, i32, i32
  }
  func.func @transform_19(%arg0: i32) -> (i32, i32, i32) {
    %c0_i32 = arith.constant 0 : i32
    %c0_i32_0 = arith.constant 0 : i32
    %c0_i32_1 = arith.constant 0 : i32
    return %arg0, %c0_i32, %c0_i32_0 : i32, i32, i32
  }
}

module attributes {stable_mosaic.version = 11 : i64} {
  func.func @_encoder_layer_kernel(%arg0: i32, %arg1: memref<1x8x128xf32, #tpu.memory_space<vmem>>, %arg2: memref<1x1x8xf32, #tpu.memory_space<vmem>>, %arg3: memref<128x512xbf16, #tpu.memory_space<vmem>>, %arg4: memref<128x512xbf16, #tpu.memory_space<vmem>>, %arg5: memref<128x512xbf16, #tpu.memory_space<vmem>>, %arg6: memref<1x512xf32, #tpu.memory_space<vmem>>, %arg7: memref<1x512xf32, #tpu.memory_space<vmem>>, %arg8: memref<1x512xf32, #tpu.memory_space<vmem>>, %arg9: memref<512x128xbf16, #tpu.memory_space<vmem>>, %arg10: memref<1x128xf32, #tpu.memory_space<vmem>>, %arg11: memref<128x128xbf16, #tpu.memory_space<vmem>>, %arg12: memref<1x128xf32, #tpu.memory_space<vmem>>, %arg13: memref<128x128xbf16, #tpu.memory_space<vmem>>, %arg14: memref<1x128xf32, #tpu.memory_space<vmem>>, %arg15: memref<1x128xf32, #tpu.memory_space<vmem>>, %arg16: memref<1x128xf32, #tpu.memory_space<vmem>>, %arg17: memref<1x128xf32, #tpu.memory_space<vmem>>, %arg18: memref<1x128xf32, #tpu.memory_space<vmem>>, %arg19: memref<1x8x128xf32, #tpu.memory_space<vmem>>, %arg20: memref<1x8x128xf32, #tpu.memory_space<vmem>>) attributes {dimension_semantics = [#tpu.dimension_semantics<parallel>], iteration_bounds = array<i64: 2>, scalar_prefetch = 0 : i64, scratch_operands = 0 : i64, tpu.core_type = #tpu.core_type<tc>, window_params = [{transform_indices = @transform_0, window_bounds = array<i64: 1, 8, 128>}, {transform_indices = @transform_1, window_bounds = array<i64: 1, 1, 8>}, {pipeline_mode = #tpu.pipeline_mode<synchronous>, transform_indices = @transform_2, window_bounds = array<i64: 128, 512>}, {pipeline_mode = #tpu.pipeline_mode<synchronous>, transform_indices = @transform_3, window_bounds = array<i64: 128, 512>}, {pipeline_mode = #tpu.pipeline_mode<synchronous>, transform_indices = @transform_4, window_bounds = array<i64: 128, 512>}, {pipeline_mode = #tpu.pipeline_mode<synchronous>, transform_indices = @transform_5, window_bounds = array<i64: 1, 512>}, {pipeline_mode = #tpu.pipeline_mode<synchronous>, transform_indices = @transform_6, window_bounds = array<i64: 1, 512>}, {pipeline_mode = #tpu.pipeline_mode<synchronous>, transform_indices = @transform_7, window_bounds = array<i64: 1, 512>}, {pipeline_mode = #tpu.pipeline_mode<synchronous>, transform_indices = @transform_8, window_bounds = array<i64: 512, 128>}, {pipeline_mode = #tpu.pipeline_mode<synchronous>, transform_indices = @transform_9, window_bounds = array<i64: 1, 128>}, {pipeline_mode = #tpu.pipeline_mode<synchronous>, transform_indices = @transform_10, window_bounds = array<i64: 128, 128>}, {pipeline_mode = #tpu.pipeline_mode<synchronous>, transform_indices = @transform_11, window_bounds = array<i64: 1, 128>}, {pipeline_mode = #tpu.pipeline_mode<synchronous>, transform_indices = @transform_12, window_bounds = array<i64: 128, 128>}, {pipeline_mode = #tpu.pipeline_mode<synchronous>, transform_indices = @transform_13, window_bounds = array<i64: 1, 128>}, {pipeline_mode = #tpu.pipeline_mode<synchronous>, transform_indices = @transform_14, window_bounds = array<i64: 1, 128>}, {pipeline_mode = #tpu.pipeline_mode<synchronous>, transform_indices = @transform_15, window_bounds = array<i64: 1, 128>}, {pipeline_mode = #tpu.pipeline_mode<synchronous>, transform_indices = @transform_16, window_bounds = array<i64: 1, 128>}, {pipeline_mode = #tpu.pipeline_mode<synchronous>, transform_indices = @transform_17, window_bounds = array<i64: 1, 128>}, {transform_indices = @transform_18, window_bounds = array<i64: 1, 8, 128>}, {transform_indices = @transform_19, window_bounds = array<i64: 1, 8, 128>}]} {
    %0 = tpu.iota {dimensions = array<i32: 1>} : vector<1x128xi32>
    %c32_i32 = arith.constant 32 : i32
    %1 = vector.broadcast %c32_i32 : i32 to vector<1x128xi32>
    %2 = arith.cmpi slt, %0, %1 : vector<1x128xi32>
    %3 = arith.extui %2 : vector<1x128xi1> to vector<1x128xi32>
    %4 = arith.sitofp %3 : vector<1x128xi32> to vector<1x128xf32>
    %c0 = arith.constant 0 : index
    %c0_0 = arith.constant 0 : index
    %c0_1 = arith.constant 0 : index
    %5 = vector.load %arg1[%c0, %c0_0, %c0_1] : memref<1x8x128xf32, #tpu.memory_space<vmem>>, vector<1x8x128xf32>
    %6 = vector.shape_cast %5 : vector<1x8x128xf32> to vector<8x128xf32>
    %7 = arith.truncf %6 : vector<8x128xf32> to vector<8x128xbf16>
    %c0_2 = arith.constant 0 : index
    %c0_3 = arith.constant 0 : index
    %c0_4 = arith.constant 0 : index
    %8 = vector.load %arg2[%c0_2, %c0_3, %c0_4] : memref<1x1x8xf32, #tpu.memory_space<vmem>>, vector<1x1x8xf32>
    %c0_5 = arith.constant 0 : index
    %c0_6 = arith.constant 0 : index
    %9 = vector.load %arg3[%c0_5, %c0_6] : memref<128x512xbf16, #tpu.memory_space<vmem>>, vector<128x512xbf16>
    %cst = arith.constant dense<0.000000e+00> : vector<8x512xf32>
    %10 = tpu.matmul %7, %9, %cst {dimension_numbers = #tpu.dot_dimension_numbers<[1], [0], [0], [1], [0, 0, 1, 1], [], []>} : vector<8x128xbf16>, vector<128x512xbf16>, vector<8x512xf32> -> vector<8x512xf32>
    %c0_7 = arith.constant 0 : index
    %c0_8 = arith.constant 0 : index
    %11 = vector.load %arg6[%c0_7, %c0_8] : memref<1x512xf32, #tpu.memory_space<vmem>>, vector<1x512xf32>
    %12 = vector.broadcast %11 : vector<1x512xf32> to vector<8x512xf32>
    %13 = arith.addf %10, %12 : vector<8x512xf32>
    %c0_9 = arith.constant 0 : index
    %c0_10 = arith.constant 0 : index
    %14 = vector.load %arg4[%c0_9, %c0_10] : memref<128x512xbf16, #tpu.memory_space<vmem>>, vector<128x512xbf16>
    %cst_11 = arith.constant dense<0.000000e+00> : vector<8x512xf32>
    %15 = tpu.matmul %7, %14, %cst_11 {dimension_numbers = #tpu.dot_dimension_numbers<[1], [0], [0], [1], [0, 0, 1, 1], [], []>} : vector<8x128xbf16>, vector<128x512xbf16>, vector<8x512xf32> -> vector<8x512xf32>
    %c0_12 = arith.constant 0 : index
    %c0_13 = arith.constant 0 : index
    %16 = vector.load %arg7[%c0_12, %c0_13] : memref<1x512xf32, #tpu.memory_space<vmem>>, vector<1x512xf32>
    %17 = vector.broadcast %16 : vector<1x512xf32> to vector<8x512xf32>
    %18 = arith.addf %15, %17 : vector<8x512xf32>
    %c0_14 = arith.constant 0 : index
    %c0_15 = arith.constant 0 : index
    %19 = vector.load %arg5[%c0_14, %c0_15] : memref<128x512xbf16, #tpu.memory_space<vmem>>, vector<128x512xbf16>
    %cst_16 = arith.constant dense<0.000000e+00> : vector<8x512xf32>
    %20 = tpu.matmul %7, %19, %cst_16 {dimension_numbers = #tpu.dot_dimension_numbers<[1], [0], [0], [1], [0, 0, 1, 1], [], []>} : vector<8x128xbf16>, vector<128x512xbf16>, vector<8x512xf32> -> vector<8x512xf32>
    %c0_17 = arith.constant 0 : index
    %c0_18 = arith.constant 0 : index
    %21 = vector.load %arg8[%c0_17, %c0_18] : memref<1x512xf32, #tpu.memory_space<vmem>>, vector<1x512xf32>
    %22 = vector.broadcast %21 : vector<1x512xf32> to vector<8x512xf32>
    %23 = arith.addf %20, %22 : vector<8x512xf32>
    %24 = arith.truncf %13 : vector<8x512xf32> to vector<8x512xbf16>
    %25 = vector.shape_cast %24 : vector<8x512xbf16> to vector<1x8x4x128xbf16>
    %26 = tpu.transpose %25, [0, 2, 1, 3] : vector<1x8x4x128xbf16> -> vector<1x4x8x128xbf16>
    %27 = vector.shape_cast %26 : vector<1x4x8x128xbf16> to vector<4x8x128xbf16>
    %28 = arith.truncf %18 : vector<8x512xf32> to vector<8x512xbf16>
    %29 = vector.shape_cast %28 : vector<8x512xbf16> to vector<1x8x4x128xbf16>
    %30 = tpu.transpose %29, [0, 2, 1, 3] : vector<1x8x4x128xbf16> -> vector<1x4x8x128xbf16>
    %31 = vector.shape_cast %30 : vector<1x4x8x128xbf16> to vector<4x8x128xbf16>
    %32 = arith.truncf %23 : vector<8x512xf32> to vector<8x512xbf16>
    %33 = vector.shape_cast %32 : vector<8x512xbf16> to vector<1x8x4x128xbf16>
    %34 = tpu.transpose %33, [0, 2, 1, 3] : vector<1x8x4x128xbf16> -> vector<1x4x8x128xbf16>
    %35 = vector.shape_cast %34 : vector<1x4x8x128xbf16> to vector<4x8x128xbf16>
    %36 = vector.shape_cast %8 : vector<1x1x8xf32> to vector<1x1x1x8xf32>
    %37 = vector.shape_cast %36 : vector<1x1x1x8xf32> to vector<1x1x1x8xf32>
    %38 = vector.broadcast %37 : vector<1x1x1x8xf32> to vector<1x4x1x8xf32>
    %39 = vector.shape_cast %38 : vector<1x4x1x8xf32> to vector<4x1x8xf32>
    "tpu.trace_start"() <{level = 10 : i32, message = "bqd,bkd->bqk"}> : () -> ()
    %cst_19 = arith.constant dense<0.000000e+00> : vector<4x8x8xf32>
    %40 = tpu.matmul %27, %31, %cst_19 {dimension_numbers = #tpu.dot_dimension_numbers<[2], [2], [1], [1], [0, 0, 0, 1, 1, 1], [0], [0]>} : vector<4x8x128xbf16>, vector<4x8x128xbf16>, vector<4x8x8xf32> -> vector<4x8x8xf32>
    "tpu.trace_stop"() : () -> ()
    %41 = vector.broadcast %39 : vector<4x1x8xf32> to vector<4x8x8xf32>
    %42 = arith.addf %40, %41 : vector<4x8x8xf32>
    %cst_20 = arith.constant dense<0xFF800000> : vector<4x8xf32>
    %43 = vector.multi_reduction <maximumf>, %42, %cst_20 [2] : vector<4x8x8xf32> to vector<4x8xf32>
    %44 = vector.shape_cast %43 : vector<4x8xf32> to vector<4x8x1xf32>
    %45 = vector.broadcast %44 : vector<4x8x1xf32> to vector<4x8x8xf32>
    %46 = arith.subf %42, %45 : vector<4x8x8xf32>
    %47 = math.exp %46 : vector<4x8x8xf32>
    %cst_21 = arith.constant dense<0.000000e+00> : vector<4x8xf32>
    %48 = vector.multi_reduction <add>, %47, %cst_21 [2] : vector<4x8x8xf32> to vector<4x8xf32>
    %49 = vector.shape_cast %48 : vector<4x8xf32> to vector<4x8x1xf32>
    %50 = tpu.reciprocal %49 {approx = true} : vector<4x8x1xf32> -> vector<4x8x1xf32>
    %51 = vector.broadcast %50 : vector<4x8x1xf32> to vector<4x8x8xf32>
    %52 = arith.mulf %47, %51 : vector<4x8x8xf32>
    %53 = arith.truncf %52 : vector<4x8x8xf32> to vector<4x8x8xbf16>
    "tpu.trace_start"() <{level = 10 : i32, message = "bqk,bkd->bqd"}> : () -> ()
    %cst_22 = arith.constant dense<0.000000e+00> : vector<4x8x128xf32>
    %54 = tpu.matmul %53, %35, %cst_22 {dimension_numbers = #tpu.dot_dimension_numbers<[2], [1], [1], [2], [0, 0, 0, 1, 1, 2], [0], [0]>} : vector<4x8x8xbf16>, vector<4x8x128xbf16>, vector<4x8x128xf32> -> vector<4x8x128xf32>
    "tpu.trace_stop"() : () -> ()
    %55 = vector.shape_cast %54 : vector<4x8x128xf32> to vector<1x4x8x128xf32>
    %56 = tpu.transpose %55, [0, 2, 1, 3] : vector<1x4x8x128xf32> -> vector<1x8x4x128xf32>
    %57 = vector.shape_cast %56 : vector<1x8x4x128xf32> to vector<8x512xf32>
    %58 = arith.truncf %57 : vector<8x512xf32> to vector<8x512xbf16>
    %c0_23 = arith.constant 0 : index
    %c0_24 = arith.constant 0 : index
    %59 = vector.load %arg9[%c0_23, %c0_24] : memref<512x128xbf16, #tpu.memory_space<vmem>>, vector<512x128xbf16>
    %cst_25 = arith.constant dense<0.000000e+00> : vector<8x128xf32>
    %60 = tpu.matmul %58, %59, %cst_25 {dimension_numbers = #tpu.dot_dimension_numbers<[1], [0], [0], [1], [0, 0, 1, 1], [], []>} : vector<8x512xbf16>, vector<512x128xbf16>, vector<8x128xf32> -> vector<8x128xf32>
    %c0_26 = arith.constant 0 : index
    %c0_27 = arith.constant 0 : index
    %61 = vector.load %arg10[%c0_26, %c0_27] : memref<1x128xf32, #tpu.memory_space<vmem>>, vector<1x128xf32>
    %62 = vector.broadcast %61 : vector<1x128xf32> to vector<8x128xf32>
    %63 = arith.addf %60, %62 : vector<8x128xf32>
    %64 = arith.addf %6, %63 : vector<8x128xf32>
    %c0_28 = arith.constant 0 : index
    %c0_29 = arith.constant 0 : index
    %65 = vector.load %arg15[%c0_28, %c0_29] : memref<1x128xf32, #tpu.memory_space<vmem>>, vector<1x128xf32>
    %c0_30 = arith.constant 0 : index
    %c0_31 = arith.constant 0 : index
    %66 = vector.load %arg16[%c0_30, %c0_31] : memref<1x128xf32, #tpu.memory_space<vmem>>, vector<1x128xf32>
    %cst_32 = arith.constant dense<0.000000e+00> : vector<8xf32>
    %67 = vector.multi_reduction <add>, %64, %cst_32 [1] : vector<8x128xf32> to vector<8xf32>
    %68 = vector.shape_cast %67 : vector<8xf32> to vector<8x1xf32>
    %cst_33 = arith.constant 3.125000e-02 : f32
    %69 = vector.broadcast %cst_33 : f32 to vector<8x1xf32>
    %70 = arith.mulf %68, %69 : vector<8x1xf32>
    %71 = vector.broadcast %70 : vector<8x1xf32> to vector<8x128xf32>
    %72 = arith.subf %64, %71 : vector<8x128xf32>
    %73 = vector.broadcast %4 : vector<1x128xf32> to vector<8x128xf32>
    %74 = arith.mulf %72, %73 : vector<8x128xf32>
    %75 = arith.mulf %74, %74 : vector<8x128xf32>
    %cst_34 = arith.constant dense<0.000000e+00> : vector<8xf32>
    %76 = vector.multi_reduction <add>, %75, %cst_34 [1] : vector<8x128xf32> to vector<8xf32>
    %77 = vector.shape_cast %76 : vector<8xf32> to vector<8x1xf32>
    %cst_35 = arith.constant 3.125000e-02 : f32
    %78 = vector.broadcast %cst_35 : f32 to vector<8x1xf32>
    %79 = arith.mulf %77, %78 : vector<8x1xf32>
    %cst_36 = arith.constant 9.99999974E-6 : f32
    %80 = vector.broadcast %cst_36 : f32 to vector<8x1xf32>
    %81 = arith.addf %79, %80 : vector<8x1xf32>
    %82 = math.rsqrt %81 : vector<8x1xf32>
    %83 = vector.broadcast %82 : vector<8x1xf32> to vector<8x128xf32>
    %84 = arith.mulf %74, %83 : vector<8x128xf32>
    %85 = vector.broadcast %65 : vector<1x128xf32> to vector<8x128xf32>
    %86 = arith.mulf %84, %85 : vector<8x128xf32>
    %87 = vector.broadcast %66 : vector<1x128xf32> to vector<8x128xf32>
    %88 = arith.addf %86, %87 : vector<8x128xf32>
    %89 = arith.truncf %88 : vector<8x128xf32> to vector<8x128xbf16>
    %c0_37 = arith.constant 0 : index
    %c0_38 = arith.constant 0 : index
    %90 = vector.load %arg11[%c0_37, %c0_38] : memref<128x128xbf16, #tpu.memory_space<vmem>>, vector<128x128xbf16>
    %cst_39 = arith.constant dense<0.000000e+00> : vector<8x128xf32>
    %91 = tpu.matmul %89, %90, %cst_39 {dimension_numbers = #tpu.dot_dimension_numbers<[1], [0], [0], [1], [0, 0, 1, 1], [], []>} : vector<8x128xbf16>, vector<128x128xbf16>, vector<8x128xf32> -> vector<8x128xf32>
    %c0_40 = arith.constant 0 : index
    %c0_41 = arith.constant 0 : index
    %92 = vector.load %arg12[%c0_40, %c0_41] : memref<1x128xf32, #tpu.memory_space<vmem>>, vector<1x128xf32>
    %93 = vector.broadcast %92 : vector<1x128xf32> to vector<8x128xf32>
    %94 = arith.addf %91, %93 : vector<8x128xf32>
    %cst_42 = arith.constant 0.000000e+00 : f32
    %95 = vector.broadcast %cst_42 : f32 to vector<8x128xf32>
    %96 = arith.maximumf %94, %95 : vector<8x128xf32>
    %97 = arith.truncf %96 : vector<8x128xf32> to vector<8x128xbf16>
    %c0_43 = arith.constant 0 : index
    %c0_44 = arith.constant 0 : index
    %98 = vector.load %arg13[%c0_43, %c0_44] : memref<128x128xbf16, #tpu.memory_space<vmem>>, vector<128x128xbf16>
    %cst_45 = arith.constant dense<0.000000e+00> : vector<8x128xf32>
    %99 = tpu.matmul %97, %98, %cst_45 {dimension_numbers = #tpu.dot_dimension_numbers<[1], [0], [0], [1], [0, 0, 1, 1], [], []>} : vector<8x128xbf16>, vector<128x128xbf16>, vector<8x128xf32> -> vector<8x128xf32>
    %c0_46 = arith.constant 0 : index
    %c0_47 = arith.constant 0 : index
    %100 = vector.load %arg14[%c0_46, %c0_47] : memref<1x128xf32, #tpu.memory_space<vmem>>, vector<1x128xf32>
    %101 = vector.broadcast %100 : vector<1x128xf32> to vector<8x128xf32>
    %102 = arith.addf %99, %101 : vector<8x128xf32>
    %103 = arith.addf %88, %102 : vector<8x128xf32>
    %c0_48 = arith.constant 0 : index
    %c0_49 = arith.constant 0 : index
    %104 = vector.load %arg17[%c0_48, %c0_49] : memref<1x128xf32, #tpu.memory_space<vmem>>, vector<1x128xf32>
    %c0_50 = arith.constant 0 : index
    %c0_51 = arith.constant 0 : index
    %105 = vector.load %arg18[%c0_50, %c0_51] : memref<1x128xf32, #tpu.memory_space<vmem>>, vector<1x128xf32>
    %cst_52 = arith.constant dense<0.000000e+00> : vector<8xf32>
    %106 = vector.multi_reduction <add>, %103, %cst_52 [1] : vector<8x128xf32> to vector<8xf32>
    %107 = vector.shape_cast %106 : vector<8xf32> to vector<8x1xf32>
    %cst_53 = arith.constant 3.125000e-02 : f32
    %108 = vector.broadcast %cst_53 : f32 to vector<8x1xf32>
    %109 = arith.mulf %107, %108 : vector<8x1xf32>
    %110 = vector.broadcast %109 : vector<8x1xf32> to vector<8x128xf32>
    %111 = arith.subf %103, %110 : vector<8x128xf32>
    %112 = vector.broadcast %4 : vector<1x128xf32> to vector<8x128xf32>
    %113 = arith.mulf %111, %112 : vector<8x128xf32>
    %114 = arith.mulf %113, %113 : vector<8x128xf32>
    %cst_54 = arith.constant dense<0.000000e+00> : vector<8xf32>
    %115 = vector.multi_reduction <add>, %114, %cst_54 [1] : vector<8x128xf32> to vector<8xf32>
    %116 = vector.shape_cast %115 : vector<8xf32> to vector<8x1xf32>
    %cst_55 = arith.constant 3.125000e-02 : f32
    %117 = vector.broadcast %cst_55 : f32 to vector<8x1xf32>
    %118 = arith.mulf %116, %117 : vector<8x1xf32>
    %cst_56 = arith.constant 9.99999974E-6 : f32
    %119 = vector.broadcast %cst_56 : f32 to vector<8x1xf32>
    %120 = arith.addf %118, %119 : vector<8x1xf32>
    %121 = math.rsqrt %120 : vector<8x1xf32>
    %122 = vector.broadcast %121 : vector<8x1xf32> to vector<8x128xf32>
    %123 = arith.mulf %113, %122 : vector<8x128xf32>
    %124 = vector.broadcast %104 : vector<1x128xf32> to vector<8x128xf32>
    %125 = arith.mulf %123, %124 : vector<8x128xf32>
    %126 = vector.broadcast %105 : vector<1x128xf32> to vector<8x128xf32>
    %127 = arith.addf %125, %126 : vector<8x128xf32>
    %128 = vector.shape_cast %127 : vector<8x128xf32> to vector<1x8x128xf32>
    %c0_57 = arith.constant 0 : index
    %c0_58 = arith.constant 0 : index
    %c0_59 = arith.constant 0 : index
    %129 = vector.load %arg19[%c0_57, %c0_58, %c0_59] : memref<1x8x128xf32, #tpu.memory_space<vmem>>, vector<1x8x128xf32>
    tpu.vector_store %arg19[%c0_57, %c0_58, %c0_59], %128 {strides = array<i32>} : memref<1x8x128xf32, #tpu.memory_space<vmem>>, vector<1x8x128xf32>,
    %130 = vector.shape_cast %52 : vector<4x8x8xf32> to vector<1x4x8x8xf32>
    %cst_60 = arith.constant dense<0.000000e+00> : vector<1x8x8xf32>
    %131 = vector.multi_reduction <add>, %130, %cst_60 [1] : vector<1x4x8x8xf32> to vector<1x8x8xf32>
    %cst_61 = arith.constant 2.500000e-01 : f32
    %132 = vector.broadcast %cst_61 : f32 to vector<1x8x8xf32>
    %133 = arith.mulf %131, %132 : vector<1x8x8xf32>
    %cst_62 = arith.constant 0.000000e+00 : f32
    %134 = vector.broadcast %cst_62 : f32 to vector<1x8x120xf32>
    %135 = tpu.concatenate %133, %134 in 2 : vector<1x8x8xf32>, vector<1x8x120xf32> -> vector<1x8x128xf32>
    %c0_63 = arith.constant 0 : index
    %c0_64 = arith.constant 0 : index
    %c0_65 = arith.constant 0 : index
    %136 = vector.load %arg20[%c0_63, %c0_64, %c0_65] : memref<1x8x128xf32, #tpu.memory_space<vmem>>, vector<1x8x128xf32>
    tpu.vector_store %arg20[%c0_63, %c0_64, %c0_65], %135 {strides = array<i32>} : memref<1x8x128xf32, #tpu.memory_space<vmem>>, vector<1x8x128xf32>,
    return
  }
  func.func @transform_0(%arg0: i32) -> (i32, i32, i32) {
    %c0_i32 = arith.constant 0 : i32
    %c0_i32_0 = arith.constant 0 : i32
    %c0_i32_1 = arith.constant 0 : i32
    return %arg0, %c0_i32, %c0_i32_0 : i32, i32, i32
  }
  func.func @transform_1(%arg0: i32) -> (i32, i32, i32) {
    %c0_i32 = arith.constant 0 : i32
    %c0_i32_0 = arith.constant 0 : i32
    %c0_i32_1 = arith.constant 0 : i32
    return %arg0, %c0_i32, %c0_i32_0 : i32, i32, i32
  }
  func.func @transform_2(%arg0: i32) -> (i32, i32) {
    %c0_i32 = arith.constant 0 : i32
    %c0_i32_0 = arith.constant 0 : i32
    %c0_i32_1 = arith.constant 0 : i32
    return %c0_i32, %c0_i32_0 : i32, i32
  }
  func.func @transform_3(%arg0: i32) -> (i32, i32) {
    %c0_i32 = arith.constant 0 : i32
    %c0_i32_0 = arith.constant 0 : i32
    %c0_i32_1 = arith.constant 0 : i32
    return %c0_i32, %c0_i32_0 : i32, i32
  }
  func.func @transform_4(%arg0: i32) -> (i32, i32) {
    %c0_i32 = arith.constant 0 : i32
    %c0_i32_0 = arith.constant 0 : i32
    %c0_i32_1 = arith.constant 0 : i32
    return %c0_i32, %c0_i32_0 : i32, i32
  }
  func.func @transform_5(%arg0: i32) -> (i32, i32) {
    %c0_i32 = arith.constant 0 : i32
    %c0_i32_0 = arith.constant 0 : i32
    %c0_i32_1 = arith.constant 0 : i32
    return %c0_i32, %c0_i32_0 : i32, i32
  }
  func.func @transform_6(%arg0: i32) -> (i32, i32) {
    %c0_i32 = arith.constant 0 : i32
    %c0_i32_0 = arith.constant 0 : i32
    %c0_i32_1 = arith.constant 0 : i32
    return %c0_i32, %c0_i32_0 : i32, i32
  }
  func.func @transform_7(%arg0: i32) -> (i32, i32) {
    %c0_i32 = arith.constant 0 : i32
    %c0_i32_0 = arith.constant 0 : i32
    %c0_i32_1 = arith.constant 0 : i32
    return %c0_i32, %c0_i32_0 : i32, i32
  }
  func.func @transform_8(%arg0: i32) -> (i32, i32) {
    %c0_i32 = arith.constant 0 : i32
    %c0_i32_0 = arith.constant 0 : i32
    %c0_i32_1 = arith.constant 0 : i32
    return %c0_i32, %c0_i32_0 : i32, i32
  }
  func.func @transform_9(%arg0: i32) -> (i32, i32) {
    %c0_i32 = arith.constant 0 : i32
    %c0_i32_0 = arith.constant 0 : i32
    %c0_i32_1 = arith.constant 0 : i32
    return %c0_i32, %c0_i32_0 : i32, i32
  }
  func.func @transform_10(%arg0: i32) -> (i32, i32) {
    %c0_i32 = arith.constant 0 : i32
    %c0_i32_0 = arith.constant 0 : i32
    %c0_i32_1 = arith.constant 0 : i32
    return %c0_i32, %c0_i32_0 : i32, i32
  }
  func.func @transform_11(%arg0: i32) -> (i32, i32) {
    %c0_i32 = arith.constant 0 : i32
    %c0_i32_0 = arith.constant 0 : i32
    %c0_i32_1 = arith.constant 0 : i32
    return %c0_i32, %c0_i32_0 : i32, i32
  }
  func.func @transform_12(%arg0: i32) -> (i32, i32) {
    %c0_i32 = arith.constant 0 : i32
    %c0_i32_0 = arith.constant 0 : i32
    %c0_i32_1 = arith.constant 0 : i32
    return %c0_i32, %c0_i32_0 : i32, i32
  }
  func.func @transform_13(%arg0: i32) -> (i32, i32) {
    %c0_i32 = arith.constant 0 : i32
    %c0_i32_0 = arith.constant 0 : i32
    %c0_i32_1 = arith.constant 0 : i32
    return %c0_i32, %c0_i32_0 : i32, i32
  }
  func.func @transform_14(%arg0: i32) -> (i32, i32) {
    %c0_i32 = arith.constant 0 : i32
    %c0_i32_0 = arith.constant 0 : i32
    %c0_i32_1 = arith.constant 0 : i32
    return %c0_i32, %c0_i32_0 : i32, i32
  }
  func.func @transform_15(%arg0: i32) -> (i32, i32) {
    %c0_i32 = arith.constant 0 : i32
    %c0_i32_0 = arith.constant 0 : i32
    %c0_i32_1 = arith.constant 0 : i32
    return %c0_i32, %c0_i32_0 : i32, i32
  }
  func.func @transform_16(%arg0: i32) -> (i32, i32) {
    %c0_i32 = arith.constant 0 : i32
    %c0_i32_0 = arith.constant 0 : i32
    %c0_i32_1 = arith.constant 0 : i32
    return %c0_i32, %c0_i32_0 : i32, i32
  }
  func.func @transform_17(%arg0: i32) -> (i32, i32) {
    %c0_i32 = arith.constant 0 : i32
    %c0_i32_0 = arith.constant 0 : i32
    %c0_i32_1 = arith.constant 0 : i32
    return %c0_i32, %c0_i32_0 : i32, i32
  }
  func.func @transform_18(%arg0: i32) -> (i32, i32, i32) {
    %c0_i32 = arith.constant 0 : i32
    %c0_i32_0 = arith.constant 0 : i32
    %c0_i32_1 = arith.constant 0 : i32
    return %arg0, %c0_i32, %c0_i32_0 : i32, i32, i32
  }
  func.func @transform_19(%arg0: i32) -> (i32, i32, i32) {
    %c0_i32 = arith.constant 0 : i32
    %c0_i32_0 = arith.constant 0 : i32
    %c0_i32_1 = arith.constant 0 : i32
    return %arg0, %c0_i32, %c0_i32_0 : i32, i32, i32
  }
}

</mosaic_0001>

<llo_original>
// kernel: tpu_custom_call.1
$region0: #{tpu_custom_call.1}
  #allocation0 [shape = 'u32[]', space=smem, size = 0x4, offset = 0x4, fixed_abs, tag = 'smem constant byte address 0x4 - core index']
  #allocation1 [shape = 'u32[72,128]{1,0:T(1,128)}', space=vmem, size = 0x9000, scoped, tag = 'internal scratch']
  %s0 = inlined_call_operand.hbm [shape: f32[2,8,128], index: 0, kind: input, shape index: {}]
  %s1 = inlined_call_operand.hbm [shape: f32[2,1,8], index: 1, kind: input, shape index: {}]
  %s2 = inlined_call_operand.hbm [shape: bf16[128,512], index: 2, kind: input, shape index: {}]
  %s3 = inlined_call_operand.hbm [shape: bf16[128,512], index: 3, kind: input, shape index: {}]
  %s4 = inlined_call_operand.hbm [shape: bf16[128,512], index: 4, kind: input, shape index: {}]
  %s5 = inlined_call_operand.vmem [shape: f32[1,512], index: 5, kind: input, shape index: {}]
  %s6 = inlined_call_operand.hbm [shape: f32[1,512], index: 6, kind: input, shape index: {}]
  %s7 = inlined_call_operand.hbm [shape: f32[1,512], index: 7, kind: input, shape index: {}]
  %s8 = inlined_call_operand.hbm [shape: bf16[512,128], index: 8, kind: input, shape index: {}]
  %s9 = inlined_call_operand.vmem [shape: f32[1,128], index: 9, kind: input, shape index: {}]
  %s10 = inlined_call_operand.hbm [shape: bf16[128,128], index: 10, kind: input, shape index: {}]
  %s11 = inlined_call_operand.vmem [shape: f32[1,128], index: 11, kind: input, shape index: {}]
  %s12 = inlined_call_operand.hbm [shape: bf16[128,128], index: 12, kind: input, shape index: {}]
  %s13 = inlined_call_operand.vmem [shape: f32[1,128], index: 13, kind: input, shape index: {}]
  %s14 = inlined_call_operand.vmem [shape: f32[1,128], index: 14, kind: input, shape index: {}]
  %s15 = inlined_call_operand.vmem [shape: f32[1,128], index: 15, kind: input, shape index: {}]
  %s16 = inlined_call_operand.vmem [shape: f32[1,128], index: 16, kind: input, shape index: {}]
  %s17 = inlined_call_operand.vmem [shape: f32[1,128], index: 17, kind: input, shape index: {}]
  %s18 = inlined_call_operand.hbm [shape: f32[2,8,128], index: 18, kind: output, shape index: {0}]
  %s19 = inlined_call_operand.hbm [shape: f32[2,8,128], index: 19, kind: output, shape index: {1}]
  %20 = xla_tuple %s18, %s19
  %s21 = sld [smem:[#allocation0]]
  $region153: #{tpu_custom_call.1} parent=0
    _
  %s23 = ssub.s32 1, %s21
  %s24 = scalar_select 0, %s23, %s21
  $region1: #{tpu_custom_call.1} parent=0
    #allocation2 [shape = 'u8[8192]{0}', space=vmem, size = 0x2000, scoped, tag = 'input window, operand 0']
    #allocation3 [shape = 's32[2]{0}', space=sflag, size = 0x8, scoped, tag = 'scoped memory for tpu_custom_call.1']
    #allocation4 [shape = 's32[2]{0}', space=sflag, size = 0x8, scoped, tag = 'scoped memory for tpu_custom_call.1']
    #allocation5 [shape = 'u8[1024]{0}', space=vmem, size = 0x400, scoped, tag = 'input window, operand 1']
    #allocation6 [shape = 's32[2]{0}', space=sflag, size = 0x8, scoped, tag = 'scoped memory for tpu_custom_call.1']
    #allocation7 [shape = 'u8[131072]{0}', space=vmem, size = 0x20000, scoped, tag = 'input window, operand 2, single buffered']
    #allocation8 [shape = 'u8[131072]{0}', space=vmem, size = 0x20000, scoped, tag = 'input window, operand 3, single buffered']
    #allocation9 [shape = 's32[1]{0}', space=sflag, size = 0x4, scoped, tag = 'scoped memory for tpu_custom_call.1']
    #allocation10 [shape = 'u8[131072]{0}', space=vmem, size = 0x20000, scoped, tag = 'input window, operand 4, single buffered']
    #allocation11 [shape = 'u8[2048]{0}', space=vmem, size = 0x800, scoped, tag = 'input window, operand 6, single buffered']
    #allocation12 [shape = 's32[1]{0}', space=sflag, size = 0x4, scoped, tag = 'scoped memory for tpu_custom_call.1']
    #allocation13 [shape = 'u8[2048]{0}', space=vmem, size = 0x800, scoped, tag = 'input window, operand 7, single buffered']
    #allocation14 [shape = 'u8[131072]{0}', space=vmem, size = 0x20000, scoped, tag = 'input window, operand 8, single buffered']
    #allocation15 [shape = 's32[1]{0}', space=sflag, size = 0x4, scoped, tag = 'scoped memory for tpu_custom_call.1']
    #allocation16 [shape = 'u8[32768]{0}', space=vmem, size = 0x8000, scoped, tag = 'input window, operand 10, single buffered']
    #allocation17 [shape = 'u8[32768]{0}', space=vmem, size = 0x8000, scoped, tag = 'input window, operand 12, single buffered']
    #allocation18 [shape = 's32[1]{0}', space=sflag, size = 0x4, scoped, tag = 'scoped memory for tpu_custom_call.1']
    #allocation19 [shape = 'u8[8192]{0}', space=vmem, size = 0x2000, scoped, tag = 'output window, operand 0']
    #allocation20 [shape = 'u8[8192]{0}', space=vmem, size = 0x2000, scoped, tag = 'output window, operand 1']
    #allocation21 [shape = 's32[2]{0}', space=sflag, size = 0x8, scoped, tag = 'scoped memory for tpu_custom_call.1']
    %25 = vsyncpa [#allocation3], 0
    %s26 = scalar_lea.sflag [#allocation3], 1
    %27 = vsyncpa %s26, 0
    %28 = vsyncpa [#allocation6], 0
    %s29 = scalar_lea.sflag [#allocation6], 1
    %30 = vsyncpa %s29, 0
    %31 = vsyncpa [#allocation9], 0
    %32 = vsyncpa [#allocation12], 0
    %33 = vsyncpa [#allocation15], 0
    %34 = vsyncpa [#allocation18], 0
    %35 = vsyncpa [#allocation4], 0
    %s36 = scalar_lea.sflag [#allocation4], 1
    %37 = vsyncpa %s36, 0
    %38 = vsyncpa [#allocation21], 0
    %s39 = scalar_lea.sflag [#allocation21], 1
    %40 = vsyncpa %s39, 0
    loop: start=0, step=1, limit=4
    $region2: #{tpu_custom_call.1} parent=1 // loop_pre_header
      _
    $region3: #{tpu_custom_call.1} parent=1 // loop_header
      %s42 = sphi 0, %s46
      %p43 = scmp.ge.s32.totalorder %s42, 4
      %s52 = sphi 0, %s54
      %s55 = sphi 0, %s52
      %s56 = sphi 0, %s55
      %s72 = sphi 0, %s56
      %s78 = sphi 0, %s80
      %s81 = sphi 0, %s78
      %s82 = sphi 0, %s81
      %s98 = sphi 0, %s82
      %s102 = sphi 0, %s102
      %s104 = sphi 0, %s102
      %s105 = sphi 0, %s104
      %s119 = sphi 0, %s105
      %s123 = sphi 0, %s123
      %s125 = sphi 0, %s123
      %s126 = sphi 0, %s125
      %s140 = sphi 0, %s126
      %s144 = sphi 0, %s144
      %s146 = sphi 0, %s144
      %s147 = sphi 0, %s146
      %s161 = sphi 0, %s147
      %s165 = sphi 0, %s165
      %s167 = sphi 0, %s165
      %s168 = sphi 0, %s167
      %s182 = sphi 0, %s168
      %s186 = sphi 0, %s186
      %s188 = sphi 0, %s186
      %s189 = sphi 0, %s188
      %s203 = sphi 0, %s189
      %s207 = sphi 0, %s207
      %s209 = sphi 0, %s207
      %s210 = sphi 0, %s209
      %s224 = sphi 0, %s210
      %s228 = sphi 0, %s228
      %s230 = sphi 0, %s228
      %s231 = sphi 0, %s230
      %s245 = sphi 0, %s231
      %s249 = sphi 0, %s249
      %s251 = sphi 0, %s249
      %s252 = sphi 0, %s251
      %s266 = sphi 0, %s252
      %s270 = sphi 0, %s270
      %s272 = sphi 0, %s270
      %s273 = sphi 0, %s272
      %s287 = sphi 0, %s273
      %s291 = sphi 0, %s291
      %s293 = sphi 0, %s291
      %s294 = sphi 0, %s293
      %s308 = sphi 0, %s294
      %s312 = sphi 0, %s312
      %s314 = sphi 0, %s312
      %s315 = sphi 0, %s314
      %s329 = sphi 0, %s315
      %s333 = sphi 0, %s333
      %s335 = sphi 0, %s333
      %s336 = sphi 0, %s335
      %s350 = sphi 0, %s336
      %s354 = sphi 0, %s354
      %s356 = sphi 0, %s354
      %s357 = sphi 0, %s356
      %s371 = sphi 0, %s357
      %s375 = sphi 0, %s375
      %s377 = sphi 0, %s375
      %s378 = sphi 0, %s377
      %s392 = sphi 0, %s378
      %s396 = sphi 0, %s396
      %s398 = sphi 0, %s396
      %s399 = sphi 0, %s398
      %s413 = sphi 0, %s399
      %s417 = sphi 0, %s417
      %s419 = sphi 0, %s417
      %s420 = sphi 0, %s419
      %s434 = sphi 0, %s420
      %s440 = sphi 0, %s442
      %s443 = sphi 0, %s440
      %s444 = sphi 0, %s443
      %s460 = sphi 0, %s444
      %s466 = sphi 0, %s468
      %s469 = sphi 0, %s466
      %s470 = sphi 0, %s469
      %s486 = sphi 0, %s470
    $region4: #{tpu_custom_call.1} parent=1 // loop_header_branch
      %45 = sbr.rel (%p43) target = $region8
    $region5: #{tpu_custom_call.1} parent=1 // loop_body
      %s47 = ssub.s32 %s42, 1
      %s48 = ssub.s32 %s42, 2
      %s49 = sadd.s32 %s42, 1
      %s50 = ssub.s32 %s42, %s49
      %p51 = scmp.eq.s32.totalorder %s50, 0
      %s53 = sadd.s32 %s52, 1
      %s54 = scalar_select %p51, %s52, %s53
      %p57 = pneg %p51
      %p58 = scmp.eq.s32.totalorder %s42, 1
      %p59 = por %p57, %p58
      %p60 = scmp.ne.s32.totalorder %s52, %s55
      %p61 = scmp.eq.s32.totalorder %s42, 0
      %p62 = por %p60, %p61
      %p63 = scmp.ne.s32.totalorder %s52, %s55
      %p64 = scmp.eq.s32.totalorder %s47, 1
      %p65 = por %p63, %p64
      %p66 = scmp.ne.s32.totalorder %s55, %s56
      %p67 = scmp.eq.s32.totalorder %s47, 0
      %p68 = por %p66, %p67
      %p69 = scmp.ne.s32.totalorder %s55, %s56
      %p70 = scmp.eq.s32.totalorder %s48, 1
      %p71 = por %p69, %p70
      %p73 = scmp.ne.s32.totalorder %s56, %s72
      %p74 = scmp.eq.s32.totalorder %s48, 0
      %p75 = por %p73, %p74
      %s76 = ssub.s32 %s42, %s49
      %p77 = scmp.eq.s32.totalorder %s76, 0
      %s79 = sadd.s32 %s78, 1
      %s80 = scalar_select %p77, %s78, %s79
      %p83 = pneg %p77
      %p84 = scmp.eq.s32.totalorder %s42, 1
      %p85 = por %p83, %p84
      %p86 = scmp.ne.s32.totalorder %s78, %s81
      %p87 = scmp.eq.s32.totalorder %s42, 0
      %p88 = por %p86, %p87
      %p89 = scmp.ne.s32.totalorder %s78, %s81
      %p90 = scmp.eq.s32.totalorder %s47, 1
      %p91 = por %p89, %p90
      %p92 = scmp.ne.s32.totalorder %s81, %s82
      %p93 = scmp.eq.s32.totalorder %s47, 0
      %p94 = por %p92, %p93
      %p95 = scmp.ne.s32.totalorder %s81, %s82
      %p96 = scmp.eq.s32.totalorder %s48, 1
      %p97 = por %p95, %p96
      %p99 = scmp.ne.s32.totalorder %s82, %s98
      %p100 = scmp.eq.s32.totalorder %s48, 0
      %p101 = por %p99, %p100
      %s103 = sadd.s32 %s102, 1
      %p106 = scmp.eq.s32.totalorder %s42, 1
      %p107 = scmp.ne.s32.totalorder %s102, %s104
      %p108 = scmp.eq.s32.totalorder %s42, 0
      %p109 = por %p107, %p108
      %p110 = scmp.ne.s32.totalorder %s102, %s104
      %p111 = scmp.eq.s32.totalorder %s47, 1
      %p112 = por %p110, %p111
      %p113 = scmp.ne.s32.totalorder %s104, %s105
      %p114 = scmp.eq.s32.totalorder %s47, 0
      %p115 = por %p113, %p114
      %p116 = scmp.ne.s32.totalorder %s104, %s105
      %p117 = scmp.eq.s32.totalorder %s48, 1
      %p118 = por %p116, %p117
      %p120 = scmp.ne.s32.totalorder %s105, %s119
      %p121 = scmp.eq.s32.totalorder %s48, 0
      %p122 = por %p120, %p121
      %s124 = sadd.s32 %s123, 1
      %p127 = scmp.eq.s32.totalorder %s42, 1
      %p128 = scmp.ne.s32.totalorder %s123, %s125
      %p129 = scmp.eq.s32.totalorder %s42, 0
      %p130 = por %p128, %p129
      %p131 = scmp.ne.s32.totalorder %s123, %s125
      %p132 = scmp.eq.s32.totalorder %s47, 1
      %p133 = por %p131, %p132
      %p134 = scmp.ne.s32.totalorder %s125, %s126
      %p135 = scmp.eq.s32.totalorder %s47, 0
      %p136 = por %p134, %p135
      %p137 = scmp.ne.s32.totalorder %s125, %s126
      %p138 = scmp.eq.s32.totalorder %s48, 1
      %p139 = por %p137, %p138
      %p141 = scmp.ne.s32.totalorder %s126, %s140
      %p142 = scmp.eq.s32.totalorder %s48, 0
      %p143 = por %p141, %p142
      %s145 = sadd.s32 %s144, 1
      %p148 = scmp.eq.s32.totalorder %s42, 1
      %p149 = scmp.ne.s32.totalorder %s144, %s146
      %p150 = scmp.eq.s32.totalorder %s42, 0
      %p151 = por %p149, %p150
      %p152 = scmp.ne.s32.totalorder %s144, %s146
      %p153 = scmp.eq.s32.totalorder %s47, 1
      %p154 = por %p152, %p153
      %p155 = scmp.ne.s32.totalorder %s146, %s147
      %p156 = scmp.eq.s32.totalorder %s47, 0
      %p157 = por %p155, %p156
      %p158 = scmp.ne.s32.totalorder %s146, %s147
      %p159 = scmp.eq.s32.totalorder %s48, 1
      %p160 = por %p158, %p159
      %p162 = scmp.ne.s32.totalorder %s147, %s161
      %p163 = scmp.eq.s32.totalorder %s48, 0
      %p164 = por %p162, %p163
      %s166 = sadd.s32 %s165, 1
      %p169 = scmp.eq.s32.totalorder %s42, 1
      %p170 = scmp.ne.s32.totalorder %s165, %s167
      %p171 = scmp.eq.s32.totalorder %s42, 0
      %p172 = por %p170, %p171
      %p173 = scmp.ne.s32.totalorder %s165, %s167
      %p174 = scmp.eq.s32.totalorder %s47, 1
      %p175 = por %p173, %p174
      %p176 = scmp.ne.s32.totalorder %s167, %s168
      %p177 = scmp.eq.s32.totalorder %s47, 0
      %p178 = por %p176, %p177
      %p179 = scmp.ne.s32.totalorder %s167, %s168
      %p180 = scmp.eq.s32.totalorder %s48, 1
      %p181 = por %p179, %p180
      %p183 = scmp.ne.s32.totalorder %s168, %s182
      %p184 = scmp.eq.s32.totalorder %s48, 0
      %p185 = por %p183, %p184
      %s187 = sadd.s32 %s186, 1
      %p190 = scmp.eq.s32.totalorder %s42, 1
      %p191 = scmp.ne.s32.totalorder %s186, %s188
      %p192 = scmp.eq.s32.totalorder %s42, 0
      %p193 = por %p191, %p192
      %p194 = scmp.ne.s32.totalorder %s186, %s188
      %p195 = scmp.eq.s32.totalorder %s47, 1
      %p196 = por %p194, %p195
      %p197 = scmp.ne.s32.totalorder %s188, %s189
      %p198 = scmp.eq.s32.totalorder %s47, 0
      %p199 = por %p197, %p198
      %p200 = scmp.ne.s32.totalorder %s188, %s189
      %p201 = scmp.eq.s32.totalorder %s48, 1
      %p202 = por %p200, %p201
      %p204 = scmp.ne.s32.totalorder %s189, %s203
      %p205 = scmp.eq.s32.totalorder %s48, 0
      %p206 = por %p204, %p205
      %s208 = sadd.s32 %s207, 1
      %p211 = scmp.eq.s32.totalorder %s42, 1
      %p212 = scmp.ne.s32.totalorder %s207, %s209
      %p213 = scmp.eq.s32.totalorder %s42, 0
      %p214 = por %p212, %p213
      %p215 = scmp.ne.s32.totalorder %s207, %s209
      %p216 = scmp.eq.s32.totalorder %s47, 1
      %p217 = por %p215, %p216
      %p218 = scmp.ne.s32.totalorder %s209, %s210
      %p219 = scmp.eq.s32.totalorder %s47, 0
      %p220 = por %p218, %p219
      %p221 = scmp.ne.s32.totalorder %s209, %s210
      %p222 = scmp.eq.s32.totalorder %s48, 1
      %p223 = por %p221, %p222
      %p225 = scmp.ne.s32.totalorder %s210, %s224
      %p226 = scmp.eq.s32.totalorder %s48, 0
      %p227 = por %p225, %p226
      %s229 = sadd.s32 %s228, 1
      %p232 = scmp.eq.s32.totalorder %s42, 1
      %p233 = scmp.ne.s32.totalorder %s228, %s230
      %p234 = scmp.eq.s32.totalorder %s42, 0
      %p235 = por %p233, %p234
      %p236 = scmp.ne.s32.totalorder %s228, %s230
      %p237 = scmp.eq.s32.totalorder %s47, 1
      %p238 = por %p236, %p237
      %p239 = scmp.ne.s32.totalorder %s230, %s231
      %p240 = scmp.eq.s32.totalorder %s47, 0
      %p241 = por %p239, %p240
      %p242 = scmp.ne.s32.totalorder %s230, %s231
      %p243 = scmp.eq.s32.totalorder %s48, 1
      %p244 = por %p242, %p243
      %p246 = scmp.ne.s32.totalorder %s231, %s245
      %p247 = scmp.eq.s32.totalorder %s48, 0
      %p248 = por %p246, %p247
      %s250 = sadd.s32 %s249, 1
      %p253 = scmp.eq.s32.totalorder %s42, 1
      %p254 = scmp.ne.s32.totalorder %s249, %s251
      %p255 = scmp.eq.s32.totalorder %s42, 0
      %p256 = por %p254, %p255
      %p257 = scmp.ne.s32.totalorder %s249, %s251
      %p258 = scmp.eq.s32.totalorder %s47, 1
      %p259 = por %p257, %p258
      %p260 = scmp.ne.s32.totalorder %s251, %s252
      %p261 = scmp.eq.s32.totalorder %s47, 0
      %p262 = por %p260, %p261
      %p263 = scmp.ne.s32.totalorder %s251, %s252
      %p264 = scmp.eq.s32.totalorder %s48, 1
      %p265 = por %p263, %p264
      %p267 = scmp.ne.s32.totalorder %s252, %s266
      %p268 = scmp.eq.s32.totalorder %s48, 0
      %p269 = por %p267, %p268
      %s271 = sadd.s32 %s270, 1
      %p274 = scmp.eq.s32.totalorder %s42, 1
      %p275 = scmp.ne.s32.totalorder %s270, %s272
      %p276 = scmp.eq.s32.totalorder %s42, 0
      %p277 = por %p275, %p276
      %p278 = scmp.ne.s32.totalorder %s270, %s272
      %p279 = scmp.eq.s32.totalorder %s47, 1
      %p280 = por %p278, %p279
      %p281 = scmp.ne.s32.totalorder %s272, %s273
      %p282 = scmp.eq.s32.totalorder %s47, 0
      %p283 = por %p281, %p282
      %p284 = scmp.ne.s32.totalorder %s272, %s273
      %p285 = scmp.eq.s32.totalorder %s48, 1
      %p286 = por %p284, %p285
      %p288 = scmp.ne.s32.totalorder %s273, %s287
      %p289 = scmp.eq.s32.totalorder %s48, 0
      %p290 = por %p288, %p289
      %s292 = sadd.s32 %s291, 1
      %p295 = scmp.eq.s32.totalorder %s42, 1
      %p296 = scmp.ne.s32.totalorder %s291, %s293
      %p297 = scmp.eq.s32.totalorder %s42, 0
      %p298 = por %p296, %p297
      %p299 = scmp.ne.s32.totalorder %s291, %s293
      %p300 = scmp.eq.s32.totalorder %s47, 1
      %p301 = por %p299, %p300
      %p302 = scmp.ne.s32.totalorder %s293, %s294
      %p303 = scmp.eq.s32.totalorder %s47, 0
      %p304 = por %p302, %p303
      %p305 = scmp.ne.s32.totalorder %s293, %s294
      %p306 = scmp.eq.s32.totalorder %s48, 1
      %p307 = por %p305, %p306
      %p309 = scmp.ne.s32.totalorder %s294, %s308
      %p310 = scmp.eq.s32.totalorder %s48, 0
      %p311 = por %p309, %p310
      %s313 = sadd.s32 %s312, 1
      %p316 = scmp.eq.s32.totalorder %s42, 1
      %p317 = scmp.ne.s32.totalorder %s312, %s314
      %p318 = scmp.eq.s32.totalorder %s42, 0
      %p319 = por %p317, %p318
      %p320 = scmp.ne.s32.totalorder %s312, %s314
      %p321 = scmp.eq.s32.totalorder %s47, 1
      %p322 = por %p320, %p321
      %p323 = scmp.ne.s32.totalorder %s314, %s315
      %p324 = scmp.eq.s32.totalorder %s47, 0
      %p325 = por %p323, %p324
      %p326 = scmp.ne.s32.totalorder %s314, %s315
      %p327 = scmp.eq.s32.totalorder %s48, 1
      %p328 = por %p326, %p327
      %p330 = scmp.ne.s32.totalorder %s315, %s329
      %p331 = scmp.eq.s32.totalorder %s48, 0
      %p332 = por %p330, %p331
      %s334 = sadd.s32 %s333, 1
      %p337 = scmp.eq.s32.totalorder %s42, 1
      %p338 = scmp.ne.s32.totalorder %s333, %s335
      %p339 = scmp.eq.s32.totalorder %s42, 0
      %p340 = por %p338, %p339
      %p341 = scmp.ne.s32.totalorder %s333, %s335
      %p342 = scmp.eq.s32.totalorder %s47, 1
      %p343 = por %p341, %p342
      %p344 = scmp.ne.s32.totalorder %s335, %s336
      %p345 = scmp.eq.s32.totalorder %s47, 0
      %p346 = por %p344, %p345
      %p347 = scmp.ne.s32.totalorder %s335, %s336
      %p348 = scmp.eq.s32.totalorder %s48, 1
      %p349 = por %p347, %p348
      %p351 = scmp.ne.s32.totalorder %s336, %s350
      %p352 = scmp.eq.s32.totalorder %s48, 0
      %p353 = por %p351, %p352
      %s355 = sadd.s32 %s354, 1
      %p358 = scmp.eq.s32.totalorder %s42, 1
      %p359 = scmp.ne.s32.totalorder %s354, %s356
      %p360 = scmp.eq.s32.totalorder %s42, 0
      %p361 = por %p359, %p360
      %p362 = scmp.ne.s32.totalorder %s354, %s356
      %p363 = scmp.eq.s32.totalorder %s47, 1
      %p364 = por %p362, %p363
      %p365 = scmp.ne.s32.totalorder %s356, %s357
      %p366 = scmp.eq.s32.totalorder %s47, 0
      %p367 = por %p365, %p366
      %p368 = scmp.ne.s32.totalorder %s356, %s357
      %p369 = scmp.eq.s32.totalorder %s48, 1
      %p370 = por %p368, %p369
      %p372 = scmp.ne.s32.totalorder %s357, %s371
      %p373 = scmp.eq.s32.totalorder %s48, 0
      %p374 = por %p372, %p373
      %s376 = sadd.s32 %s375, 1
      %p379 = scmp.eq.s32.totalorder %s42, 1
      %p380 = scmp.ne.s32.totalorder %s375, %s377
      %p381 = scmp.eq.s32.totalorder %s42, 0
      %p382 = por %p380, %p381
      %p383 = scmp.ne.s32.totalorder %s375, %s377
      %p384 = scmp.eq.s32.totalorder %s47, 1
      %p385 = por %p383, %p384
      %p386 = scmp.ne.s32.totalorder %s377, %s378
      %p387 = scmp.eq.s32.totalorder %s47, 0
      %p388 = por %p386, %p387
      %p389 = scmp.ne.s32.totalorder %s377, %s378
      %p390 = scmp.eq.s32.totalorder %s48, 1
      %p391 = por %p389, %p390
      %p393 = scmp.ne.s32.totalorder %s378, %s392
      %p394 = scmp.eq.s32.totalorder %s48, 0
      %p395 = por %p393, %p394
      %s397 = sadd.s32 %s396, 1
      %p400 = scmp.eq.s32.totalorder %s42, 1
      %p401 = scmp.ne.s32.totalorder %s396, %s398
      %p402 = scmp.eq.s32.totalorder %s42, 0
      %p403 = por %p401, %p402
      %p404 = scmp.ne.s32.totalorder %s396, %s398
      %p405 = scmp.eq.s32.totalorder %s47, 1
      %p406 = por %p404, %p405
      %p407 = scmp.ne.s32.totalorder %s398, %s399
      %p408 = scmp.eq.s32.totalorder %s47, 0
      %p409 = por %p407, %p408
      %p410 = scmp.ne.s32.totalorder %s398, %s399
      %p411 = scmp.eq.s32.totalorder %s48, 1
      %p412 = por %p410, %p411
      %p414 = scmp.ne.s32.totalorder %s399, %s413
      %p415 = scmp.eq.s32.totalorder %s48, 0
      %p416 = por %p414, %p415
      %s418 = sadd.s32 %s417, 1
      %p421 = scmp.eq.s32.totalorder %s42, 1
      %p422 = scmp.ne.s32.totalorder %s417, %s419
      %p423 = scmp.eq.s32.totalorder %s42, 0
      %p424 = por %p422, %p423
      %p425 = scmp.ne.s32.totalorder %s417, %s419
      %p426 = scmp.eq.s32.totalorder %s47, 1
      %p427 = por %p425, %p426
      %p428 = scmp.ne.s32.totalorder %s419, %s420
      %p429 = scmp.eq.s32.totalorder %s47, 0
      %p430 = por %p428, %p429
      %p431 = scmp.ne.s32.totalorder %s419, %s420
      %p432 = scmp.eq.s32.totalorder %s48, 1
      %p433 = por %p431, %p432
      %p435 = scmp.ne.s32.totalorder %s420, %s434
      %p436 = scmp.eq.s32.totalorder %s48, 0
      %p437 = por %p435, %p436
      %s438 = ssub.s32 %s42, %s49
      %p439 = scmp.eq.s32.totalorder %s438, 0
      %s441 = sadd.s32 %s440, 1
      %s442 = scalar_select %p439, %s440, %s441
      %p445 = pneg %p439
      %p446 = scmp.eq.s32.totalorder %s42, 1
      %p447 = por %p445, %p446
      %p448 = scmp.ne.s32.totalorder %s440, %s443
      %p449 = scmp.eq.s32.totalorder %s42, 0
      %p450 = por %p448, %p449
      %p451 = scmp.ne.s32.totalorder %s440, %s443
      %p452 = scmp.eq.s32.totalorder %s47, 1
      %p453 = por %p451, %p452
      %p454 = scmp.ne.s32.totalorder %s443, %s444
      %p455 = scmp.eq.s32.totalorder %s47, 0
      %p456 = por %p454, %p455
      %p457 = scmp.ne.s32.totalorder %s443, %s444
      %p458 = scmp.eq.s32.totalorder %s48, 1
      %p459 = por %p457, %p458
      %p461 = scmp.ne.s32.totalorder %s444, %s460
      %p462 = scmp.eq.s32.totalorder %s48, 0
      %p463 = por %p461, %p462
      %s464 = ssub.s32 %s42, %s49
      %p465 = scmp.eq.s32.totalorder %s464, 0
      %s467 = sadd.s32 %s466, 1
      %s468 = scalar_select %p465, %s466, %s467
      %p471 = pneg %p465
      %p472 = scmp.eq.s32.totalorder %s42, 1
      %p473 = por %p471, %p472
      %p474 = scmp.ne.s32.totalorder %s466, %s469
      %p475 = scmp.eq.s32.totalorder %s42, 0
      %p476 = por %p474, %p475
      %p477 = scmp.ne.s32.totalorder %s466, %s469
      %p478 = scmp.eq.s32.totalorder %s47, 1
      %p479 = por %p477, %p478
      %p480 = scmp.ne.s32.totalorder %s469, %s470
      %p481 = scmp.eq.s32.totalorder %s47, 0
      %p482 = por %p480, %p481
      %p483 = scmp.ne.s32.totalorder %s469, %s470
      %p484 = scmp.eq.s32.totalorder %s48, 1
      %p485 = por %p483, %p484
      %p487 = scmp.ne.s32.totalorder %s470, %s486
      %p488 = scmp.eq.s32.totalorder %s48, 0
      %p489 = por %p487, %p488
      %p490 = scmp.le.s32.totalorder 1, %s42
      %p491 = scmp.lt.s32.totalorder %s42, 3
      %p492 = pnand %p490, %p491
      %p493 = pneg %p492
      // Predicated region
      $region9: #{tpu_custom_call.1} parent=5 // pred_check
        _
      $region10: #{tpu_custom_call.1} parent=5 // pred_check_branch
        %495 = sbr.rel (%p492) target = $region12
      $region11: #{tpu_custom_call.1} parent=5 // pred_region
        %s496 = ssub.s32 %s42, 1
        // Predicated region
        $region13: #{tpu_custom_call.1} parent=11 // pred_check
          %p497 = pneg %p115
        $region14: #{tpu_custom_call.1} parent=11 // pred_check_branch
          %499 = sbr.rel (%p497) target = $region16
        $region15: #{tpu_custom_call.1} parent=11 // pred_region
          %501 = vsyncadd [#allocation6], 0
          %s502 = sshll.u32 %s2, 4
          %s503 = int_to_ptr.hbm [resolvable:$true] %s502
          %s504 = sshll.u32 [#allocation7], 4
          %s505 = int_to_ptr.vmem [resolvable:$true] %s504
          %510 = dma.hbm_to_vmem [thread:$0]  %s503, 4096, %s505, [#allocation6], 256, 256, 16
        $region16: #{tpu_custom_call.1} parent=11 // pred_fallthru
          _
        // Predicated region
        $region17: #{tpu_custom_call.1} parent=11 // pred_check
          %p511 = pneg %p136
        $region18: #{tpu_custom_call.1} parent=11 // pred_check_branch
          %513 = sbr.rel (%p511) target = $region20
        $region19: #{tpu_custom_call.1} parent=11 // pred_region
          %515 = vsyncadd [#allocation9], 0
          %s516 = sshll.u32 %s3, 4
          %s517 = int_to_ptr.hbm [resolvable:$true] %s516
          %s518 = sshll.u32 [#allocation8], 4
          %s519 = int_to_ptr.vmem [resolvable:$true] %s518
          %524 = dma.hbm_to_vmem [thread:$0]  %s517, 4096, %s519, [#allocation9], 256, 256, 16
        $region20: #{tpu_custom_call.1} parent=11 // pred_fallthru
          _
        // Predicated region
        $region21: #{tpu_custom_call.1} parent=11 // pred_check
          %p525 = pneg %p157
        $region22: #{tpu_custom_call.1} parent=11 // pred_check_branch
          %527 = sbr.rel (%p525) target = $region24
        $region23: #{tpu_custom_call.1} parent=11 // pred_region
          %529 = vsyncadd [#allocation9], 0
          %s530 = sshll.u32 %s4, 4
          %s531 = int_to_ptr.hbm [resolvable:$true] %s530
          %s532 = sshll.u32 [#allocation10], 4
          %s533 = int_to_ptr.vmem [resolvable:$true] %s532
          %538 = dma.hbm_to_vmem [thread:$0]  %s531, 4096, %s533, [#allocation9], 256, 256, 16
        $region24: #{tpu_custom_call.1} parent=11 // pred_fallthru
          _
        // Predicated region
        $region25: #{tpu_custom_call.1} parent=11 // pred_check
          %p539 = pneg %p178
        $region26: #{tpu_custom_call.1} parent=11 // pred_check_branch
          %541 = sbr.rel (%p539) target = $region28
        $region27: #{tpu_custom_call.1} parent=11 // pred_region
          _
        $region28: #{tpu_custom_call.1} parent=11 // pred_fallthru
          _
        // Predicated region
        $region29: #{tpu_custom_call.1} parent=11 // pred_check
          %p542 = pneg %p199
        $region30: #{tpu_custom_call.1} parent=11 // pred_check_branch
          %544 = sbr.rel (%p542) target = $region32
        $region31: #{tpu_custom_call.1} parent=11 // pred_region
          %546 = vsyncadd [#allocation12], 0
          %s548 = sshll.u32 %s6, 4
          %s549 = int_to_ptr.hbm [resolvable:$true] %s548
          %s550 = sshll.u32 [#allocation11], 4
          %s551 = int_to_ptr.vmem [resolvable:$true] %s550
          %553 = dma.hbm_to_vmem [thread:$0]  %s549, 64, %s551, [#allocation12]
        $region32: #{tpu_custom_call.1} parent=11 // pred_fallthru
          _
        // Predicated region
        $region33: #{tpu_custom_call.1} parent=11 // pred_check
          %p554 = pneg %p220
        $region34: #{tpu_custom_call.1} parent=11 // pred_check_branch
          %556 = sbr.rel (%p554) target = $region36
        $region35: #{tpu_custom_call.1} parent=11 // pred_region
          %558 = vsyncadd [#allocation12], 0
          %s560 = sshll.u32 %s7, 4
          %s561 = int_to_ptr.hbm [resolvable:$true] %s560
          %s562 = sshll.u32 [#allocation13], 4
          %s563 = int_to_ptr.vmem [resolvable:$true] %s562
          %565 = dma.hbm_to_vmem [thread:$0]  %s561, 64, %s563, [#allocation12]
        $region36: #{tpu_custom_call.1} parent=11 // pred_fallthru
          _
        // Predicated region
        $region37: #{tpu_custom_call.1} parent=11 // pred_check
          %p566 = pneg %p241
        $region38: #{tpu_custom_call.1} parent=11 // pred_check_branch
          %568 = sbr.rel (%p566) target = $region40
        $region39: #{tpu_custom_call.1} parent=11 // pred_region
          %570 = vsyncadd [#allocation15], 0
          %s571 = sshll.u32 %s8, 4
          %s572 = int_to_ptr.hbm [resolvable:$true] %s571
          %s573 = sshll.u32 [#allocation14], 4
          %s574 = int_to_ptr.vmem [resolvable:$true] %s573
          %579 = dma.hbm_to_vmem [thread:$0]  %s572, 4096, %s574, [#allocation15], 64, 64, 4
        $region40: #{tpu_custom_call.1} parent=11 // pred_fallthru
          _
        // Predicated region
        $region41: #{tpu_custom_call.1} parent=11 // pred_check
          %p580 = pneg %p262
        $region42: #{tpu_custom_call.1} parent=11 // pred_check_branch
          %582 = sbr.rel (%p580) target = $region44
        $region43: #{tpu_custom_call.1} parent=11 // pred_region
          _
        $region44: #{tpu_custom_call.1} parent=11 // pred_fallthru
          _
        // Predicated region
        $region45: #{tpu_custom_call.1} parent=11 // pred_check
          %p583 = pneg %p283
        $region46: #{tpu_custom_call.1} parent=11 // pred_check_branch
          %585 = sbr.rel (%p583) target = $region48
        $region47: #{tpu_custom_call.1} parent=11 // pred_region
          %587 = vsyncadd [#allocation15], 0
          %s588 = sshll.u32 %s10, 4
          %s589 = int_to_ptr.hbm [resolvable:$true] %s588
          %s590 = sshll.u32 [#allocation16], 4
          %s591 = int_to_ptr.vmem [resolvable:$true] %s590
          %596 = dma.hbm_to_vmem [thread:$0]  %s589, 1024, %s591, [#allocation15], 64, 64, 4
        $region48: #{tpu_custom_call.1} parent=11 // pred_fallthru
          _
        // Predicated region
        $region49: #{tpu_custom_call.1} parent=11 // pred_check
          %p597 = pneg %p304
        $region50: #{tpu_custom_call.1} parent=11 // pred_check_branch
          %599 = sbr.rel (%p597) target = $region52
        $region51: #{tpu_custom_call.1} parent=11 // pred_region
          _
        $region52: #{tpu_custom_call.1} parent=11 // pred_fallthru
          _
        // Predicated region
        $region53: #{tpu_custom_call.1} parent=11 // pred_check
          %p600 = pneg %p325
        $region54: #{tpu_custom_call.1} parent=11 // pred_check_branch
          %602 = sbr.rel (%p600) target = $region56
        $region55: #{tpu_custom_call.1} parent=11 // pred_region
          %604 = vsyncadd [#allocation18], 0
          %s605 = sshll.u32 %s12, 4
          %s606 = int_to_ptr.hbm [resolvable:$true] %s605
          %s607 = sshll.u32 [#allocation17], 4
          %s608 = int_to_ptr.vmem [resolvable:$true] %s607
          %613 = dma.hbm_to_vmem [thread:$0]  %s606, 1024, %s608, [#allocation18], 64, 64, 4
        $region56: #{tpu_custom_call.1} parent=11 // pred_fallthru
          _
        // Predicated region
        $region57: #{tpu_custom_call.1} parent=11 // pred_check
          %p614 = pneg %p346
        $region58: #{tpu_custom_call.1} parent=11 // pred_check_branch
          %616 = sbr.rel (%p614) target = $region60
        $region59: #{tpu_custom_call.1} parent=11 // pred_region
          _
        $region60: #{tpu_custom_call.1} parent=11 // pred_fallthru
          _
        // Predicated region
        $region61: #{tpu_custom_call.1} parent=11 // pred_check
          %p617 = pneg %p367
        $region62: #{tpu_custom_call.1} parent=11 // pred_check_branch
          %619 = sbr.rel (%p617) target = $region64
        $region63: #{tpu_custom_call.1} parent=11 // pred_region
          _
        $region64: #{tpu_custom_call.1} parent=11 // pred_fallthru
          _
        // Predicated region
        $region65: #{tpu_custom_call.1} parent=11 // pred_check
          %p620 = pneg %p388
        $region66: #{tpu_custom_call.1} parent=11 // pred_check_branch
          %622 = sbr.rel (%p620) target = $region68
        $region67: #{tpu_custom_call.1} parent=11 // pred_region
          _
        $region68: #{tpu_custom_call.1} parent=11 // pred_fallthru
          _
        // Predicated region
        $region69: #{tpu_custom_call.1} parent=11 // pred_check
          %p623 = pneg %p409
        $region70: #{tpu_custom_call.1} parent=11 // pred_check_branch
          %625 = sbr.rel (%p623) target = $region72
        $region71: #{tpu_custom_call.1} parent=11 // pred_region
          _
        $region72: #{tpu_custom_call.1} parent=11 // pred_fallthru
          _
        // Predicated region
        $region73: #{tpu_custom_call.1} parent=11 // pred_check
          %p626 = pneg %p430
        $region74: #{tpu_custom_call.1} parent=11 // pred_check_branch
          %628 = sbr.rel (%p626) target = $region76
        $region75: #{tpu_custom_call.1} parent=11 // pred_region
          _
        $region76: #{tpu_custom_call.1} parent=11 // pred_fallthru
          _
      $region12: #{tpu_custom_call.1} parent=5 // pred_fallthru
        _
      %p629 = scmp.lt.s32.totalorder %s42, 2
      // Predicated region
      $region77: #{tpu_custom_call.1} parent=5 // pred_check
        %p630 = pneg %p629
      $region78: #{tpu_custom_call.1} parent=5 // pred_check_branch
        %632 = sbr.rel (%p630) target = $region80
      $region79: #{tpu_custom_call.1} parent=5 // pred_region
        // Predicated region
        $region81: #{tpu_custom_call.1} parent=79 // pred_check
          %p633 = pneg %p62
        $region82: #{tpu_custom_call.1} parent=79 // pred_check_branch
          %635 = sbr.rel (%p633) target = $region84
        $region83: #{tpu_custom_call.1} parent=79 // pred_region
          %s636 = sand.u32 %s52, 1
          %s637 = scalar_lea.sflag [#allocation3], %s636
          %s638 = sand.u32 %s52, 1
          %s639 = smul.addr %s638, 8
          %s640 = scalar_lea.vmem [#allocation2], %s639
          %642 = vsyncadd %s637, 0
          %s643 = smul.addr %s42, 8
          %s644 = scalar_lea.hbm %s0, %s643
          %s646 = sshll.u32 %s644, 4
          %s647 = int_to_ptr.hbm [resolvable:$true] %s646
          %s648 = sshll.u32 %s640, 4
          %s649 = int_to_ptr.vmem [resolvable:$true] %s648
          %651 = dma.hbm_to_vmem [thread:$0]  %s647, 128, %s649, %s637
        $region84: #{tpu_custom_call.1} parent=79 // pred_fallthru
          _
        // Predicated region
        $region85: #{tpu_custom_call.1} parent=79 // pred_check
          %p652 = pneg %p88
        $region86: #{tpu_custom_call.1} parent=79 // pred_check_branch
          %654 = sbr.rel (%p652) target = $region88
        $region87: #{tpu_custom_call.1} parent=79 // pred_region
          %s655 = sand.u32 %s42, 1
          %s656 = scalar_lea.sflag [#allocation6], %s655
          %s657 = sand.u32 %s78, 1
          %s658 = scalar_lea.vmem [#allocation5], %s657
          %660 = vsyncadd %s656, 0
          %s661 = scalar_lea.hbm %s1, %s42
          %s663 = sshll.u32 %s661, 4
          %s664 = int_to_ptr.hbm [resolvable:$true] %s663
          %s665 = sshll.u32 %s658, 4
          %s666 = int_to_ptr.vmem [resolvable:$true] %s665
          %668 = dma.hbm_to_vmem [thread:$0]  %s664, 16, %s666, %s656
        $region88: #{tpu_custom_call.1} parent=79 // pred_fallthru
          _
      $region80: #{tpu_custom_call.1} parent=5 // pred_fallthru
        _
      %p669 = scmp.le.s32.totalorder 1, %s42
      %p670 = scmp.lt.s32.totalorder %s42, 3
      %p671 = pnand %p669, %p670
      %p672 = pneg %p671
      // Predicated region
      $region89: #{tpu_custom_call.1} parent=5 // pred_check
        _
      $region90: #{tpu_custom_call.1} parent=5 // pred_check_branch
        %674 = sbr.rel (%p671) target = $region92
      $region91: #{tpu_custom_call.1} parent=5 // pred_region
        %s675 = ssub.s32 %s42, 1
        %s676 = sand.u32 %s55, 1
        %s677 = scalar_lea.sflag [#allocation3], %s676
        %s678 = sand.u32 %s55, 1
        %s679 = smul.addr %s678, 8
        %s680 = scalar_lea.vmem [#allocation2], %s679
        // Predicated region
        $region93: #{tpu_custom_call.1} parent=91 // pred_check
          %p681 = pneg %p68
        $region94: #{tpu_custom_call.1} parent=91 // pred_check_branch
          %683 = sbr.rel (%p681) target = $region96
        $region95: #{tpu_custom_call.1} parent=91 // pred_region
          %685 = dma.done %s677, 128
        $region96: #{tpu_custom_call.1} parent=91 // pred_fallthru
          _
        %s686 = sand.u32 %s47, 1
        %s687 = scalar_lea.sflag [#allocation6], %s686
        %s688 = sand.u32 %s81, 1
        %s689 = scalar_lea.vmem [#allocation5], %s688
        // Predicated region
        $region97: #{tpu_custom_call.1} parent=91 // pred_check
          %p690 = pneg %p94
        $region98: #{tpu_custom_call.1} parent=91 // pred_check_branch
          %692 = sbr.rel (%p690) target = $region100
        $region99: #{tpu_custom_call.1} parent=91 // pred_region
          %694 = dma.done %s687, 16
        $region100: #{tpu_custom_call.1} parent=91 // pred_fallthru
          _
        // Predicated region
        $region101: #{tpu_custom_call.1} parent=91 // pred_check
          %p695 = pneg %p115
        $region102: #{tpu_custom_call.1} parent=91 // pred_check_branch
          %697 = sbr.rel (%p695) target = $region104
        $region103: #{tpu_custom_call.1} parent=91 // pred_region
          %699 = dma.done [#allocation6], 4096
        $region104: #{tpu_custom_call.1} parent=91 // pred_fallthru
          _
        // Predicated region
        $region105: #{tpu_custom_call.1} parent=91 // pred_check
          %p700 = pneg %p136
        $region106: #{tpu_custom_call.1} parent=91 // pred_check_branch
          %702 = sbr.rel (%p700) target = $region108
        $region107: #{tpu_custom_call.1} parent=91 // pred_region
          %704 = dma.done [#allocation9], 4096
        $region108: #{tpu_custom_call.1} parent=91 // pred_fallthru
          _
        // Predicated region
        $region109: #{tpu_custom_call.1} parent=91 // pred_check
          %p705 = pneg %p157
        $region110: #{tpu_custom_call.1} parent=91 // pred_check_branch
          %707 = sbr.rel (%p705) target = $region112
        $region111: #{tpu_custom_call.1} parent=91 // pred_region
          %709 = dma.done [#allocation9], 4096
        $region112: #{tpu_custom_call.1} parent=91 // pred_fallthru
          _
        // Predicated region
        $region113: #{tpu_custom_call.1} parent=91 // pred_check
          %p710 = pneg %p199
        $region114: #{tpu_custom_call.1} parent=91 // pred_check_branch
          %712 = sbr.rel (%p710) target = $region116
        $region115: #{tpu_custom_call.1} parent=91 // pred_region
          %714 = dma.done [#allocation12], 64
        $region116: #{tpu_custom_call.1} parent=91 // pred_fallthru
          _
        // Predicated region
        $region117: #{tpu_custom_call.1} parent=91 // pred_check
          %p715 = pneg %p220
        $region118: #{tpu_custom_call.1} parent=91 // pred_check_branch
          %717 = sbr.rel (%p715) target = $region120
        $region119: #{tpu_custom_call.1} parent=91 // pred_region
          %719 = dma.done [#allocation12], 64
        $region120: #{tpu_custom_call.1} parent=91 // pred_fallthru
          _
        // Predicated region
        $region121: #{tpu_custom_call.1} parent=91 // pred_check
          %p720 = pneg %p241
        $region122: #{tpu_custom_call.1} parent=91 // pred_check_branch
          %722 = sbr.rel (%p720) target = $region124
        $region123: #{tpu_custom_call.1} parent=91 // pred_region
          %724 = dma.done [#allocation15], 4096
        $region124: #{tpu_custom_call.1} parent=91 // pred_fallthru
          _
        // Predicated region
        $region125: #{tpu_custom_call.1} parent=91 // pred_check
          %p725 = pneg %p283
        $region126: #{tpu_custom_call.1} parent=91 // pred_check_branch
          %727 = sbr.rel (%p725) target = $region128
        $region127: #{tpu_custom_call.1} parent=91 // pred_region
          %729 = dma.done [#allocation15], 1024
        $region128: #{tpu_custom_call.1} parent=91 // pred_fallthru
          _
        // Predicated region
        $region129: #{tpu_custom_call.1} parent=91 // pred_check
          %p730 = pneg %p325
        $region130: #{tpu_custom_call.1} parent=91 // pred_check_branch
          %732 = sbr.rel (%p730) target = $region132
        $region131: #{tpu_custom_call.1} parent=91 // pred_region
          %734 = dma.done [#allocation18], 1024
        $region132: #{tpu_custom_call.1} parent=91 // pred_fallthru
          _
        %s735 = sand.u32 %s55, 1
        %s736 = scalar_lea.sflag [#allocation3], %s735
        %s737 = sand.u32 %s55, 1
        %s738 = smul.addr %s737, 8
        %s739 = scalar_lea.vmem [#allocation2], %s738
        %p740 = pneg %p68
        %p741 = pneg %p65
        %s742 = sand.u32 %s47, 1
        %s743 = scalar_lea.sflag [#allocation6], %s742
        %s744 = sand.u32 %s81, 1
        %s745 = scalar_lea.vmem [#allocation5], %s744
        %p746 = pneg %p94
        %p747 = pneg %p91
        %p748 = pneg %p115
        %p749 = pneg %p112
        %p750 = pneg %p136
        %p751 = pneg %p133
        %p752 = pneg %p157
        %p753 = pneg %p154
        %p754 = pneg %p178
        %p755 = pneg %p175
        %p756 = pneg %p199
        %p757 = pneg %p196
        %p758 = pneg %p220
        %p759 = pneg %p217
        %p760 = pneg %p241
        %p761 = pneg %p238
        %p762 = pneg %p262
        %p763 = pneg %p259
        %p764 = pneg %p283
        %p765 = pneg %p280
        %p766 = pneg %p304
        %p767 = pneg %p301
        %p768 = pneg %p325
        %p769 = pneg %p322
        %p770 = pneg %p346
        %p771 = pneg %p343
        %p772 = pneg %p367
        %p773 = pneg %p364
        %p774 = pneg %p388
        %p775 = pneg %p385
        %p776 = pneg %p409
        %p777 = pneg %p406
        %p778 = pneg %p430
        %p779 = pneg %p427
        %p780 = pneg %p456
        %p781 = pneg %p453
        %s782 = sand.u32 %s443, 1
        %s783 = scalar_lea.sflag [#allocation4], %s782
        %s784 = sand.u32 %s443, 1
        %s785 = smul.addr %s784, 8
        %s786 = scalar_lea.vmem [#allocation19], %s785
        %p787 = pneg %p482
        %p788 = pneg %p479
        %s789 = sand.u32 %s469, 1
        %s790 = scalar_lea.sflag [#allocation21], %s789
        %s791 = sand.u32 %s469, 1
        %s792 = smul.addr %s791, 8
        %s793 = scalar_lea.vmem [#allocation20], %s792
        %v795 = vlaneseq
        %v796 = vand.u32 %v795, 127
        %vm797 = vcmp.lt.s32.totalorder %v796, 32
        %v798 = vsel %vm797, 1, 0
        %v799 = vcvt.s32.f32 %v798
        %v800 = vld [vmem:[%s680] sm:$0xff]
        %v801 = vpack.c.bf16 %v800, %v800
        %v802 = vld [vmem:[%s689] sm:$0x1]
        %v803 = vld [vmem:[#allocation7] sm:$0xff]
        %v804 = vld [vmem:[#allocation7 + $0x8] sm:$0xff]
        %v805 = vld [vmem:[#allocation7 + $0x10] sm:$0xff]
        %v806 = vld [vmem:[#allocation7 + $0x18] sm:$0xff]
        %v807 = vld [vmem:[#allocation7 + $0x20] sm:$0xff]
        %v808 = vld [vmem:[#allocation7 + $0x28] sm:$0xff]
        %v809 = vld [vmem:[#allocation7 + $0x30] sm:$0xff]
        %v810 = vld [vmem:[#allocation7 + $0x38] sm:$0xff]
        %v811 = vld [vmem:[#allocation7 + $0x40] sm:$0xff]
        %v812 = vld [vmem:[#allocation7 + $0x48] sm:$0xff]
        %v813 = vld [vmem:[#allocation7 + $0x50] sm:$0xff]
        %v814 = vld [vmem:[#allocation7 + $0x58] sm:$0xff]
        %v815 = vld [vmem:[#allocation7 + $0x60] sm:$0xff]
        %v816 = vld [vmem:[#allocation7 + $0x68] sm:$0xff]
        %v817 = vld [vmem:[#allocation7 + $0x70] sm:$0xff]
        %v818 = vld [vmem:[#allocation7 + $0x78] sm:$0xff]
        %v819 = vld [vmem:[#allocation7 + $0x80] sm:$0xff]
        %v820 = vld [vmem:[#allocation7 + $0x88] sm:$0xff]
        %v821 = vld [vmem:[#allocation7 + $0x90] sm:$0xff]
        %v822 = vld [vmem:[#allocation7 + $0x98] sm:$0xff]
        %v823 = vld [vmem:[#allocation7 + $0xa0] sm:$0xff]
        %v824 = vld [vmem:[#allocation7 + $0xa8] sm:$0xff]
        %v825 = vld [vmem:[#allocation7 + $0xb0] sm:$0xff]
        %v826 = vld [vmem:[#allocation7 + $0xb8] sm:$0xff]
        %v827 = vld [vmem:[#allocation7 + $0xc0] sm:$0xff]
        %v828 = vld [vmem:[#allocation7 + $0xc8] sm:$0xff]
        %v829 = vld [vmem:[#allocation7 + $0xd0] sm:$0xff]
        %v830 = vld [vmem:[#allocation7 + $0xd8] sm:$0xff]
        %v831 = vld [vmem:[#allocation7 + $0xe0] sm:$0xff]
        %v832 = vld [vmem:[#allocation7 + $0xe8] sm:$0xff]
        %v833 = vld [vmem:[#allocation7 + $0xf0] sm:$0xff]
        %v834 = vld [vmem:[#allocation7 + $0xf8] sm:$0xff]
        %v835 = vld [vmem:[%s5] sm:$0xf]
        %v837 = vperm.slane %v835, 0
        %v838 = vperm.slane %v835, 1
        %v839 = vperm.slane %v835, 2
        %v840 = vperm.slane %v835, 3
        %v877 = vunpack.c.l.b16 %v803
        %v878 = vunpack.c.h.b16 %v803
        %v879 = vunpack.c.l.b16 %v804
        %v880 = vunpack.c.h.b16 %v804
        %v881 = vunpack.c.l.b16 %v805
        %v882 = vunpack.c.h.b16 %v805
        %v883 = vunpack.c.l.b16 %v806
        %v884 = vunpack.c.h.b16 %v806
        %v885 = vunpack.c.l.b16 %v807
        %v886 = vunpack.c.h.b16 %v807
        %v887 = vunpack.c.l.b16 %v808
        %v888 = vunpack.c.h.b16 %v808
        %v889 = vunpack.c.l.b16 %v809
        %v890 = vunpack.c.h.b16 %v809
        %v891 = vunpack.c.l.b16 %v810
        %v892 = vunpack.c.h.b16 %v810
        %v893 = vunpack.c.l.b16 %v811
        %v894 = vunpack.c.h.b16 %v811
        %v895 = vunpack.c.l.b16 %v812
        %v896 = vunpack.c.h.b16 %v812
        %v897 = vunpack.c.l.b16 %v813
        %v898 = vunpack.c.h.b16 %v813
        %v899 = vunpack.c.l.b16 %v814
        %v900 = vunpack.c.h.b16 %v814
        %v901 = vunpack.c.l.b16 %v815
        %v902 = vunpack.c.h.b16 %v815
        %v903 = vunpack.c.l.b16 %v816
        %v904 = vunpack.c.h.b16 %v816
        %v905 = vunpack.c.l.b16 %v817
        %v906 = vunpack.c.h.b16 %v817
        %v907 = vunpack.c.l.b16 %v818
        %v908 = vunpack.c.h.b16 %v818
        %v909 = vunpack.c.l.b16 %v819
        %v910 = vunpack.c.h.b16 %v819
        %v911 = vunpack.c.l.b16 %v820
        %v912 = vunpack.c.h.b16 %v820
        %v913 = vunpack.c.l.b16 %v821
        %v914 = vunpack.c.h.b16 %v821
        %v915 = vunpack.c.l.b16 %v822
        %v916 = vunpack.c.h.b16 %v822
        %v917 = vunpack.c.l.b16 %v823
        %v918 = vunpack.c.h.b16 %v823
        %v919 = vunpack.c.l.b16 %v824
        %v920 = vunpack.c.h.b16 %v824
        %v921 = vunpack.c.l.b16 %v825
        %v922 = vunpack.c.h.b16 %v825
        %v923 = vunpack.c.l.b16 %v826
        %v924 = vunpack.c.h.b16 %v826
        %v925 = vunpack.c.l.b16 %v827
        %v926 = vunpack.c.h.b16 %v827
        %v927 = vunpack.c.l.b16 %v828
        %v928 = vunpack.c.h.b16 %v828
        %v929 = vunpack.c.l.b16 %v829
        %v930 = vunpack.c.h.b16 %v829
        %v931 = vunpack.c.l.b16 %v830
        %v932 = vunpack.c.h.b16 %v830
        %v933 = vunpack.c.l.b16 %v831
        %v934 = vunpack.c.h.b16 %v831
        %v935 = vunpack.c.l.b16 %v832
        %v936 = vunpack.c.h.b16 %v832
        %v937 = vunpack.c.l.b16 %v833
        %v938 = vunpack.c.h.b16 %v833
        %v939 = vunpack.c.l.b16 %v834
        %v940 = vunpack.c.h.b16 %v834
        %v941 = vpack.c.b16 %v881, %v877
        %v942 = vpack.c.b16 %v882, %v878
        %v943 = vpack.c.b16 %v883, %v879
        %v944 = vpack.c.b16 %v884, %v880
        %v945 = vpack.c.b16 %v889, %v885
        %v946 = vpack.c.b16 %v890, %v886
        %v947 = vpack.c.b16 %v891, %v887
        %v948 = vpack.c.b16 %v892, %v888
        %v949 = vpack.c.b16 %v897, %v893
        %v950 = vpack.c.b16 %v898, %v894
        %v951 = vpack.c.b16 %v899, %v895
        %v952 = vpack.c.b16 %v900, %v896
        %v953 = vpack.c.b16 %v905, %v901
        %v954 = vpack.c.b16 %v906, %v902
        %v955 = vpack.c.b16 %v907, %v903
        %v956 = vpack.c.b16 %v908, %v904
        %v957 = vpack.c.b16 %v913, %v909
        %v958 = vpack.c.b16 %v914, %v910
        %v959 = vpack.c.b16 %v915, %v911
        %v960 = vpack.c.b16 %v916, %v912
        %v961 = vpack.c.b16 %v921, %v917
        %v962 = vpack.c.b16 %v922, %v918
        %v963 = vpack.c.b16 %v923, %v919
        %v964 = vpack.c.b16 %v924, %v920
        %v965 = vpack.c.b16 %v929, %v925
        %v966 = vpack.c.b16 %v930, %v926
        %v967 = vpack.c.b16 %v931, %v927
        %v968 = vpack.c.b16 %v932, %v928
        %v969 = vpack.c.b16 %v937, %v933
        %v970 = vpack.c.b16 %v938, %v934
        %v971 = vpack.c.b16 %v939, %v935
        %v972 = vpack.c.b16 %v940, %v936
        %1005 = vmatpush.bf16.msra.mxu0 %v969
        %1006 = vmatpush.bf16.msra.mxu0 %v965
        %1007 = vmatpush.bf16.msra.mxu0 %v961
        %1008 = vmatpush.bf16.msra.mxu0 %v957
        %1009 = vmatpush.bf16.msra.mxu0 %v953
        %1010 = vmatpush.bf16.msra.mxu0 %v949
        %1011 = vmatpush.bf16.msra.mxu0 %v945
        %1012 = vmatpush.bf16.msra.mxu0 %v941
        %1013 = vmatmul.bf16.gmra.mxu0 %v801
        %v1014 = vpop.f32.mrf.mxu0
        %v1015 = vadd.f32 %v837, %v1014
        %v1016 = vpop.f32.mrf.mxu0
        %1017 = vdwg.mxu0
        %1018 = vmatpush.bf16.msra.mxu0 %v970
        %1019 = vmatpush.bf16.msra.mxu0 %v966
        %1020 = vmatpush.bf16.msra.mxu0 %v962
        %1021 = vmatpush.bf16.msra.mxu0 %v958
        %1022 = vmatpush.bf16.msra.mxu0 %v954
        %1023 = vmatpush.bf16.msra.mxu0 %v950
        %1024 = vmatpush.bf16.msra.mxu0 %v946
        %1025 = vmatpush.bf16.msra.mxu0 %v942
        %1026 = vmatmul.bf16.gmra.mxu0 %v801
        %v1027 = vpop.f32.mrf.mxu0
        %v1028 = vadd.f32 %v838, %v1027
        %v1029 = vpop.f32.mrf.mxu0
        %1030 = vdwg.mxu0
        %1031 = vmatpush.bf16.msra.mxu0 %v971
        %1032 = vmatpush.bf16.msra.mxu0 %v967
        %1033 = vmatpush.bf16.msra.mxu0 %v963
        %1034 = vmatpush.bf16.msra.mxu0 %v959
        %1035 = vmatpush.bf16.msra.mxu0 %v955
        %1036 = vmatpush.bf16.msra.mxu0 %v951
        %1037 = vmatpush.bf16.msra.mxu0 %v947
        %1038 = vmatpush.bf16.msra.mxu0 %v943
        %1039 = vmatmul.bf16.gmra.mxu0 %v801
        %v1040 = vpop.f32.mrf.mxu0
        %v1041 = vadd.f32 %v839, %v1040
        %v1042 = vpop.f32.mrf.mxu0
        %1043 = vdwg.mxu0
        %1044 = vmatpush.bf16.msra.mxu0 %v972
        %1045 = vmatpush.bf16.msra.mxu0 %v968
        %1046 = vmatpush.bf16.msra.mxu0 %v964
        %1047 = vmatpush.bf16.msra.mxu0 %v960
        %1048 = vmatpush.bf16.msra.mxu0 %v956
        %1049 = vmatpush.bf16.msra.mxu0 %v952
        %1050 = vmatpush.bf16.msra.mxu0 %v948
        %1051 = vmatpush.bf16.msra.mxu0 %v944
        %1052 = vmatmul.bf16.gmra.mxu0 %v801
        %v1053 = vpop.f32.mrf.mxu0
        %v1054 = vadd.f32 %v840, %v1053
        %v1055 = vpop.f32.mrf.mxu0
        %1056 = vdwg.mxu0
        %v1057 = vld [vmem:[#allocation8] sm:$0xff]
        %v1058 = vld [vmem:[#allocation8 + $0x8] sm:$0xff]
        %v1059 = vld [vmem:[#allocation8 + $0x10] sm:$0xff]
        %v1060 = vld [vmem:[#allocation8 + $0x18] sm:$0xff]
        %v1061 = vld [vmem:[#allocation8 + $0x20] sm:$0xff]
        %v1062 = vld [vmem:[#allocation8 + $0x28] sm:$0xff]
        %v1063 = vld [vmem:[#allocation8 + $0x30] sm:$0xff]
        %v1064 = vld [vmem:[#allocation8 + $0x38] sm:$0xff]
        %v1065 = vld [vmem:[#allocation8 + $0x40] sm:$0xff]
        %v1066 = vld [vmem:[#allocation8 + $0x48] sm:$0xff]
        %v1067 = vld [vmem:[#allocation8 + $0x50] sm:$0xff]
        %v1068 = vld [vmem:[#allocation8 + $0x58] sm:$0xff]
        %v1069 = vld [vmem:[#allocation8 + $0x60] sm:$0xff]
        %v1070 = vld [vmem:[#allocation8 + $0x68] sm:$0xff]
        %v1071 = vld [vmem:[#allocation8 + $0x70] sm:$0xff]
        %v1072 = vld [vmem:[#allocation8 + $0x78] sm:$0xff]
        %v1073 = vld [vmem:[#allocation8 + $0x80] sm:$0xff]
        %v1074 = vld [vmem:[#allocation8 + $0x88] sm:$0xff]
        %v1075 = vld [vmem:[#allocation8 + $0x90] sm:$0xff]
        %v1076 = vld [vmem:[#allocation8 + $0x98] sm:$0xff]
        %v1077 = vld [vmem:[#allocation8 + $0xa0] sm:$0xff]
        %v1078 = vld [vmem:[#allocation8 + $0xa8] sm:$0xff]
        %v1079 = vld [vmem:[#allocation8 + $0xb0] sm:$0xff]
        %v1080 = vld [vmem:[#allocation8 + $0xb8] sm:$0xff]
        %v1081 = vld [vmem:[#allocation8 + $0xc0] sm:$0xff]
        %v1082 = vld [vmem:[#allocation8 + $0xc8] sm:$0xff]
        %v1083 = vld [vmem:[#allocation8 + $0xd0] sm:$0xff]
        %v1084 = vld [vmem:[#allocation8 + $0xd8] sm:$0xff]
        %v1085 = vld [vmem:[#allocation8 + $0xe0] sm:$0xff]
        %v1086 = vld [vmem:[#allocation8 + $0xe8] sm:$0xff]
        %v1087 = vld [vmem:[#allocation8 + $0xf0] sm:$0xff]
        %v1088 = vld [vmem:[#allocation8 + $0xf8] sm:$0xff]
        %v1089 = vld [vmem:[#allocation11] sm:$0xf]
        %v1091 = vperm.slane %v1089, 0
        %v1092 = vperm.slane %v1089, 1
        %v1093 = vperm.slane %v1089, 2
        %v1094 = vperm.slane %v1089, 3
        %v1131 = vunpack.c.l.b16 %v1057
        %v1132 = vunpack.c.h.b16 %v1057
        %v1133 = vunpack.c.l.b16 %v1058
        %v1134 = vunpack.c.h.b16 %v1058
        %v1135 = vunpack.c.l.b16 %v1059
        %v1136 = vunpack.c.h.b16 %v1059
        %v1137 = vunpack.c.l.b16 %v1060
        %v1138 = vunpack.c.h.b16 %v1060
        %v1139 = vunpack.c.l.b16 %v1061
        %v1140 = vunpack.c.h.b16 %v1061
        %v1141 = vunpack.c.l.b16 %v1062
        %v1142 = vunpack.c.h.b16 %v1062
        %v1143 = vunpack.c.l.b16 %v1063
        %v1144 = vunpack.c.h.b16 %v1063
        %v1145 = vunpack.c.l.b16 %v1064
        %v1146 = vunpack.c.h.b16 %v1064
        %v1147 = vunpack.c.l.b16 %v1065
        %v1148 = vunpack.c.h.b16 %v1065
        %v1149 = vunpack.c.l.b16 %v1066
        %v1150 = vunpack.c.h.b16 %v1066
        %v1151 = vunpack.c.l.b16 %v1067
        %v1152 = vunpack.c.h.b16 %v1067
        %v1153 = vunpack.c.l.b16 %v1068
        %v1154 = vunpack.c.h.b16 %v1068
        %v1155 = vunpack.c.l.b16 %v1069
        %v1156 = vunpack.c.h.b16 %v1069
        %v1157 = vunpack.c.l.b16 %v1070
        %v1158 = vunpack.c.h.b16 %v1070
        %v1159 = vunpack.c.l.b16 %v1071
        %v1160 = vunpack.c.h.b16 %v1071
        %v1161 = vunpack.c.l.b16 %v1072
        %v1162 = vunpack.c.h.b16 %v1072
        %v1163 = vunpack.c.l.b16 %v1073
        %v1164 = vunpack.c.h.b16 %v1073
        %v1165 = vunpack.c.l.b16 %v1074
        %v1166 = vunpack.c.h.b16 %v1074
        %v1167 = vunpack.c.l.b16 %v1075
        %v1168 = vunpack.c.h.b16 %v1075
        %v1169 = vunpack.c.l.b16 %v1076
        %v1170 = vunpack.c.h.b16 %v1076
        %v1171 = vunpack.c.l.b16 %v1077
        %v1172 = vunpack.c.h.b16 %v1077
        %v1173 = vunpack.c.l.b16 %v1078
        %v1174 = vunpack.c.h.b16 %v1078
        %v1175 = vunpack.c.l.b16 %v1079
        %v1176 = vunpack.c.h.b16 %v1079
        %v1177 = vunpack.c.l.b16 %v1080
        %v1178 = vunpack.c.h.b16 %v1080
        %v1179 = vunpack.c.l.b16 %v1081
        %v1180 = vunpack.c.h.b16 %v1081
        %v1181 = vunpack.c.l.b16 %v1082
        %v1182 = vunpack.c.h.b16 %v1082
        %v1183 = vunpack.c.l.b16 %v1083
        %v1184 = vunpack.c.h.b16 %v1083
        %v1185 = vunpack.c.l.b16 %v1084
        %v1186 = vunpack.c.h.b16 %v1084
        %v1187 = vunpack.c.l.b16 %v1085
        %v1188 = vunpack.c.h.b16 %v1085
        %v1189 = vunpack.c.l.b16 %v1086
        %v1190 = vunpack.c.h.b16 %v1086
        %v1191 = vunpack.c.l.b16 %v1087
        %v1192 = vunpack.c.h.b16 %v1087
        %v1193 = vunpack.c.l.b16 %v1088
        %v1194 = vunpack.c.h.b16 %v1088
        %v1195 = vpack.c.b16 %v1135, %v1131
        %v1196 = vpack.c.b16 %v1136, %v1132
        %v1197 = vpack.c.b16 %v1137, %v1133
        %v1198 = vpack.c.b16 %v1138, %v1134
        %v1199 = vpack.c.b16 %v1143, %v1139
        %v1200 = vpack.c.b16 %v1144, %v1140
        %v1201 = vpack.c.b16 %v1145, %v1141
        %v1202 = vpack.c.b16 %v1146, %v1142
        %v1203 = vpack.c.b16 %v1151, %v1147
        %v1204 = vpack.c.b16 %v1152, %v1148
        %v1205 = vpack.c.b16 %v1153, %v1149
        %v1206 = vpack.c.b16 %v1154, %v1150
        %v1207 = vpack.c.b16 %v1159, %v1155
        %v1208 = vpack.c.b16 %v1160, %v1156
        %v1209 = vpack.c.b16 %v1161, %v1157
        %v1210 = vpack.c.b16 %v1162, %v1158
        %v1211 = vpack.c.b16 %v1167, %v1163
        %v1212 = vpack.c.b16 %v1168, %v1164
        %v1213 = vpack.c.b16 %v1169, %v1165
        %v1214 = vpack.c.b16 %v1170, %v1166
        %v1215 = vpack.c.b16 %v1175, %v1171
        %v1216 = vpack.c.b16 %v1176, %v1172
        %v1217 = vpack.c.b16 %v1177, %v1173
        %v1218 = vpack.c.b16 %v1178, %v1174
        %v1219 = vpack.c.b16 %v1183, %v1179
        %v1220 = vpack.c.b16 %v1184, %v1180
        %v1221 = vpack.c.b16 %v1185, %v1181
        %v1222 = vpack.c.b16 %v1186, %v1182
        %v1223 = vpack.c.b16 %v1191, %v1187
        %v1224 = vpack.c.b16 %v1192, %v1188
        %v1225 = vpack.c.b16 %v1193, %v1189
        %v1226 = vpack.c.b16 %v1194, %v1190
        %1259 = vmatpush.bf16.msra.mxu0 %v1223
        %1260 = vmatpush.bf16.msra.mxu0 %v1219
        %1261 = vmatpush.bf16.msra.mxu0 %v1215
        %1262 = vmatpush.bf16.msra.mxu0 %v1211
        %1263 = vmatpush.bf16.msra.mxu0 %v1207
        %1264 = vmatpush.bf16.msra.mxu0 %v1203
        %1265 = vmatpush.bf16.msra.mxu0 %v1199
        %1266 = vmatpush.bf16.msra.mxu0 %v1195
        %1267 = vmatmul.bf16.gmra.mxu0 %v801
        %v1268 = vpop.f32.mrf.mxu0
        %v1269 = vadd.f32 %v1091, %v1268
        %v1270 = vpop.f32.mrf.mxu0
        %1271 = vdwg.mxu0
        %1272 = vmatpush.bf16.msra.mxu0 %v1224
        %1273 = vmatpush.bf16.msra.mxu0 %v1220
        %1274 = vmatpush.bf16.msra.mxu0 %v1216
        %1275 = vmatpush.bf16.msra.mxu0 %v1212
        %1276 = vmatpush.bf16.msra.mxu0 %v1208
        %1277 = vmatpush.bf16.msra.mxu0 %v1204
        %1278 = vmatpush.bf16.msra.mxu0 %v1200
        %1279 = vmatpush.bf16.msra.mxu0 %v1196
        %1280 = vmatmul.bf16.gmra.mxu0 %v801
        %v1281 = vpop.f32.mrf.mxu0
        %v1282 = vadd.f32 %v1092, %v1281
        %v1283 = vpop.f32.mrf.mxu0
        %1284 = vdwg.mxu0
        %1285 = vmatpush.bf16.msra.mxu0 %v1225
        %1286 = vmatpush.bf16.msra.mxu0 %v1221
        %1287 = vmatpush.bf16.msra.mxu0 %v1217
        %1288 = vmatpush.bf16.msra.mxu0 %v1213
        %1289 = vmatpush.bf16.msra.mxu0 %v1209
        %1290 = vmatpush.bf16.msra.mxu0 %v1205
        %1291 = vmatpush.bf16.msra.mxu0 %v1201
        %1292 = vmatpush.bf16.msra.mxu0 %v1197
        %1293 = vmatmul.bf16.gmra.mxu0 %v801
        %v1294 = vpop.f32.mrf.mxu0
        %v1295 = vadd.f32 %v1093, %v1294
        %v1296 = vpop.f32.mrf.mxu0
        %1297 = vdwg.mxu0
        %1298 = vmatpush.bf16.msra.mxu0 %v1226
        %1299 = vmatpush.bf16.msra.mxu0 %v1222
        %1300 = vmatpush.bf16.msra.mxu0 %v1218
        %1301 = vmatpush.bf16.msra.mxu0 %v1214
        %1302 = vmatpush.bf16.msra.mxu0 %v1210
        %1303 = vmatpush.bf16.msra.mxu0 %v1206
        %1304 = vmatpush.bf16.msra.mxu0 %v1202
        %1305 = vmatpush.bf16.msra.mxu0 %v1198
        %1306 = vmatmul.bf16.gmra.mxu0 %v801
        %v1307 = vpop.f32.mrf.mxu0
        %v1308 = vadd.f32 %v1094, %v1307
        %v1309 = vpop.f32.mrf.mxu0
        %1310 = vdwg.mxu0
        %v1311 = vld [vmem:[#allocation10] sm:$0xff]
        %v1312 = vld [vmem:[#allocation10 + $0x8] sm:$0xff]
        %v1313 = vld [vmem:[#allocation10 + $0x10] sm:$0xff]
        %v1314 = vld [vmem:[#allocation10 + $0x18] sm:$0xff]
        %v1315 = vld [vmem:[#allocation10 + $0x20] sm:$0xff]
        %v1316 = vld [vmem:[#allocation10 + $0x28] sm:$0xff]
        %v1317 = vld [vmem:[#allocation10 + $0x30] sm:$0xff]
        %v1318 = vld [vmem:[#allocation10 + $0x38] sm:$0xff]
        %v1319 = vld [vmem:[#allocation10 + $0x40] sm:$0xff]
        %v1320 = vld [vmem:[#allocation10 + $0x48] sm:$0xff]
        %v1321 = vld [vmem:[#allocation10 + $0x50] sm:$0xff]
        %v1322 = vld [vmem:[#allocation10 + $0x58] sm:$0xff]
        %v1323 = vld [vmem:[#allocation10 + $0x60] sm:$0xff]
        %v1324 = vld [vmem:[#allocation10 + $0x68] sm:$0xff]
        %v1325 = vld [vmem:[#allocation10 + $0x70] sm:$0xff]
        %v1326 = vld [vmem:[#allocation10 + $0x78] sm:$0xff]
        %v1327 = vld [vmem:[#allocation10 + $0x80] sm:$0xff]
        %v1328 = vld [vmem:[#allocation10 + $0x88] sm:$0xff]
        %v1329 = vld [vmem:[#allocation10 + $0x90] sm:$0xff]
        %v1330 = vld [vmem:[#allocation10 + $0x98] sm:$0xff]
        %v1331 = vld [vmem:[#allocation10 + $0xa0] sm:$0xff]
        %v1332 = vld [vmem:[#allocation10 + $0xa8] sm:$0xff]
        %v1333 = vld [vmem:[#allocation10 + $0xb0] sm:$0xff]
        %v1334 = vld [vmem:[#allocation10 + $0xb8] sm:$0xff]
        %v1335 = vld [vmem:[#allocation10 + $0xc0] sm:$0xff]
        %v1336 = vld [vmem:[#allocation10 + $0xc8] sm:$0xff]
        %v1337 = vld [vmem:[#allocation10 + $0xd0] sm:$0xff]
        %v1338 = vld [vmem:[#allocation10 + $0xd8] sm:$0xff]
        %v1339 = vld [vmem:[#allocation10 + $0xe0] sm:$0xff]
        %v1340 = vld [vmem:[#allocation10 + $0xe8] sm:$0xff]
        %v1341 = vld [vmem:[#allocation10 + $0xf0] sm:$0xff]
        %v1342 = vld [vmem:[#allocation10 + $0xf8] sm:$0xff]
        %v1343 = vld [vmem:[#allocation13] sm:$0xf]
        %v1345 = vperm.slane %v1343, 0
        %v1346 = vperm.slane %v1343, 1
        %v1347 = vperm.slane %v1343, 2
        %v1348 = vperm.slane %v1343, 3
        %v1385 = vunpack.c.l.b16 %v1311
        %v1386 = vunpack.c.h.b16 %v1311
        %v1387 = vunpack.c.l.b16 %v1312
        %v1388 = vunpack.c.h.b16 %v1312
        %v1389 = vunpack.c.l.b16 %v1313
        %v1390 = vunpack.c.h.b16 %v1313
        %v1391 = vunpack.c.l.b16 %v1314
        %v1392 = vunpack.c.h.b16 %v1314
        %v1393 = vunpack.c.l.b16 %v1315
        %v1394 = vunpack.c.h.b16 %v1315
        %v1395 = vunpack.c.l.b16 %v1316
        %v1396 = vunpack.c.h.b16 %v1316
        %v1397 = vunpack.c.l.b16 %v1317
        %v1398 = vunpack.c.h.b16 %v1317
        %v1399 = vunpack.c.l.b16 %v1318
        %v1400 = vunpack.c.h.b16 %v1318
        %v1401 = vunpack.c.l.b16 %v1319
        %v1402 = vunpack.c.h.b16 %v1319
        %v1403 = vunpack.c.l.b16 %v1320
        %v1404 = vunpack.c.h.b16 %v1320
        %v1405 = vunpack.c.l.b16 %v1321
        %v1406 = vunpack.c.h.b16 %v1321
        %v1407 = vunpack.c.l.b16 %v1322
        %v1408 = vunpack.c.h.b16 %v1322
        %v1409 = vunpack.c.l.b16 %v1323
        %v1410 = vunpack.c.h.b16 %v1323
        %v1411 = vunpack.c.l.b16 %v1324
        %v1412 = vunpack.c.h.b16 %v1324
        %v1413 = vunpack.c.l.b16 %v1325
        %v1414 = vunpack.c.h.b16 %v1325
        %v1415 = vunpack.c.l.b16 %v1326
        %v1416 = vunpack.c.h.b16 %v1326
        %v1417 = vunpack.c.l.b16 %v1327
        %v1418 = vunpack.c.h.b16 %v1327
        %v1419 = vunpack.c.l.b16 %v1328
        %v1420 = vunpack.c.h.b16 %v1328
        %v1421 = vunpack.c.l.b16 %v1329
        %v1422 = vunpack.c.h.b16 %v1329
        %v1423 = vunpack.c.l.b16 %v1330
        %v1424 = vunpack.c.h.b16 %v1330
        %v1425 = vunpack.c.l.b16 %v1331
        %v1426 = vunpack.c.h.b16 %v1331
        %v1427 = vunpack.c.l.b16 %v1332
        %v1428 = vunpack.c.h.b16 %v1332
        %v1429 = vunpack.c.l.b16 %v1333
        %v1430 = vunpack.c.h.b16 %v1333
        %v1431 = vunpack.c.l.b16 %v1334
        %v1432 = vunpack.c.h.b16 %v1334
        %v1433 = vunpack.c.l.b16 %v1335
        %v1434 = vunpack.c.h.b16 %v1335
        %v1435 = vunpack.c.l.b16 %v1336
        %v1436 = vunpack.c.h.b16 %v1336
        %v1437 = vunpack.c.l.b16 %v1337
        %v1438 = vunpack.c.h.b16 %v1337
        %v1439 = vunpack.c.l.b16 %v1338
        %v1440 = vunpack.c.h.b16 %v1338
        %v1441 = vunpack.c.l.b16 %v1339
        %v1442 = vunpack.c.h.b16 %v1339
        %v1443 = vunpack.c.l.b16 %v1340
        %v1444 = vunpack.c.h.b16 %v1340
        %v1445 = vunpack.c.l.b16 %v1341
        %v1446 = vunpack.c.h.b16 %v1341
        %v1447 = vunpack.c.l.b16 %v1342
        %v1448 = vunpack.c.h.b16 %v1342
        %v1449 = vpack.c.b16 %v1389, %v1385
        %v1450 = vpack.c.b16 %v1390, %v1386
        %v1451 = vpack.c.b16 %v1391, %v1387
        %v1452 = vpack.c.b16 %v1392, %v1388
        %v1453 = vpack.c.b16 %v1397, %v1393
        %v1454 = vpack.c.b16 %v1398, %v1394
        %v1455 = vpack.c.b16 %v1399, %v1395
        %v1456 = vpack.c.b16 %v1400, %v1396
        %v1457 = vpack.c.b16 %v1405, %v1401
        %v1458 = vpack.c.b16 %v1406, %v1402
        %v1459 = vpack.c.b16 %v1407, %v1403
        %v1460 = vpack.c.b16 %v1408, %v1404
        %v1461 = vpack.c.b16 %v1413, %v1409
        %v1462 = vpack.c.b16 %v1414, %v1410
        %v1463 = vpack.c.b16 %v1415, %v1411
        %v1464 = vpack.c.b16 %v1416, %v1412
        %v1465 = vpack.c.b16 %v1421, %v1417
        %v1466 = vpack.c.b16 %v1422, %v1418
        %v1467 = vpack.c.b16 %v1423, %v1419
        %v1468 = vpack.c.b16 %v1424, %v1420
        %v1469 = vpack.c.b16 %v1429, %v1425
        %v1470 = vpack.c.b16 %v1430, %v1426
        %v1471 = vpack.c.b16 %v1431, %v1427
        %v1472 = vpack.c.b16 %v1432, %v1428
        %v1473 = vpack.c.b16 %v1437, %v1433
        %v1474 = vpack.c.b16 %v1438, %v1434
        %v1475 = vpack.c.b16 %v1439, %v1435
        %v1476 = vpack.c.b16 %v1440, %v1436
        %v1477 = vpack.c.b16 %v1445, %v1441
        %v1478 = vpack.c.b16 %v1446, %v1442
        %v1479 = vpack.c.b16 %v1447, %v1443
        %v1480 = vpack.c.b16 %v1448, %v1444
        %1513 = vmatpush.bf16.msra.mxu0 %v1477
        %1514 = vmatpush.bf16.msra.mxu0 %v1473
        %1515 = vmatpush.bf16.msra.mxu0 %v1469
        %1516 = vmatpush.bf16.msra.mxu0 %v1465
        %1517 = vmatpush.bf16.msra.mxu0 %v1461
        %1518 = vmatpush.bf16.msra.mxu0 %v1457
        %1519 = vmatpush.bf16.msra.mxu0 %v1453
        %1520 = vmatpush.bf16.msra.mxu0 %v1449
        %1521 = vmatmul.bf16.gmra.mxu0 %v801
        %v1522 = vpop.f32.mrf.mxu0
        %v1523 = vadd.f32 %v1345, %v1522
        %v1524 = vpop.f32.mrf.mxu0
        %1525 = vdwg.mxu0
        %1526 = vmatpush.bf16.msra.mxu0 %v1478
        %1527 = vmatpush.bf16.msra.mxu0 %v1474
        %1528 = vmatpush.bf16.msra.mxu0 %v1470
        %1529 = vmatpush.bf16.msra.mxu0 %v1466
        %1530 = vmatpush.bf16.msra.mxu0 %v1462
        %1531 = vmatpush.bf16.msra.mxu0 %v1458
        %1532 = vmatpush.bf16.msra.mxu0 %v1454
        %1533 = vmatpush.bf16.msra.mxu0 %v1450
        %1534 = vmatmul.bf16.gmra.mxu0 %v801
        %v1535 = vpop.f32.mrf.mxu0
        %v1536 = vadd.f32 %v1346, %v1535
        %v1537 = vpop.f32.mrf.mxu0
        %1538 = vdwg.mxu0
        %1539 = vmatpush.bf16.msra.mxu0 %v1479
        %1540 = vmatpush.bf16.msra.mxu0 %v1475
        %1541 = vmatpush.bf16.msra.mxu0 %v1471
        %1542 = vmatpush.bf16.msra.mxu0 %v1467
        %1543 = vmatpush.bf16.msra.mxu0 %v1463
        %1544 = vmatpush.bf16.msra.mxu0 %v1459
        %1545 = vmatpush.bf16.msra.mxu0 %v1455
        %1546 = vmatpush.bf16.msra.mxu0 %v1451
        %1547 = vmatmul.bf16.gmra.mxu0 %v801
        %v1548 = vpop.f32.mrf.mxu0
        %v1549 = vadd.f32 %v1347, %v1548
        %v1550 = vpop.f32.mrf.mxu0
        %1551 = vdwg.mxu0
        %1552 = vmatpush.bf16.msra.mxu0 %v1480
        %1553 = vmatpush.bf16.msra.mxu0 %v1476
        %1554 = vmatpush.bf16.msra.mxu0 %v1472
        %1555 = vmatpush.bf16.msra.mxu0 %v1468
        %1556 = vmatpush.bf16.msra.mxu0 %v1464
        %1557 = vmatpush.bf16.msra.mxu0 %v1460
        %1558 = vmatpush.bf16.msra.mxu0 %v1456
        %1559 = vmatpush.bf16.msra.mxu0 %v1452
        %1560 = vmatmul.bf16.gmra.mxu0 %v801
        %v1561 = vpop.f32.mrf.mxu0
        %v1562 = vadd.f32 %v1348, %v1561
        %v1563 = vpop.f32.mrf.mxu0
        %1564 = vdwg.mxu0
        %v1565 = vpack.c.bf16 %v1028, %v1015
        %v1566 = vpack.c.bf16 %v1054, %v1041
        %v1568 = vrot.slane %v1565, 4
        %v1570 = vrot.slane %v1566, 4
        %v1573 = vpack.i.b16 %v1568, %v1565
        %v1574 = vshrl.u32 %v1565, 16
        %v1575 = vshrl.u32 %v1568, 16
        %v1576 = vpack.i.b16 %v1575, %v1574
        %v1579 = vpack.i.b16 %v1570, %v1566
        %v1580 = vshrl.u32 %v1566, 16
        %v1581 = vshrl.u32 %v1570, 16
        %v1582 = vpack.i.b16 %v1581, %v1580
        %v1585 = vunpack.c.l.s4 1983009808
        %v1586 = vunpack.c.0.s8 %v1585
        %v1587 = vperm.slane %v1573, %v1586
        %v1590 = vunpack.c.l.s4 1983009808
        %v1591 = vunpack.c.0.s8 %v1590
        %v1592 = vperm.slane %v1579, %v1591
        %v1593 = vrot.slane %v1592, 4
        %vm1594 = vcmask 1047556
        %v1595 = vsel %vm1594, %v1593, %v1587
        %v1596 = vrot.slane %v1587, 4
        %v1597 = vsel %vm1594, %v1592, %v1596
        %v1599 = vunpack.c.l.s4 1934713408
        %v1600 = vunpack.c.0.s8 %v1599
        %v1601 = vperm.slane %v1595, %v1600
        %v1603 = vunpack.c.l.s4 1934713408
        %v1604 = vunpack.c.0.s8 %v1603
        %v1605 = vperm.slane %v1597, %v1604
        %v1606 = vrot.slane %v1601, 4
        %v1607 = vsel %vm1594, 0, %v1606
        %v1608 = vrot.slane %v1605, 4
        %v1609 = vsel %vm1594, 0, %v1608
        %v1612 = vunpack.c.l.s4 1983009808
        %v1613 = vunpack.c.0.s8 %v1612
        %v1614 = vperm.slane %v1576, %v1613
        %v1617 = vunpack.c.l.s4 1983009808
        %v1618 = vunpack.c.0.s8 %v1617
        %v1619 = vperm.slane %v1582, %v1618
        %v1620 = vrot.slane %v1619, 4
        %v1621 = vsel %vm1594, %v1620, %v1614
        %v1622 = vrot.slane %v1614, 4
        %v1623 = vsel %vm1594, %v1619, %v1622
        %v1625 = vunpack.c.l.s4 1934713408
        %v1626 = vunpack.c.0.s8 %v1625
        %v1627 = vperm.slane %v1621, %v1626
        %v1629 = vunpack.c.l.s4 1934713408
        %v1630 = vunpack.c.0.s8 %v1629
        %v1631 = vperm.slane %v1623, %v1630
        %v1632 = vrot.slane %v1627, 4
        %v1633 = vsel %vm1594, 0, %v1632
        %v1634 = vrot.slane %v1631, 4
        %v1635 = vsel %vm1594, 0, %v1634
        %v1636 = vsel %vm1594, %v1608, %v1601
        %v1638 = vunpack.c.l.s4 1983009808
        %v1639 = vunpack.c.0.s8 %v1638
        %v1640 = vperm.slane %v1636, %v1639
        %v1641 = vrot.slane %v1609, 4
        %v1642 = vsel %vm1594, %v1641, %v1607
        %v1644 = vunpack.c.l.s4 1983009808
        %v1645 = vunpack.c.0.s8 %v1644
        %v1646 = vperm.slane %v1642, %v1645
        %v1647 = vrot.slane %v1646, 4
        %v1648 = vsel %vm1594, %v1647, %v1640
        %v1650 = vunpack.c.l.s4 1934713408
        %v1651 = vunpack.c.0.s8 %v1650
        %v1652 = vperm.slane %v1648, %v1651
        %v1653 = vrot.slane %v1652, 4
        %v1654 = vsel %vm1594, 0, %v1653
        %v1655 = vsel %vm1594, %v1634, %v1627
        %v1657 = vunpack.c.l.s4 1983009808
        %v1658 = vunpack.c.0.s8 %v1657
        %v1659 = vperm.slane %v1655, %v1658
        %v1660 = vrot.slane %v1635, 4
        %v1661 = vsel %vm1594, %v1660, %v1633
        %v1663 = vunpack.c.l.s4 1983009808
        %v1664 = vunpack.c.0.s8 %v1663
        %v1665 = vperm.slane %v1661, %v1664
        %v1666 = vrot.slane %v1665, 4
        %v1667 = vsel %vm1594, %v1666, %v1659
        %v1669 = vunpack.c.l.s4 1934713408
        %v1670 = vunpack.c.0.s8 %v1669
        %v1671 = vperm.slane %v1667, %v1670
        %v1672 = vrot.slane %v1671, 4
        %v1673 = vsel %vm1594, 0, %v1672
        %v1676 = vpack.i.b16 %v1671, %v1652
        %v1678 = vshrl.u32 %v1652, 16
        %v1679 = vshrl.u32 %v1671, 16
        %v1680 = vpack.i.b16 %v1679, %v1678
        %v1684 = vpack.i.b16 %v1673, %v1654
        %v1686 = vshrl.u32 %v1654, 16
        %v1687 = vshrl.u32 %v1673, 16
        %v1688 = vpack.i.b16 %v1687, %v1686
        %v1690 = vpack.c.bf16 %v1282, %v1269
        %v1691 = vpack.c.bf16 %v1308, %v1295
        %v1693 = vrot.slane %v1690, 4
        %v1695 = vrot.slane %v1691, 4
        %v1698 = vpack.i.b16 %v1693, %v1690
        %v1699 = vshrl.u32 %v1690, 16
        %v1700 = vshrl.u32 %v1693, 16
        %v1701 = vpack.i.b16 %v1700, %v1699
        %v1704 = vpack.i.b16 %v1695, %v1691
        %v1705 = vshrl.u32 %v1691, 16
        %v1706 = vshrl.u32 %v1695, 16
        %v1707 = vpack.i.b16 %v1706, %v1705
        %v1710 = vunpack.c.l.s4 1983009808
        %v1711 = vunpack.c.0.s8 %v1710
        %v1712 = vperm.slane %v1698, %v1711
        %v1715 = vunpack.c.l.s4 1983009808
        %v1716 = vunpack.c.0.s8 %v1715
        %v1717 = vperm.slane %v1704, %v1716
        %v1718 = vrot.slane %v1717, 4
        %v1719 = vsel %vm1594, %v1718, %v1712
        %v1720 = vrot.slane %v1712, 4
        %v1721 = vsel %vm1594, %v1717, %v1720
        %v1723 = vunpack.c.l.s4 1934713408
        %v1724 = vunpack.c.0.s8 %v1723
        %v1725 = vperm.slane %v1719, %v1724
        %v1727 = vunpack.c.l.s4 1934713408
        %v1728 = vunpack.c.0.s8 %v1727
        %v1729 = vperm.slane %v1721, %v1728
        %v1730 = vrot.slane %v1725, 4
        %v1731 = vsel %vm1594, 0, %v1730
        %v1732 = vrot.slane %v1729, 4
        %v1733 = vsel %vm1594, 0, %v1732
        %v1736 = vunpack.c.l.s4 1983009808
        %v1737 = vunpack.c.0.s8 %v1736
        %v1738 = vperm.slane %v1701, %v1737
        %v1741 = vunpack.c.l.s4 1983009808
        %v1742 = vunpack.c.0.s8 %v1741
        %v1743 = vperm.slane %v1707, %v1742
        %v1744 = vrot.slane %v1743, 4
        %v1745 = vsel %vm1594, %v1744, %v1738
        %v1746 = vrot.slane %v1738, 4
        %v1747 = vsel %vm1594, %v1743, %v1746
        %v1749 = vunpack.c.l.s4 1934713408
        %v1750 = vunpack.c.0.s8 %v1749
        %v1751 = vperm.slane %v1745, %v1750
        %v1753 = vunpack.c.l.s4 1934713408
        %v1754 = vunpack.c.0.s8 %v1753
        %v1755 = vperm.slane %v1747, %v1754
        %v1756 = vrot.slane %v1751, 4
        %v1757 = vsel %vm1594, 0, %v1756
        %v1758 = vrot.slane %v1755, 4
        %v1759 = vsel %vm1594, 0, %v1758
        %v1760 = vsel %vm1594, %v1732, %v1725
        %v1762 = vunpack.c.l.s4 1983009808
        %v1763 = vunpack.c.0.s8 %v1762
        %v1764 = vperm.slane %v1760, %v1763
        %v1765 = vrot.slane %v1733, 4
        %v1766 = vsel %vm1594, %v1765, %v1731
        %v1768 = vunpack.c.l.s4 1983009808
        %v1769 = vunpack.c.0.s8 %v1768
        %v1770 = vperm.slane %v1766, %v1769
        %v1771 = vrot.slane %v1770, 4
        %v1772 = vsel %vm1594, %v1771, %v1764
        %v1774 = vunpack.c.l.s4 1934713408
        %v1775 = vunpack.c.0.s8 %v1774
        %v1776 = vperm.slane %v1772, %v1775
        %v1777 = vrot.slane %v1776, 4
        %v1778 = vsel %vm1594, 0, %v1777
        %v1779 = vsel %vm1594, %v1758, %v1751
        %v1781 = vunpack.c.l.s4 1983009808
        %v1782 = vunpack.c.0.s8 %v1781
        %v1783 = vperm.slane %v1779, %v1782
        %v1784 = vrot.slane %v1759, 4
        %v1785 = vsel %vm1594, %v1784, %v1757
        %v1787 = vunpack.c.l.s4 1983009808
        %v1788 = vunpack.c.0.s8 %v1787
        %v1789 = vperm.slane %v1785, %v1788
        %v1790 = vrot.slane %v1789, 4
        %v1791 = vsel %vm1594, %v1790, %v1783
        %v1793 = vunpack.c.l.s4 1934713408
        %v1794 = vunpack.c.0.s8 %v1793
        %v1795 = vperm.slane %v1791, %v1794
        %v1796 = vrot.slane %v1795, 4
        %v1797 = vsel %vm1594, 0, %v1796
        %v1800 = vpack.i.b16 %v1795, %v1776
        %v1802 = vshrl.u32 %v1776, 16
        %v1803 = vshrl.u32 %v1795, 16
        %v1804 = vpack.i.b16 %v1803, %v1802
        %v1808 = vpack.i.b16 %v1797, %v1778
        %v1810 = vshrl.u32 %v1778, 16
        %v1811 = vshrl.u32 %v1797, 16
        %v1812 = vpack.i.b16 %v1811, %v1810
        %v1814 = vpack.c.bf16 %v1536, %v1523
        %v1815 = vpack.c.bf16 %v1562, %v1549
        %v1817 = vrot.slane %v1814, 4
        %v1819 = vrot.slane %v1815, 4
        %v1822 = vpack.i.b16 %v1817, %v1814
        %v1823 = vshrl.u32 %v1814, 16
        %v1824 = vshrl.u32 %v1817, 16
        %v1825 = vpack.i.b16 %v1824, %v1823
        %v1828 = vpack.i.b16 %v1819, %v1815
        %v1829 = vshrl.u32 %v1815, 16
        %v1830 = vshrl.u32 %v1819, 16
        %v1831 = vpack.i.b16 %v1830, %v1829
        %v1834 = vunpack.c.l.s4 1983009808
        %v1835 = vunpack.c.0.s8 %v1834
        %v1836 = vperm.slane %v1822, %v1835
        %v1839 = vunpack.c.l.s4 1983009808
        %v1840 = vunpack.c.0.s8 %v1839
        %v1841 = vperm.slane %v1828, %v1840
        %v1842 = vrot.slane %v1841, 4
        %v1843 = vsel %vm1594, %v1842, %v1836
        %v1844 = vrot.slane %v1836, 4
        %v1845 = vsel %vm1594, %v1841, %v1844
        %v1847 = vunpack.c.l.s4 1934713408
        %v1848 = vunpack.c.0.s8 %v1847
        %v1849 = vperm.slane %v1843, %v1848
        %v1851 = vunpack.c.l.s4 1934713408
        %v1852 = vunpack.c.0.s8 %v1851
        %v1853 = vperm.slane %v1845, %v1852
        %v1854 = vrot.slane %v1849, 4
        %v1855 = vsel %vm1594, 0, %v1854
        %v1856 = vrot.slane %v1853, 4
        %v1857 = vsel %vm1594, 0, %v1856
        %v1860 = vunpack.c.l.s4 1983009808
        %v1861 = vunpack.c.0.s8 %v1860
        %v1862 = vperm.slane %v1825, %v1861
        %v1865 = vunpack.c.l.s4 1983009808
        %v1866 = vunpack.c.0.s8 %v1865
        %v1867 = vperm.slane %v1831, %v1866
        %v1868 = vrot.slane %v1867, 4
        %v1869 = vsel %vm1594, %v1868, %v1862
        %v1870 = vrot.slane %v1862, 4
        %v1871 = vsel %vm1594, %v1867, %v1870
        %v1873 = vunpack.c.l.s4 1934713408
        %v1874 = vunpack.c.0.s8 %v1873
        %v1875 = vperm.slane %v1869, %v1874
        %v1877 = vunpack.c.l.s4 1934713408
        %v1878 = vunpack.c.0.s8 %v1877
        %v1879 = vperm.slane %v1871, %v1878
        %v1880 = vrot.slane %v1875, 4
        %v1881 = vsel %vm1594, 0, %v1880
        %v1882 = vrot.slane %v1879, 4
        %v1883 = vsel %vm1594, 0, %v1882
        %v1884 = vsel %vm1594, %v1856, %v1849
        %v1886 = vunpack.c.l.s4 1983009808
        %v1887 = vunpack.c.0.s8 %v1886
        %v1888 = vperm.slane %v1884, %v1887
        %v1889 = vrot.slane %v1857, 4
        %v1890 = vsel %vm1594, %v1889, %v1855
        %v1892 = vunpack.c.l.s4 1983009808
        %v1893 = vunpack.c.0.s8 %v1892
        %v1894 = vperm.slane %v1890, %v1893
        %v1895 = vrot.slane %v1894, 4
        %v1896 = vsel %vm1594, %v1895, %v1888
        %v1898 = vunpack.c.l.s4 1934713408
        %v1899 = vunpack.c.0.s8 %v1898
        %v1900 = vperm.slane %v1896, %v1899
        %v1901 = vrot.slane %v1900, 4
        %v1902 = vsel %vm1594, 0, %v1901
        %v1903 = vsel %vm1594, %v1882, %v1875
        %v1905 = vunpack.c.l.s4 1983009808
        %v1906 = vunpack.c.0.s8 %v1905
        %v1907 = vperm.slane %v1903, %v1906
        %v1908 = vrot.slane %v1883, 4
        %v1909 = vsel %vm1594, %v1908, %v1881
        %v1911 = vunpack.c.l.s4 1983009808
        %v1912 = vunpack.c.0.s8 %v1911
        %v1913 = vperm.slane %v1909, %v1912
        %v1914 = vrot.slane %v1913, 4
        %v1915 = vsel %vm1594, %v1914, %v1907
        %v1917 = vunpack.c.l.s4 1934713408
        %v1918 = vunpack.c.0.s8 %v1917
        %v1919 = vperm.slane %v1915, %v1918
        %v1920 = vrot.slane %v1919, 4
        %v1921 = vsel %vm1594, 0, %v1920
        %v1924 = vpack.i.b16 %v1919, %v1900
        %v1925 = vshrl.u32 %v1900, 16
        %v1926 = vshrl.u32 %v1919, 16
        %v1927 = vpack.i.b16 %v1926, %v1925
        %v1930 = vpack.i.b16 %v1921, %v1902
        %v1931 = vshrl.u32 %v1902, 16
        %v1932 = vshrl.u32 %v1921, 16
        %v1933 = vpack.i.b16 %v1932, %v1931
        %v1935 = vperm.slane %v802, 0
        %1937 = vmatpush.bf16.xpose.msra.mxu0 0
        %1938 = vmatpush.bf16.xpose.msra.mxu0 0
        %1939 = vmatpush.bf16.xpose.msra.mxu0 0
        %1940 = vmatpush.bf16.xpose.msra.mxu0 0
        %1941 = vmatpush.bf16.xpose.msra.mxu0 0
        %1942 = vmatpush.bf16.xpose.msra.mxu0 0
        %1943 = vmatpush.bf16.xpose.msra.mxu0 0
        %1944 = vmatpush.bf16.xpose.msra.mxu0 %v1800
        %1945 = vmatmul.bf16.gmra.mxu0 %v1676
        %v1946 = vpop.f32.mrf.mxu0
        %v1947 = vadd.f32 %v1935, %v1946
        %v1948 = vpop.f32.mrf.mxu0
        %1949 = vdwg.mxu0
        %1950 = vmatpush.bf16.xpose.msra.mxu0 0
        %1951 = vmatpush.bf16.xpose.msra.mxu0 0
        %1952 = vmatpush.bf16.xpose.msra.mxu0 0
        %1953 = vmatpush.bf16.xpose.msra.mxu0 0
        %1954 = vmatpush.bf16.xpose.msra.mxu0 0
        %1955 = vmatpush.bf16.xpose.msra.mxu0 0
        %1956 = vmatpush.bf16.xpose.msra.mxu0 0
        %1957 = vmatpush.bf16.xpose.msra.mxu0 %v1804
        %1958 = vmatmul.bf16.gmra.mxu0 %v1680
        %v1959 = vpop.f32.mrf.mxu0
        %v1960 = vadd.f32 %v1935, %v1959
        %v1961 = vpop.f32.mrf.mxu0
        %1962 = vdwg.mxu0
        %1963 = vmatpush.bf16.xpose.msra.mxu0 0
        %1964 = vmatpush.bf16.xpose.msra.mxu0 0
        %1965 = vmatpush.bf16.xpose.msra.mxu0 0
        %1966 = vmatpush.bf16.xpose.msra.mxu0 0
        %1967 = vmatpush.bf16.xpose.msra.mxu0 0
        %1968 = vmatpush.bf16.xpose.msra.mxu0 0
        %1969 = vmatpush.bf16.xpose.msra.mxu0 0
        %1970 = vmatpush.bf16.xpose.msra.mxu0 %v1808
        %1971 = vmatmul.bf16.gmra.mxu0 %v1684
        %v1972 = vpop.f32.mrf.mxu0
        %v1973 = vadd.f32 %v1935, %v1972
        %v1974 = vpop.f32.mrf.mxu0
        %1975 = vdwg.mxu0
        %1976 = vmatpush.bf16.xpose.msra.mxu0 0
        %1977 = vmatpush.bf16.xpose.msra.mxu0 0
        %1978 = vmatpush.bf16.xpose.msra.mxu0 0
        %1979 = vmatpush.bf16.xpose.msra.mxu0 0
        %1980 = vmatpush.bf16.xpose.msra.mxu0 0
        %1981 = vmatpush.bf16.xpose.msra.mxu0 0
        %1982 = vmatpush.bf16.xpose.msra.mxu0 0
        %1983 = vmatpush.bf16.xpose.msra.mxu0 %v1812
        %1984 = vmatmul.bf16.gmra.mxu0 %v1688
        %v1985 = vpop.f32.mrf.mxu0
        %v1986 = vadd.f32 %v1935, %v1985
        %v1987 = vpop.f32.mrf.mxu0
        %1988 = vdwg.mxu0
        %vm1989 = vcmask 64512
        %v1990 = vsel %vm1989, %v1947, -inf
        %1991 = vmax.xlane.f32.xlu0 %v1990
        %v1992 = vpop.xlane.xlu0 %1991
        %v1993 = vsel %vm1989, %v1960, -inf
        %1994 = vmax.xlane.f32.xlu0 %v1993
        %v1995 = vpop.xlane.xlu0 %1994
        %v1996 = vsel %vm1989, %v1973, -inf
        %1997 = vmax.xlane.f32.xlu0 %v1996
        %v1998 = vpop.xlane.xlu0 %1997
        %v1999 = vsel %vm1989, %v1986, -inf
        %2000 = vmax.xlane.f32.xlu0 %v1999
        %v2001 = vpop.xlane.xlu0 %2000
        %v2002 = vsub.f32 %v1947, %v1992
        %v2003 = vsub.f32 %v1960, %v1995
        %v2004 = vsub.f32 %v1973, %v1998
        %v2005 = vsub.f32 %v1986, %v2001
        %v2006 = vmul.f32 %v2002, 1.442695
        %v2007 = vpow.pop %v2006
        %v2008 = vmul.f32 %v2003, 1.442695
        %v2009 = vpow.pop %v2008
        %v2010 = vmul.f32 %v2004, 1.442695
        %v2011 = vpow.pop %v2010
        %v2012 = vmul.f32 %v2005, 1.442695
        %v2013 = vpow.pop %v2012
        %v2014 = vsel %vm1989, %v2007, 0.0
        %2015 = vadd.xlane.f32.xlu0 %v2014
        %v2016 = vpop.xlane.xlu0 %2015
        %v2017 = vsel %vm1989, %v2009, 0.0
        %2018 = vadd.xlane.f32.xlu0 %v2017
        %v2019 = vpop.xlane.xlu0 %2018
        %v2020 = vsel %vm1989, %v2011, 0.0
        %2021 = vadd.xlane.f32.xlu0 %v2020
        %v2022 = vpop.xlane.xlu0 %2021
        %v2023 = vsel %vm1989, %v2013, 0.0
        %2024 = vadd.xlane.f32.xlu0 %v2023
        %v2025 = vpop.xlane.xlu0 %2024
        %v2026 = vrcp.pop %v2016
        %v2027 = vrcp.pop %v2019
        %v2028 = vrcp.pop %v2022
        %v2029 = vrcp.pop %v2025
        %v2030 = vmul.f32 %v2007, %v2026
        %v2031 = vmul.f32 %v2009, %v2027
        %v2032 = vmul.f32 %v2011, %v2028
        %v2033 = vmul.f32 %v2013, %v2029
        %v2034 = vpack.c.bf16 %v2030, %v2030
        %v2035 = vpack.c.bf16 %v2031, %v2031
        %v2036 = vpack.c.bf16 %v2032, %v2032
        %v2037 = vpack.c.bf16 %v2033, %v2033
        %v2039 = vsel %vm1989, %v2034, 0
        %vm2041 = vcmask 1043456
        %v2043 = vsel %vm2041, %v1924, 0
        %2045 = vmatpush.bf16.msra.mxu0 0
        %2046 = vmatpush.bf16.msra.mxu0 0
        %2047 = vmatpush.bf16.msra.mxu0 0
        %2048 = vmatpush.bf16.msra.mxu0 0
        %2049 = vmatpush.bf16.msra.mxu0 0
        %2050 = vmatpush.bf16.msra.mxu0 0
        %2051 = vmatpush.bf16.msra.mxu0 0
        %2052 = vmatpush.bf16.msra.mxu0 %v2043
        %2053 = vmatmul.bf16.gmra.mxu0 %v2039
        %v2054 = vpop.f32.mrf.mxu0
        %v2055 = vadd.f32 0.0, %v2054
        %v2056 = vpop.f32.mrf.mxu0
        %2057 = vdwg.mxu0
        %v2059 = vsel %vm1989, %v2035, 0
        %v2062 = vsel %vm2041, %v1927, 0
        %2064 = vmatpush.bf16.msra.mxu0 0
        %2065 = vmatpush.bf16.msra.mxu0 0
        %2066 = vmatpush.bf16.msra.mxu0 0
        %2067 = vmatpush.bf16.msra.mxu0 0
        %2068 = vmatpush.bf16.msra.mxu0 0
        %2069 = vmatpush.bf16.msra.mxu0 0
        %2070 = vmatpush.bf16.msra.mxu0 0
        %2071 = vmatpush.bf16.msra.mxu0 %v2062
        %2072 = vmatmul.bf16.gmra.mxu0 %v2059
        %v2073 = vpop.f32.mrf.mxu0
        %v2074 = vadd.f32 0.0, %v2073
        %v2075 = vpop.f32.mrf.mxu0
        %2076 = vdwg.mxu0
        %v2078 = vsel %vm1989, %v2036, 0
        %v2081 = vsel %vm2041, %v1930, 0
        %2083 = vmatpush.bf16.msra.mxu0 0
        %2084 = vmatpush.bf16.msra.mxu0 0
        %2085 = vmatpush.bf16.msra.mxu0 0
        %2086 = vmatpush.bf16.msra.mxu0 0
        %2087 = vmatpush.bf16.msra.mxu0 0
        %2088 = vmatpush.bf16.msra.mxu0 0
        %2089 = vmatpush.bf16.msra.mxu0 0
        %2090 = vmatpush.bf16.msra.mxu0 %v2081
        %2091 = vmatmul.bf16.gmra.mxu0 %v2078
        %v2092 = vpop.f32.mrf.mxu0
        %v2093 = vadd.f32 0.0, %v2092
        %v2094 = vpop.f32.mrf.mxu0
        %2095 = vdwg.mxu0
        %v2097 = vsel %vm1989, %v2037, 0
        %v2100 = vsel %vm2041, %v1933, 0
        %2102 = vmatpush.bf16.msra.mxu0 0
        %2103 = vmatpush.bf16.msra.mxu0 0
        %2104 = vmatpush.bf16.msra.mxu0 0
        %2105 = vmatpush.bf16.msra.mxu0 0
        %2106 = vmatpush.bf16.msra.mxu0 0
        %2107 = vmatpush.bf16.msra.mxu0 0
        %2108 = vmatpush.bf16.msra.mxu0 0
        %2109 = vmatpush.bf16.msra.mxu0 %v2100
        %2110 = vmatmul.bf16.gmra.mxu0 %v2097
        %v2111 = vpop.f32.mrf.mxu0
        %v2112 = vadd.f32 0.0, %v2111
        %v2113 = vpop.f32.mrf.mxu0
        %2114 = vdwg.mxu0
        %v2115 = vrot.slane %v2093, 4
        %vm2116 = vcmask 1047556
        %v2117 = vsel %vm2116, %v2115, %v2055
        %v2118 = vrot.slane %v2055, 4
        %v2119 = vsel %vm2116, %v2093, %v2118
        %v2121 = vunpack.c.l.s4 1983009808
        %v2122 = vunpack.c.0.s8 %v2121
        %v2123 = vperm.slane %v2117, %v2122
        %v2125 = vunpack.c.l.s4 1983009808
        %v2126 = vunpack.c.0.s8 %v2125
        %v2127 = vperm.slane %v2119, %v2126
        %v2128 = vrot.slane %v2112, 4
        %v2129 = vsel %vm2116, %v2128, %v2074
        %v2130 = vrot.slane %v2074, 4
        %v2131 = vsel %vm2116, %v2112, %v2130
        %v2133 = vunpack.c.l.s4 1983009808
        %v2134 = vunpack.c.0.s8 %v2133
        %v2135 = vperm.slane %v2129, %v2134
        %v2137 = vunpack.c.l.s4 1983009808
        %v2138 = vunpack.c.0.s8 %v2137
        %v2139 = vperm.slane %v2131, %v2138
        %v2140 = vrot.slane %v2135, 4
        %v2141 = vsel %vm2116, %v2140, %v2123
        %v2142 = vrot.slane %v2123, 4
        %v2143 = vsel %vm2116, %v2135, %v2142
        %v2145 = vunpack.c.l.s4 1934713408
        %v2146 = vunpack.c.0.s8 %v2145
        %v2147 = vperm.slane %v2141, %v2146
        %v2149 = vunpack.c.l.s4 1934713408
        %v2150 = vunpack.c.0.s8 %v2149
        %v2151 = vperm.slane %v2143, %v2150
        %v2152 = vrot.slane %v2139, 4
        %v2153 = vsel %vm2116, %v2152, %v2127
        %v2154 = vrot.slane %v2127, 4
        %v2155 = vsel %vm2116, %v2139, %v2154
        %v2157 = vunpack.c.l.s4 1934713408
        %v2158 = vunpack.c.0.s8 %v2157
        %v2159 = vperm.slane %v2153, %v2158
        %v2161 = vunpack.c.l.s4 1934713408
        %v2162 = vunpack.c.0.s8 %v2161
        %v2163 = vperm.slane %v2155, %v2162
        %v2164 = vrot.slane %v2147, 4
        %v2165 = vsel %vm2116, 0.0, %v2164
        %v2166 = vrot.slane %v2151, 4
        %v2167 = vsel %vm2116, 0.0, %v2166
        %v2168 = vrot.slane %v2159, 4
        %v2169 = vsel %vm2116, 0.0, %v2168
        %v2170 = vrot.slane %v2163, 4
        %v2171 = vsel %vm2116, 0.0, %v2170
        %v2172 = vsel %vm2116, %v2166, %v2147
        %v2174 = vunpack.c.l.s4 1983009808
        %v2175 = vunpack.c.0.s8 %v2174
        %v2176 = vperm.slane %v2172, %v2175
        %v2177 = vrot.slane %v2167, 4
        %v2178 = vsel %vm2116, %v2177, %v2165
        %v2180 = vunpack.c.l.s4 1983009808
        %v2181 = vunpack.c.0.s8 %v2180
        %v2182 = vperm.slane %v2178, %v2181
        %v2183 = vsel %vm2116, %v2170, %v2159
        %v2185 = vunpack.c.l.s4 1983009808
        %v2186 = vunpack.c.0.s8 %v2185
        %v2187 = vperm.slane %v2183, %v2186
        %v2188 = vrot.slane %v2171, 4
        %v2189 = vsel %vm2116, %v2188, %v2169
        %v2191 = vunpack.c.l.s4 1983009808
        %v2192 = vunpack.c.0.s8 %v2191
        %v2193 = vperm.slane %v2189, %v2192
        %v2194 = vrot.slane %v2182, 4
        %v2195 = vsel %vm2116, %v2194, %v2176
        %v2196 = vrot.slane %v2176, 4
        %v2197 = vsel %vm2116, %v2182, %v2196
        %v2199 = vunpack.c.l.s4 1934713408
        %v2200 = vunpack.c.0.s8 %v2199
        %v2201 = vperm.slane %v2195, %v2200
        %v2203 = vunpack.c.l.s4 1934713408
        %v2204 = vunpack.c.0.s8 %v2203
        %v2205 = vperm.slane %v2197, %v2204
        %v2206 = vrot.slane %v2193, 4
        %v2207 = vsel %vm2116, %v2206, %v2187
        %v2208 = vrot.slane %v2187, 4
        %v2209 = vsel %vm2116, %v2193, %v2208
        %v2211 = vunpack.c.l.s4 1934713408
        %v2212 = vunpack.c.0.s8 %v2211
        %v2213 = vperm.slane %v2207, %v2212
        %v2215 = vunpack.c.l.s4 1934713408
        %v2216 = vunpack.c.0.s8 %v2215
        %v2217 = vperm.slane %v2209, %v2216
        %v2218 = vrot.slane %v2213, 4
        %v2219 = vsel %vm2116, %v2218, %v2201
        %v2220 = vrot.slane %v2201, 4
        %v2221 = vsel %vm2116, %v2213, %v2220
        %v2222 = vrot.slane %v2217, 4
        %v2223 = vsel %vm2116, %v2222, %v2205
        %v2224 = vrot.slane %v2205, 4
        %v2225 = vsel %vm2116, %v2217, %v2224
        %v2226 = vpack.c.bf16 %v2219, %v2219
        %v2227 = vpack.c.bf16 %v2221, %v2221
        %v2228 = vpack.c.bf16 %v2223, %v2223
        %v2229 = vpack.c.bf16 %v2225, %v2225
        %v2230 = vld [vmem:[#allocation14] sm:$0xf]
        %v2231 = vld [vmem:[#allocation14 + $0x4] sm:$0xf]
        %v2232 = vld [vmem:[#allocation14 + $0x8] sm:$0xf]
        %v2233 = vld [vmem:[#allocation14 + $0xc] sm:$0xf]
        %v2234 = vld [vmem:[#allocation14 + $0x10] sm:$0xf]
        %v2235 = vld [vmem:[#allocation14 + $0x14] sm:$0xf]
        %v2236 = vld [vmem:[#allocation14 + $0x18] sm:$0xf]
        %v2237 = vld [vmem:[#allocation14 + $0x1c] sm:$0xf]
        %v2238 = vld [vmem:[#allocation14 + $0x20] sm:$0xf]
        %v2239 = vld [vmem:[#allocation14 + $0x24] sm:$0xf]
        %v2240 = vld [vmem:[#allocation14 + $0x28] sm:$0xf]
        %v2241 = vld [vmem:[#allocation14 + $0x2c] sm:$0xf]
        %v2242 = vld [vmem:[#allocation14 + $0x30] sm:$0xf]
        %v2243 = vld [vmem:[#allocation14 + $0x34] sm:$0xf]
        %v2244 = vld [vmem:[#allocation14 + $0x38] sm:$0xf]
        %v2245 = vld [vmem:[#allocation14 + $0x3c] sm:$0xf]
        %v2246 = vld [vmem:[#allocation14 + $0x40] sm:$0xf]
        %v2247 = vld [vmem:[#allocation14 + $0x44] sm:$0xf]
        %v2248 = vld [vmem:[#allocation14 + $0x48] sm:$0xf]
        %v2249 = vld [vmem:[#allocation14 + $0x4c] sm:$0xf]
        %v2250 = vld [vmem:[#allocation14 + $0x50] sm:$0xf]
        %v2251 = vld [vmem:[#allocation14 + $0x54] sm:$0xf]
        %v2252 = vld [vmem:[#allocation14 + $0x58] sm:$0xf]
        %v2253 = vld [vmem:[#allocation14 + $0x5c] sm:$0xf]
        %v2254 = vld [vmem:[#allocation14 + $0x60] sm:$0xf]
        %v2255 = vld [vmem:[#allocation14 + $0x64] sm:$0xf]
        %v2256 = vld [vmem:[#allocation14 + $0x68] sm:$0xf]
        %v2257 = vld [vmem:[#allocation14 + $0x6c] sm:$0xf]
        %v2258 = vld [vmem:[#allocation14 + $0x70] sm:$0xf]
        %v2259 = vld [vmem:[#allocation14 + $0x74] sm:$0xf]
        %v2260 = vld [vmem:[#allocation14 + $0x78] sm:$0xf]
        %v2261 = vld [vmem:[#allocation14 + $0x7c] sm:$0xf]
        %v2262 = vld [vmem:[#allocation14 + $0x80] sm:$0xf]
        %v2263 = vld [vmem:[#allocation14 + $0x84] sm:$0xf]
        %v2264 = vld [vmem:[#allocation14 + $0x88] sm:$0xf]
        %v2265 = vld [vmem:[#allocation14 + $0x8c] sm:$0xf]
        %v2266 = vld [vmem:[#allocation14 + $0x90] sm:$0xf]
        %v2267 = vld [vmem:[#allocation14 + $0x94] sm:$0xf]
        %v2268 = vld [vmem:[#allocation14 + $0x98] sm:$0xf]
        %v2269 = vld [vmem:[#allocation14 + $0x9c] sm:$0xf]
        %v2270 = vld [vmem:[#allocation14 + $0xa0] sm:$0xf]
        %v2271 = vld [vmem:[#allocation14 + $0xa4] sm:$0xf]
        %v2272 = vld [vmem:[#allocation14 + $0xa8] sm:$0xf]
        %v2273 = vld [vmem:[#allocation14 + $0xac] sm:$0xf]
        %v2274 = vld [vmem:[#allocation14 + $0xb0] sm:$0xf]
        %v2275 = vld [vmem:[#allocation14 + $0xb4] sm:$0xf]
        %v2276 = vld [vmem:[#allocation14 + $0xb8] sm:$0xf]
        %v2277 = vld [vmem:[#allocation14 + $0xbc] sm:$0xf]
        %v2278 = vld [vmem:[#allocation14 + $0xc0] sm:$0xf]
        %v2279 = vld [vmem:[#allocation14 + $0xc4] sm:$0xf]
        %v2280 = vld [vmem:[#allocation14 + $0xc8] sm:$0xf]
        %v2281 = vld [vmem:[#allocation14 + $0xcc] sm:$0xf]
        %v2282 = vld [vmem:[#allocation14 + $0xd0] sm:$0xf]
        %v2283 = vld [vmem:[#allocation14 + $0xd4] sm:$0xf]
        %v2284 = vld [vmem:[#allocation14 + $0xd8] sm:$0xf]
        %v2285 = vld [vmem:[#allocation14 + $0xdc] sm:$0xf]
        %v2286 = vld [vmem:[#allocation14 + $0xe0] sm:$0xf]
        %v2287 = vld [vmem:[#allocation14 + $0xe4] sm:$0xf]
        %v2288 = vld [vmem:[#allocation14 + $0xe8] sm:$0xf]
        %v2289 = vld [vmem:[#allocation14 + $0xec] sm:$0xf]
        %v2290 = vld [vmem:[#allocation14 + $0xf0] sm:$0xf]
        %v2291 = vld [vmem:[#allocation14 + $0xf4] sm:$0xf]
        %v2292 = vld [vmem:[#allocation14 + $0xf8] sm:$0xf]
        %v2293 = vld [vmem:[#allocation14 + $0xfc] sm:$0xf]
        %v2294 = vld [vmem:[%s9] sm:$0x1]
        %v2296 = vperm.slane %v2294, 0
        %v2362 = vunpack.c.l.b16 %v2230
        %v2363 = vunpack.c.l.b16 %v2231
        %v2364 = vunpack.c.l.b16 %v2232
        %v2365 = vunpack.c.l.b16 %v2233
        %v2366 = vunpack.c.l.b16 %v2234
        %v2367 = vunpack.c.l.b16 %v2235
        %v2368 = vunpack.c.l.b16 %v2236
        %v2369 = vunpack.c.l.b16 %v2237
        %v2370 = vunpack.c.l.b16 %v2238
        %v2371 = vunpack.c.l.b16 %v2239
        %v2372 = vunpack.c.l.b16 %v2240
        %v2373 = vunpack.c.l.b16 %v2241
        %v2374 = vunpack.c.l.b16 %v2242
        %v2375 = vunpack.c.l.b16 %v2243
        %v2376 = vunpack.c.l.b16 %v2244
        %v2377 = vunpack.c.l.b16 %v2245
        %v2378 = vunpack.c.l.b16 %v2246
        %v2379 = vunpack.c.l.b16 %v2247
        %v2380 = vunpack.c.l.b16 %v2248
        %v2381 = vunpack.c.l.b16 %v2249
        %v2382 = vunpack.c.l.b16 %v2250
        %v2383 = vunpack.c.l.b16 %v2251
        %v2384 = vunpack.c.l.b16 %v2252
        %v2385 = vunpack.c.l.b16 %v2253
        %v2386 = vunpack.c.l.b16 %v2254
        %v2387 = vunpack.c.l.b16 %v2255
        %v2388 = vunpack.c.l.b16 %v2256
        %v2389 = vunpack.c.l.b16 %v2257
        %v2390 = vunpack.c.l.b16 %v2258
        %v2391 = vunpack.c.l.b16 %v2259
        %v2392 = vunpack.c.l.b16 %v2260
        %v2393 = vunpack.c.l.b16 %v2261
        %v2394 = vunpack.c.l.b16 %v2262
        %v2395 = vunpack.c.l.b16 %v2263
        %v2396 = vunpack.c.l.b16 %v2264
        %v2397 = vunpack.c.l.b16 %v2265
        %v2398 = vunpack.c.l.b16 %v2266
        %v2399 = vunpack.c.l.b16 %v2267
        %v2400 = vunpack.c.l.b16 %v2268
        %v2401 = vunpack.c.l.b16 %v2269
        %v2402 = vunpack.c.l.b16 %v2270
        %v2403 = vunpack.c.l.b16 %v2271
        %v2404 = vunpack.c.l.b16 %v2272
        %v2405 = vunpack.c.l.b16 %v2273
        %v2406 = vunpack.c.l.b16 %v2274
        %v2407 = vunpack.c.l.b16 %v2275
        %v2408 = vunpack.c.l.b16 %v2276
        %v2409 = vunpack.c.l.b16 %v2277
        %v2410 = vunpack.c.l.b16 %v2278
        %v2411 = vunpack.c.l.b16 %v2279
        %v2412 = vunpack.c.l.b16 %v2280
        %v2413 = vunpack.c.l.b16 %v2281
        %v2414 = vunpack.c.l.b16 %v2282
        %v2415 = vunpack.c.l.b16 %v2283
        %v2416 = vunpack.c.l.b16 %v2284
        %v2417 = vunpack.c.l.b16 %v2285
        %v2418 = vunpack.c.l.b16 %v2286
        %v2419 = vunpack.c.l.b16 %v2287
        %v2420 = vunpack.c.l.b16 %v2288
        %v2421 = vunpack.c.l.b16 %v2289
        %v2422 = vunpack.c.l.b16 %v2290
        %v2423 = vunpack.c.l.b16 %v2291
        %v2424 = vunpack.c.l.b16 %v2292
        %v2425 = vunpack.c.l.b16 %v2293
        %v2426 = vpack.c.b16 %v2363, %v2362
        %v2427 = vpack.c.b16 %v2365, %v2364
        %v2428 = vpack.c.b16 %v2367, %v2366
        %v2429 = vpack.c.b16 %v2369, %v2368
        %v2430 = vpack.c.b16 %v2371, %v2370
        %v2431 = vpack.c.b16 %v2373, %v2372
        %v2432 = vpack.c.b16 %v2375, %v2374
        %v2433 = vpack.c.b16 %v2377, %v2376
        %v2434 = vpack.c.b16 %v2379, %v2378
        %v2435 = vpack.c.b16 %v2381, %v2380
        %v2436 = vpack.c.b16 %v2383, %v2382
        %v2437 = vpack.c.b16 %v2385, %v2384
        %v2438 = vpack.c.b16 %v2387, %v2386
        %v2439 = vpack.c.b16 %v2389, %v2388
        %v2440 = vpack.c.b16 %v2391, %v2390
        %v2441 = vpack.c.b16 %v2393, %v2392
        %v2442 = vpack.c.b16 %v2395, %v2394
        %v2443 = vpack.c.b16 %v2397, %v2396
        %v2444 = vpack.c.b16 %v2399, %v2398
        %v2445 = vpack.c.b16 %v2401, %v2400
        %v2446 = vpack.c.b16 %v2403, %v2402
        %v2447 = vpack.c.b16 %v2405, %v2404
        %v2448 = vpack.c.b16 %v2407, %v2406
        %v2449 = vpack.c.b16 %v2409, %v2408
        %v2450 = vpack.c.b16 %v2411, %v2410
        %v2451 = vpack.c.b16 %v2413, %v2412
        %v2452 = vpack.c.b16 %v2415, %v2414
        %v2453 = vpack.c.b16 %v2417, %v2416
        %v2454 = vpack.c.b16 %v2419, %v2418
        %v2455 = vpack.c.b16 %v2421, %v2420
        %v2456 = vpack.c.b16 %v2423, %v2422
        %v2457 = vpack.c.b16 %v2425, %v2424
        %2490 = vmatpush.bf16.msra.mxu0 %v2433
        %2491 = vmatpush.bf16.msra.mxu0 %v2432
        %2492 = vmatpush.bf16.msra.mxu0 %v2431
        %2493 = vmatpush.bf16.msra.mxu0 %v2430
        %2494 = vmatpush.bf16.msra.mxu0 %v2429
        %2495 = vmatpush.bf16.msra.mxu0 %v2428
        %2496 = vmatpush.bf16.msra.mxu0 %v2427
        %2497 = vmatpush.bf16.msra.mxu0 %v2426
        %2498 = vmatmul.bf16.gmra.mxu0 %v2226
        %v2499 = vpop.f32.mrf.mxu0
        %v2500 = vadd.f32 %v2296, %v2499
        %v2501 = vpop.f32.mrf.mxu0
        %2502 = vdwg.mxu0
        %2503 = vmatpush.bf16.msra.mxu0 %v2441
        %2504 = vmatpush.bf16.msra.mxu0 %v2440
        %2505 = vmatpush.bf16.msra.mxu0 %v2439
        %2506 = vmatpush.bf16.msra.mxu0 %v2438
        %2507 = vmatpush.bf16.msra.mxu0 %v2437
        %2508 = vmatpush.bf16.msra.mxu0 %v2436
        %2509 = vmatpush.bf16.msra.mxu0 %v2435
        %2510 = vmatpush.bf16.msra.mxu0 %v2434
        %2511 = vmatmul.bf16.gmra.mxu0 %v2227
        %v2512 = vpop.f32.mrf.mxu0
        %v2513 = vadd.f32 %v2500, %v2512
        %v2514 = vpop.f32.mrf.mxu0
        %2515 = vdwg.mxu0
        %2516 = vmatpush.bf16.msra.mxu0 %v2449
        %2517 = vmatpush.bf16.msra.mxu0 %v2448
        %2518 = vmatpush.bf16.msra.mxu0 %v2447
        %2519 = vmatpush.bf16.msra.mxu0 %v2446
        %2520 = vmatpush.bf16.msra.mxu0 %v2445
        %2521 = vmatpush.bf16.msra.mxu0 %v2444
        %2522 = vmatpush.bf16.msra.mxu0 %v2443
        %2523 = vmatpush.bf16.msra.mxu0 %v2442
        %2524 = vmatmul.bf16.gmra.mxu0 %v2228
        %v2525 = vpop.f32.mrf.mxu0
        %v2526 = vadd.f32 %v2513, %v2525
        %v2527 = vpop.f32.mrf.mxu0
        %2528 = vdwg.mxu0
        %2529 = vmatpush.bf16.msra.mxu0 %v2457
        %2530 = vmatpush.bf16.msra.mxu0 %v2456
        %2531 = vmatpush.bf16.msra.mxu0 %v2455
        %2532 = vmatpush.bf16.msra.mxu0 %v2454
        %2533 = vmatpush.bf16.msra.mxu0 %v2453
        %2534 = vmatpush.bf16.msra.mxu0 %v2452
        %2535 = vmatpush.bf16.msra.mxu0 %v2451
        %2536 = vmatpush.bf16.msra.mxu0 %v2450
        %2537 = vmatmul.bf16.gmra.mxu0 %v2229
        %v2538 = vpop.f32.mrf.mxu0
        %v2539 = vadd.f32 %v2526, %v2538
        %v2540 = vpop.f32.mrf.mxu0
        %2541 = vdwg.mxu0
        %v2542 = vadd.f32 %v800, %v2539
        %v2543 = vld [vmem:[%s14] sm:$0x1]
        %v2544 = vld [vmem:[%s15] sm:$0x1]
        %2545 = vadd.xlane.f32.xlu0 %v2542
        %v2546 = vpop.xlane.xlu0 %2545
        %v2547 = vmul.f32 %v2546, 0.03125
        %v2548 = vsub.f32 %v2542, %v2547
        %v2549 = vmul.f32 %v2548, %v799
        %v2550 = vmul.f32 %v2549, %v2549
        %2551 = vadd.xlane.f32.xlu0 %v2550
        %v2552 = vpop.xlane.xlu0 %2551
        %v2553 = vmul.f32 %v2552, 0.03125
        %v2554 = vadd.f32 %v2553, 1e-05
        %v2555 = vrsqrt.pop %v2554
        %v2556 = vmul.f32 %v2555, %v2554
        %v2557 = vmul.f32 %v2556, %v2555
        %v2558 = vmul.f32 0.5, %v2557
        %v2559 = vsub.f32 1.5, %v2558
        %v2560 = vmul.f32 %v2555, %v2559
        %vm2561 = vweird.f32 %v2554
        %vm2562 = vweird.f32 %v2555
        %vm2563 = vmor %vm2561, %vm2562
        %v2564 = vsel %vm2563, %v2555, %v2560
        %v2565 = vmul.f32 %v2549, %v2564
        %v2567 = vperm.slane %v2543, 0
        %v2569 = vmul.f32 %v2565, %v2567
        %v2571 = vperm.slane %v2544, 0
        %v2573 = vadd.f32 %v2569, %v2571
        %v2574 = vpack.c.bf16 %v2573, %v2573
        %v2575 = vld [vmem:[#allocation16] sm:$0xf]
        %v2576 = vld [vmem:[#allocation16 + $0x4] sm:$0xf]
        %v2577 = vld [vmem:[#allocation16 + $0x8] sm:$0xf]
        %v2578 = vld [vmem:[#allocation16 + $0xc] sm:$0xf]
        %v2579 = vld [vmem:[#allocation16 + $0x10] sm:$0xf]
        %v2580 = vld [vmem:[#allocation16 + $0x14] sm:$0xf]
        %v2581 = vld [vmem:[#allocation16 + $0x18] sm:$0xf]
        %v2582 = vld [vmem:[#allocation16 + $0x1c] sm:$0xf]
        %v2583 = vld [vmem:[#allocation16 + $0x20] sm:$0xf]
        %v2584 = vld [vmem:[#allocation16 + $0x24] sm:$0xf]
        %v2585 = vld [vmem:[#allocation16 + $0x28] sm:$0xf]
        %v2586 = vld [vmem:[#allocation16 + $0x2c] sm:$0xf]
        %v2587 = vld [vmem:[#allocation16 + $0x30] sm:$0xf]
        %v2588 = vld [vmem:[#allocation16 + $0x34] sm:$0xf]
        %v2589 = vld [vmem:[#allocation16 + $0x38] sm:$0xf]
        %v2590 = vld [vmem:[#allocation16 + $0x3c] sm:$0xf]
        %v2591 = vld [vmem:[%s11] sm:$0x1]
        %v2593 = vperm.slane %v2591, 0
        %v2611 = vunpack.c.l.b16 %v2575
        %v2612 = vunpack.c.l.b16 %v2576
        %v2613 = vunpack.c.l.b16 %v2577
        %v2614 = vunpack.c.l.b16 %v2578
        %v2615 = vunpack.c.l.b16 %v2579
        %v2616 = vunpack.c.l.b16 %v2580
        %v2617 = vunpack.c.l.b16 %v2581
        %v2618 = vunpack.c.l.b16 %v2582
        %v2619 = vunpack.c.l.b16 %v2583
        %v2620 = vunpack.c.l.b16 %v2584
        %v2621 = vunpack.c.l.b16 %v2585
        %v2622 = vunpack.c.l.b16 %v2586
        %v2623 = vunpack.c.l.b16 %v2587
        %v2624 = vunpack.c.l.b16 %v2588
        %v2625 = vunpack.c.l.b16 %v2589
        %v2626 = vunpack.c.l.b16 %v2590
        %v2627 = vpack.c.b16 %v2612, %v2611
        %v2628 = vpack.c.b16 %v2614, %v2613
        %v2629 = vpack.c.b16 %v2616, %v2615
        %v2630 = vpack.c.b16 %v2618, %v2617
        %v2631 = vpack.c.b16 %v2620, %v2619
        %v2632 = vpack.c.b16 %v2622, %v2621
        %v2633 = vpack.c.b16 %v2624, %v2623
        %v2634 = vpack.c.b16 %v2626, %v2625
        %2643 = vmatpush.bf16.msra.mxu0 %v2634
        %2644 = vmatpush.bf16.msra.mxu0 %v2633
        %2645 = vmatpush.bf16.msra.mxu0 %v2632
        %2646 = vmatpush.bf16.msra.mxu0 %v2631
        %2647 = vmatpush.bf16.msra.mxu0 %v2630
        %2648 = vmatpush.bf16.msra.mxu0 %v2629
        %2649 = vmatpush.bf16.msra.mxu0 %v2628
        %2650 = vmatpush.bf16.msra.mxu0 %v2627
        %2651 = vmatmul.bf16.gmra.mxu0 %v2574
        %v2652 = vpop.f32.mrf.mxu0
        %v2653 = vadd.f32 %v2593, %v2652
        %v2654 = vpop.f32.mrf.mxu0
        %2655 = vdwg.mxu0
        %v2656 = vmax.f32 %v2653, 0.0
        %v2657 = vpack.c.bf16 %v2656, %v2656
        %v2658 = vld [vmem:[#allocation17] sm:$0xf]
        %v2659 = vld [vmem:[#allocation17 + $0x4] sm:$0xf]
        %v2660 = vld [vmem:[#allocation17 + $0x8] sm:$0xf]
        %v2661 = vld [vmem:[#allocation17 + $0xc] sm:$0xf]
        %v2662 = vld [vmem:[#allocation17 + $0x10] sm:$0xf]
        %v2663 = vld [vmem:[#allocation17 + $0x14] sm:$0xf]
        %v2664 = vld [vmem:[#allocation17 + $0x18] sm:$0xf]
        %v2665 = vld [vmem:[#allocation17 + $0x1c] sm:$0xf]
        %v2666 = vld [vmem:[#allocation17 + $0x20] sm:$0xf]
        %v2667 = vld [vmem:[#allocation17 + $0x24] sm:$0xf]
        %v2668 = vld [vmem:[#allocation17 + $0x28] sm:$0xf]
        %v2669 = vld [vmem:[#allocation17 + $0x2c] sm:$0xf]
        %v2670 = vld [vmem:[#allocation17 + $0x30] sm:$0xf]
        %v2671 = vld [vmem:[#allocation17 + $0x34] sm:$0xf]
        %v2672 = vld [vmem:[#allocation17 + $0x38] sm:$0xf]
        %v2673 = vld [vmem:[#allocation17 + $0x3c] sm:$0xf]
        %v2674 = vld [vmem:[%s13] sm:$0x1]
        %v2676 = vperm.slane %v2674, 0
        %v2694 = vunpack.c.l.b16 %v2658
        %v2695 = vunpack.c.l.b16 %v2659
        %v2696 = vunpack.c.l.b16 %v2660
        %v2697 = vunpack.c.l.b16 %v2661
        %v2698 = vunpack.c.l.b16 %v2662
        %v2699 = vunpack.c.l.b16 %v2663
        %v2700 = vunpack.c.l.b16 %v2664
        %v2701 = vunpack.c.l.b16 %v2665
        %v2702 = vunpack.c.l.b16 %v2666
        %v2703 = vunpack.c.l.b16 %v2667
        %v2704 = vunpack.c.l.b16 %v2668
        %v2705 = vunpack.c.l.b16 %v2669
        %v2706 = vunpack.c.l.b16 %v2670
        %v2707 = vunpack.c.l.b16 %v2671
        %v2708 = vunpack.c.l.b16 %v2672
        %v2709 = vunpack.c.l.b16 %v2673
        %v2710 = vpack.c.b16 %v2695, %v2694
        %v2711 = vpack.c.b16 %v2697, %v2696
        %v2712 = vpack.c.b16 %v2699, %v2698
        %v2713 = vpack.c.b16 %v2701, %v2700
        %v2714 = vpack.c.b16 %v2703, %v2702
        %v2715 = vpack.c.b16 %v2705, %v2704
        %v2716 = vpack.c.b16 %v2707, %v2706
        %v2717 = vpack.c.b16 %v2709, %v2708
        %2726 = vmatpush.bf16.msra.mxu0 %v2717
        %2727 = vmatpush.bf16.msra.mxu0 %v2716
        %2728 = vmatpush.bf16.msra.mxu0 %v2715
        %2729 = vmatpush.bf16.msra.mxu0 %v2714
        %2730 = vmatpush.bf16.msra.mxu0 %v2713
        %2731 = vmatpush.bf16.msra.mxu0 %v2712
        %2732 = vmatpush.bf16.msra.mxu0 %v2711
        %2733 = vmatpush.bf16.msra.mxu0 %v2710
        %2734 = vmatmul.bf16.gmra.mxu0 %v2657
        %v2735 = vpop.f32.mrf.mxu0
        %v2736 = vadd.f32 %v2676, %v2735
        %v2737 = vpop.f32.mrf.mxu0
        %2738 = vdwg.mxu0
        %v2739 = vadd.f32 %v2573, %v2736
        %v2740 = vld [vmem:[%s16] sm:$0x1]
        %v2741 = vld [vmem:[%s17] sm:$0x1]
        %2742 = vadd.xlane.f32.xlu0 %v2739
        %v2743 = vpop.xlane.xlu0 %2742
        %v2744 = vmul.f32 %v2743, 0.03125
        %v2745 = vsub.f32 %v2739, %v2744
        %v2746 = vmul.f32 %v2745, %v799
        %v2747 = vmul.f32 %v2746, %v2746
        %2748 = vadd.xlane.f32.xlu0 %v2747
        %v2749 = vpop.xlane.xlu0 %2748
        %v2750 = vmul.f32 %v2749, 0.03125
        %v2751 = vadd.f32 %v2750, 1e-05
        %v2752 = vrsqrt.pop %v2751
        %v2753 = vmul.f32 %v2752, %v2751
        %v2754 = vmul.f32 %v2753, %v2752
        %v2755 = vmul.f32 0.5, %v2754
        %v2756 = vsub.f32 1.5, %v2755
        %v2757 = vmul.f32 %v2752, %v2756
        %vm2758 = vweird.f32 %v2751
        %vm2759 = vweird.f32 %v2752
        %vm2760 = vmor %vm2758, %vm2759
        %v2761 = vsel %vm2760, %v2752, %v2757
        %v2762 = vmul.f32 %v2746, %v2761
        %v2764 = vperm.slane %v2740, 0
        %v2766 = vmul.f32 %v2762, %v2764
        %v2768 = vperm.slane %v2741, 0
        %v2770 = vadd.f32 %v2766, %v2768
        %2771 = vst [vmem:[%s786] sm:$0xff] %v2770
        %v2772 = vsel %vm1989, %v2030, 0.0
        %v2773 = vsel %vm1989, %v2031, 0.0
        %v2774 = vadd.f32 %v2772, %v2773
        %v2775 = vsel %vm1989, %v2032, 0.0
        %v2776 = vadd.f32 %v2774, %v2775
        %v2777 = vsel %vm1989, %v2033, 0.0
        %v2778 = vadd.f32 %v2776, %v2777
        %v2779 = vmul.f32 %v2778, 0.25
        %v2780 = vsel %vm1989, %v2779, 0.0
        %2781 = vst [vmem:[%s793] sm:$0xff] %v2780
        %s2782 = sand.u32 %s443, 1
        %s2783 = scalar_lea.sflag [#allocation4], %s2782
        %s2784 = sand.u32 %s443, 1
        %s2785 = smul.addr %s2784, 8
        %s2786 = scalar_lea.vmem [#allocation19], %s2785
        %s2787 = sand.u32 %s469, 1
        %s2788 = scalar_lea.sflag [#allocation21], %s2787
        %s2789 = sand.u32 %s469, 1
        %s2790 = smul.addr %s2789, 8
        %s2791 = scalar_lea.vmem [#allocation20], %s2790
        // Predicated region
        $region133: #{tpu_custom_call.1} parent=91 // pred_check
          %p2792 = pneg %p453
        $region134: #{tpu_custom_call.1} parent=91 // pred_check_branch
          %2794 = sbr.rel (%p2792) target = $region136
        $region135: #{tpu_custom_call.1} parent=91 // pred_region
          %2796 = vsyncadd %s2783, 0
          %s2797 = smul.addr %s47, 8
          %s2798 = scalar_lea.hbm %s18, %s2797
          %s2800 = sshll.u32 %s2786, 4
          %s2801 = int_to_ptr.vmem [resolvable:$true] %s2800
          %s2802 = sshll.u32 %s2798, 4
          %s2803 = int_to_ptr.hbm [resolvable:$true] %s2802
          %2805 = dma.vmem_to_hbm [thread:$0]  %s2801, 128, %s2803, %s2783
        $region136: #{tpu_custom_call.1} parent=91 // pred_fallthru
          _
        // Predicated region
        $region137: #{tpu_custom_call.1} parent=91 // pred_check
          %p2806 = pneg %p479
        $region138: #{tpu_custom_call.1} parent=91 // pred_check_branch
          %2808 = sbr.rel (%p2806) target = $region140
        $region139: #{tpu_custom_call.1} parent=91 // pred_region
          %2810 = vsyncadd %s2788, 0
          %s2811 = smul.addr %s47, 8
          %s2812 = scalar_lea.hbm %s19, %s2811
          %s2814 = sshll.u32 %s2791, 4
          %s2815 = int_to_ptr.vmem [resolvable:$true] %s2814
          %s2816 = sshll.u32 %s2812, 4
          %s2817 = int_to_ptr.hbm [resolvable:$true] %s2816
          %2819 = dma.vmem_to_hbm [thread:$0]  %s2815, 128, %s2817, %s2788
        $region140: #{tpu_custom_call.1} parent=91 // pred_fallthru
          _
      $region92: #{tpu_custom_call.1} parent=5 // pred_fallthru
        _
      %p2820 = scmp.le.s32.totalorder 2, %s42
      // Predicated region
      $region141: #{tpu_custom_call.1} parent=5 // pred_check
        %p2821 = pneg %p2820
      $region142: #{tpu_custom_call.1} parent=5 // pred_check_branch
        %2823 = sbr.rel (%p2821) target = $region144
      $region143: #{tpu_custom_call.1} parent=5 // pred_region
        %s2824 = ssub.s32 %s42, 2
        // Predicated region
        $region145: #{tpu_custom_call.1} parent=143 // pred_check
          %p2825 = pneg %p459
        $region146: #{tpu_custom_call.1} parent=143 // pred_check_branch
          %2827 = sbr.rel (%p2825) target = $region148
        $region147: #{tpu_custom_call.1} parent=143 // pred_region
          %s2828 = sand.u32 %s444, 1
          %s2829 = scalar_lea.sflag [#allocation4], %s2828
          %s2830 = sand.u32 %s444, 1
          %s2831 = smul.addr %s2830, 8
          %s2832 = scalar_lea.vmem [#allocation19], %s2831
          %2834 = dma.done %s2829, 128
        $region148: #{tpu_custom_call.1} parent=143 // pred_fallthru
          _
        // Predicated region
        $region149: #{tpu_custom_call.1} parent=143 // pred_check
          %p2835 = pneg %p485
        $region150: #{tpu_custom_call.1} parent=143 // pred_check_branch
          %2837 = sbr.rel (%p2835) target = $region152
        $region151: #{tpu_custom_call.1} parent=143 // pred_region
          %s2838 = sand.u32 %s470, 1
          %s2839 = scalar_lea.sflag [#allocation21], %s2838
          %s2840 = sand.u32 %s470, 1
          %s2841 = smul.addr %s2840, 8
          %s2842 = scalar_lea.vmem [#allocation20], %s2841
          %2844 = dma.done %s2839, 128
        $region152: #{tpu_custom_call.1} parent=143 // pred_fallthru
          _
      $region144: #{tpu_custom_call.1} parent=5 // pred_fallthru
        _
    $region6: #{tpu_custom_call.1} parent=1 // loop_footer
      %s46 = sadd.s32 1, %s42
    $region7: #{tpu_custom_call.1} parent=1 // loop_footer_branch
      %41 = sbr.rel target = $region3
    $region8: #{tpu_custom_call.1} parent=1 // loop_exit
      _
    %2845 = vsyncpa [#allocation3], 1
    %s2846 = scalar_lea.sflag [#allocation3], 1
    %2847 = vsyncpa %s2846, 1
    %2848 = vsyncpa [#allocation6], 1
    %s2849 = scalar_lea.sflag [#allocation6], 1
    %2850 = vsyncpa %s2849, 1
    %2851 = vsyncpa [#allocation9], 1
    %2852 = vsyncpa [#allocation12], 1
    %2853 = vsyncpa [#allocation15], 1
    %2854 = vsyncpa [#allocation18], 1
    %2855 = vsyncpa [#allocation4], 1
    %s2856 = scalar_lea.sflag [#allocation4], 1
    %2857 = vsyncpa %s2856, 1
    %2858 = vsyncpa [#allocation21], 1
    %s2859 = scalar_lea.sflag [#allocation21], 1
    %2860 = vsyncpa %s2859, 1

// kernel: tpu_custom_call.1
$region0: #{tpu_custom_call.1}
  #allocation0 [shape = 'u32[]', space=smem, size = 0x4, offset = 0x4, fixed_abs, tag = 'smem constant byte address 0x4 - core index']
  #allocation1 [shape = 'u32[72,128]{1,0:T(1,128)}', space=vmem, size = 0x9000, scoped, tag = 'internal scratch']
  %s0 = inlined_call_operand.hbm [shape: f32[2,8,128], index: 0, kind: input, shape index: {}]
  %s1 = inlined_call_operand.hbm [shape: f32[2,1,8], index: 1, kind: input, shape index: {}]
  %s2 = inlined_call_operand.hbm [shape: bf16[128,512], index: 2, kind: input, shape index: {}]
  %s3 = inlined_call_operand.hbm [shape: bf16[128,512], index: 3, kind: input, shape index: {}]
  %s4 = inlined_call_operand.hbm [shape: bf16[128,512], index: 4, kind: input, shape index: {}]
  %s5 = inlined_call_operand.vmem [shape: f32[1,512], index: 5, kind: input, shape index: {}]
  %s6 = inlined_call_operand.hbm [shape: f32[1,512], index: 6, kind: input, shape index: {}]
  %s7 = inlined_call_operand.hbm [shape: f32[1,512], index: 7, kind: input, shape index: {}]
  %s8 = inlined_call_operand.hbm [shape: bf16[512,128], index: 8, kind: input, shape index: {}]
  %s9 = inlined_call_operand.vmem [shape: f32[1,128], index: 9, kind: input, shape index: {}]
  %s10 = inlined_call_operand.hbm [shape: bf16[128,128], index: 10, kind: input, shape index: {}]
  %s11 = inlined_call_operand.vmem [shape: f32[1,128], index: 11, kind: input, shape index: {}]
  %s12 = inlined_call_operand.hbm [shape: bf16[128,128], index: 12, kind: input, shape index: {}]
  %s13 = inlined_call_operand.vmem [shape: f32[1,128], index: 13, kind: input, shape index: {}]
  %s14 = inlined_call_operand.vmem [shape: f32[1,128], index: 14, kind: input, shape index: {}]
  %s15 = inlined_call_operand.vmem [shape: f32[1,128], index: 15, kind: input, shape index: {}]
  %s16 = inlined_call_operand.vmem [shape: f32[1,128], index: 16, kind: input, shape index: {}]
  %s17 = inlined_call_operand.vmem [shape: f32[1,128], index: 17, kind: input, shape index: {}]
  %s18 = inlined_call_operand.hbm [shape: f32[2,8,128], index: 18, kind: output, shape index: {0}]
  %s19 = inlined_call_operand.hbm [shape: f32[2,8,128], index: 19, kind: output, shape index: {1}]
  %20 = xla_tuple %s18, %s19
  %s21 = sld [smem:[#allocation0]]
  $region153: #{tpu_custom_call.1} parent=0
    _
  %s23 = ssub.s32 1, %s21
  %s24 = scalar_select 0, %s23, %s21
  $region1: #{tpu_custom_call.1} parent=0
    #allocation2 [shape = 'u8[8192]{0}', space=vmem, size = 0x2000, scoped, tag = 'input window, operand 0']
    #allocation3 [shape = 's32[2]{0}', space=sflag, size = 0x8, scoped, tag = 'scoped memory for tpu_custom_call.1']
    #allocation4 [shape = 's32[2]{0}', space=sflag, size = 0x8, scoped, tag = 'scoped memory for tpu_custom_call.1']
    #allocation5 [shape = 'u8[1024]{0}', space=vmem, size = 0x400, scoped, tag = 'input window, operand 1']
    #allocation6 [shape = 's32[2]{0}', space=sflag, size = 0x8, scoped, tag = 'scoped memory for tpu_custom_call.1']
    #allocation7 [shape = 'u8[131072]{0}', space=vmem, size = 0x20000, scoped, tag = 'input window, operand 2, single buffered']
    #allocation8 [shape = 'u8[131072]{0}', space=vmem, size = 0x20000, scoped, tag = 'input window, operand 3, single buffered']
    #allocation9 [shape = 's32[1]{0}', space=sflag, size = 0x4, scoped, tag = 'scoped memory for tpu_custom_call.1']
    #allocation10 [shape = 'u8[131072]{0}', space=vmem, size = 0x20000, scoped, tag = 'input window, operand 4, single buffered']
    #allocation11 [shape = 'u8[2048]{0}', space=vmem, size = 0x800, scoped, tag = 'input window, operand 6, single buffered']
    #allocation12 [shape = 's32[1]{0}', space=sflag, size = 0x4, scoped, tag = 'scoped memory for tpu_custom_call.1']
    #allocation13 [shape = 'u8[2048]{0}', space=vmem, size = 0x800, scoped, tag = 'input window, operand 7, single buffered']
    #allocation14 [shape = 'u8[131072]{0}', space=vmem, size = 0x20000, scoped, tag = 'input window, operand 8, single buffered']
    #allocation15 [shape = 's32[1]{0}', space=sflag, size = 0x4, scoped, tag = 'scoped memory for tpu_custom_call.1']
    #allocation16 [shape = 'u8[32768]{0}', space=vmem, size = 0x8000, scoped, tag = 'input window, operand 10, single buffered']
    #allocation17 [shape = 'u8[32768]{0}', space=vmem, size = 0x8000, scoped, tag = 'input window, operand 12, single buffered']
    #allocation18 [shape = 's32[1]{0}', space=sflag, size = 0x4, scoped, tag = 'scoped memory for tpu_custom_call.1']
    #allocation19 [shape = 'u8[8192]{0}', space=vmem, size = 0x2000, scoped, tag = 'output window, operand 0']
    #allocation20 [shape = 'u8[8192]{0}', space=vmem, size = 0x2000, scoped, tag = 'output window, operand 1']
    #allocation21 [shape = 's32[2]{0}', space=sflag, size = 0x8, scoped, tag = 'scoped memory for tpu_custom_call.1']
    %25 = vsyncpa [#allocation3], 0
    %s26 = scalar_lea.sflag [#allocation3], 1
    %27 = vsyncpa %s26, 0
    %28 = vsyncpa [#allocation6], 0
    %s29 = scalar_lea.sflag [#allocation6], 1
    %30 = vsyncpa %s29, 0
    %31 = vsyncpa [#allocation9], 0
    %32 = vsyncpa [#allocation12], 0
    %33 = vsyncpa [#allocation15], 0
    %34 = vsyncpa [#allocation18], 0
    %35 = vsyncpa [#allocation4], 0
    %s36 = scalar_lea.sflag [#allocation4], 1
    %37 = vsyncpa %s36, 0
    %38 = vsyncpa [#allocation21], 0
    %s39 = scalar_lea.sflag [#allocation21], 1
    %40 = vsyncpa %s39, 0
    loop: start=0, step=1, limit=4
    $region2: #{tpu_custom_call.1} parent=1 // loop_pre_header
      _
    $region3: #{tpu_custom_call.1} parent=1 // loop_header
      %s42 = sphi 0, %s46
      %p43 = scmp.ge.s32.totalorder %s42, 4
      %s52 = sphi 0, %s54
      %s55 = sphi 0, %s52
      %s56 = sphi 0, %s55
      %s72 = sphi 0, %s56
      %s78 = sphi 0, %s80
      %s81 = sphi 0, %s78
      %s82 = sphi 0, %s81
      %s98 = sphi 0, %s82
      %s102 = sphi 0, %s102
      %s104 = sphi 0, %s102
      %s105 = sphi 0, %s104
      %s119 = sphi 0, %s105
      %s123 = sphi 0, %s123
      %s125 = sphi 0, %s123
      %s126 = sphi 0, %s125
      %s140 = sphi 0, %s126
      %s144 = sphi 0, %s144
      %s146 = sphi 0, %s144
      %s147 = sphi 0, %s146
      %s161 = sphi 0, %s147
      %s165 = sphi 0, %s165
      %s167 = sphi 0, %s165
      %s168 = sphi 0, %s167
      %s182 = sphi 0, %s168
      %s186 = sphi 0, %s186
      %s188 = sphi 0, %s186
      %s189 = sphi 0, %s188
      %s203 = sphi 0, %s189
      %s207 = sphi 0, %s207
      %s209 = sphi 0, %s207
      %s210 = sphi 0, %s209
      %s224 = sphi 0, %s210
      %s228 = sphi 0, %s228
      %s230 = sphi 0, %s228
      %s231 = sphi 0, %s230
      %s245 = sphi 0, %s231
      %s249 = sphi 0, %s249
      %s251 = sphi 0, %s249
      %s252 = sphi 0, %s251
      %s266 = sphi 0, %s252
      %s270 = sphi 0, %s270
      %s272 = sphi 0, %s270
      %s273 = sphi 0, %s272
      %s287 = sphi 0, %s273
      %s291 = sphi 0, %s291
      %s293 = sphi 0, %s291
      %s294 = sphi 0, %s293
      %s308 = sphi 0, %s294
      %s312 = sphi 0, %s312
      %s314 = sphi 0, %s312
      %s315 = sphi 0, %s314
      %s329 = sphi 0, %s315
      %s333 = sphi 0, %s333
      %s335 = sphi 0, %s333
      %s336 = sphi 0, %s335
      %s350 = sphi 0, %s336
      %s354 = sphi 0, %s354
      %s356 = sphi 0, %s354
      %s357 = sphi 0, %s356
      %s371 = sphi 0, %s357
      %s375 = sphi 0, %s375
      %s377 = sphi 0, %s375
      %s378 = sphi 0, %s377
      %s392 = sphi 0, %s378
      %s396 = sphi 0, %s396
      %s398 = sphi 0, %s396
      %s399 = sphi 0, %s398
      %s413 = sphi 0, %s399
      %s417 = sphi 0, %s417
      %s419 = sphi 0, %s417
      %s420 = sphi 0, %s419
      %s434 = sphi 0, %s420
      %s440 = sphi 0, %s442
      %s443 = sphi 0, %s440
      %s444 = sphi 0, %s443
      %s460 = sphi 0, %s444
      %s466 = sphi 0, %s468
      %s469 = sphi 0, %s466
      %s470 = sphi 0, %s469
      %s486 = sphi 0, %s470
    $region4: #{tpu_custom_call.1} parent=1 // loop_header_branch
      %45 = sbr.rel (%p43) target = $region8
    $region5: #{tpu_custom_call.1} parent=1 // loop_body
      %s47 = ssub.s32 %s42, 1
      %s48 = ssub.s32 %s42, 2
      %s49 = sadd.s32 %s42, 1
      %s50 = ssub.s32 %s42, %s49
      %p51 = scmp.eq.s32.totalorder %s50, 0
      %s53 = sadd.s32 %s52, 1
      %s54 = scalar_select %p51, %s52, %s53
      %p57 = pneg %p51
      %p58 = scmp.eq.s32.totalorder %s42, 1
      %p59 = por %p57, %p58
      %p60 = scmp.ne.s32.totalorder %s52, %s55
      %p61 = scmp.eq.s32.totalorder %s42, 0
      %p62 = por %p60, %p61
      %p63 = scmp.ne.s32.totalorder %s52, %s55
      %p64 = scmp.eq.s32.totalorder %s47, 1
      %p65 = por %p63, %p64
      %p66 = scmp.ne.s32.totalorder %s55, %s56
      %p67 = scmp.eq.s32.totalorder %s47, 0
      %p68 = por %p66, %p67
      %p69 = scmp.ne.s32.totalorder %s55, %s56
      %p70 = scmp.eq.s32.totalorder %s48, 1
      %p71 = por %p69, %p70
      %p73 = scmp.ne.s32.totalorder %s56, %s72
      %p74 = scmp.eq.s32.totalorder %s48, 0
      %p75 = por %p73, %p74
      %s76 = ssub.s32 %s42, %s49
      %p77 = scmp.eq.s32.totalorder %s76, 0
      %s79 = sadd.s32 %s78, 1
      %s80 = scalar_select %p77, %s78, %s79
      %p83 = pneg %p77
      %p84 = scmp.eq.s32.totalorder %s42, 1
      %p85 = por %p83, %p84
      %p86 = scmp.ne.s32.totalorder %s78, %s81
      %p87 = scmp.eq.s32.totalorder %s42, 0
      %p88 = por %p86, %p87
      %p89 = scmp.ne.s32.totalorder %s78, %s81
      %p90 = scmp.eq.s32.totalorder %s47, 1
      %p91 = por %p89, %p90
      %p92 = scmp.ne.s32.totalorder %s81, %s82
      %p93 = scmp.eq.s32.totalorder %s47, 0
      %p94 = por %p92, %p93
      %p95 = scmp.ne.s32.totalorder %s81, %s82
      %p96 = scmp.eq.s32.totalorder %s48, 1
      %p97 = por %p95, %p96
      %p99 = scmp.ne.s32.totalorder %s82, %s98
      %p100 = scmp.eq.s32.totalorder %s48, 0
      %p101 = por %p99, %p100
      %s103 = sadd.s32 %s102, 1
      %p106 = scmp.eq.s32.totalorder %s42, 1
      %p107 = scmp.ne.s32.totalorder %s102, %s104
      %p108 = scmp.eq.s32.totalorder %s42, 0
      %p109 = por %p107, %p108
      %p110 = scmp.ne.s32.totalorder %s102, %s104
      %p111 = scmp.eq.s32.totalorder %s47, 1
      %p112 = por %p110, %p111
      %p113 = scmp.ne.s32.totalorder %s104, %s105
      %p114 = scmp.eq.s32.totalorder %s47, 0
      %p115 = por %p113, %p114
      %p116 = scmp.ne.s32.totalorder %s104, %s105
      %p117 = scmp.eq.s32.totalorder %s48, 1
      %p118 = por %p116, %p117
      %p120 = scmp.ne.s32.totalorder %s105, %s119
      %p121 = scmp.eq.s32.totalorder %s48, 0
      %p122 = por %p120, %p121
      %s124 = sadd.s32 %s123, 1
      %p127 = scmp.eq.s32.totalorder %s42, 1
      %p128 = scmp.ne.s32.totalorder %s123, %s125
      %p129 = scmp.eq.s32.totalorder %s42, 0
      %p130 = por %p128, %p129
      %p131 = scmp.ne.s32.totalorder %s123, %s125
      %p132 = scmp.eq.s32.totalorder %s47, 1
      %p133 = por %p131, %p132
      %p134 = scmp.ne.s32.totalorder %s125, %s126
      %p135 = scmp.eq.s32.totalorder %s47, 0
      %p136 = por %p134, %p135
      %p137 = scmp.ne.s32.totalorder %s125, %s126
      %p138 = scmp.eq.s32.totalorder %s48, 1
      %p139 = por %p137, %p138
      %p141 = scmp.ne.s32.totalorder %s126, %s140
      %p142 = scmp.eq.s32.totalorder %s48, 0
      %p143 = por %p141, %p142
      %s145 = sadd.s32 %s144, 1
      %p148 = scmp.eq.s32.totalorder %s42, 1
      %p149 = scmp.ne.s32.totalorder %s144, %s146
      %p150 = scmp.eq.s32.totalorder %s42, 0
      %p151 = por %p149, %p150
      %p152 = scmp.ne.s32.totalorder %s144, %s146
      %p153 = scmp.eq.s32.totalorder %s47, 1
      %p154 = por %p152, %p153
      %p155 = scmp.ne.s32.totalorder %s146, %s147
      %p156 = scmp.eq.s32.totalorder %s47, 0
      %p157 = por %p155, %p156
      %p158 = scmp.ne.s32.totalorder %s146, %s147
      %p159 = scmp.eq.s32.totalorder %s48, 1
      %p160 = por %p158, %p159
      %p162 = scmp.ne.s32.totalorder %s147, %s161
      %p163 = scmp.eq.s32.totalorder %s48, 0
      %p164 = por %p162, %p163
      %s166 = sadd.s32 %s165, 1
      %p169 = scmp.eq.s32.totalorder %s42, 1
      %p170 = scmp.ne.s32.totalorder %s165, %s167
      %p171 = scmp.eq.s32.totalorder %s42, 0
      %p172 = por %p170, %p171
      %p173 = scmp.ne.s32.totalorder %s165, %s167
      %p174 = scmp.eq.s32.totalorder %s47, 1
      %p175 = por %p173, %p174
      %p176 = scmp.ne.s32.totalorder %s167, %s168
      %p177 = scmp.eq.s32.totalorder %s47, 0
      %p178 = por %p176, %p177
      %p179 = scmp.ne.s32.totalorder %s167, %s168
      %p180 = scmp.eq.s32.totalorder %s48, 1
      %p181 = por %p179, %p180
      %p183 = scmp.ne.s32.totalorder %s168, %s182
      %p184 = scmp.eq.s32.totalorder %s48, 0
      %p185 = por %p183, %p184
      %s187 = sadd.s32 %s186, 1
      %p190 = scmp.eq.s32.totalorder %s42, 1
      %p191 = scmp.ne.s32.totalorder %s186, %s188
      %p192 = scmp.eq.s32.totalorder %s42, 0
      %p193 = por %p191, %p192
      %p194 = scmp.ne.s32.totalorder %s186, %s188
      %p195 = scmp.eq.s32.totalorder %s47, 1
      %p196 = por %p194, %p195
      %p197 = scmp.ne.s32.totalorder %s188, %s189
      %p198 = scmp.eq.s32.totalorder %s47, 0
      %p199 = por %p197, %p198
      %p200 = scmp.ne.s32.totalorder %s188, %s189
      %p201 = scmp.eq.s32.totalorder %s48, 1
      %p202 = por %p200, %p201
      %p204 = scmp.ne.s32.totalorder %s189, %s203
      %p205 = scmp.eq.s32.totalorder %s48, 0
      %p206 = por %p204, %p205
      %s208 = sadd.s32 %s207, 1
      %p211 = scmp.eq.s32.totalorder %s42, 1
      %p212 = scmp.ne.s32.totalorder %s207, %s209
      %p213 = scmp.eq.s32.totalorder %s42, 0
      %p214 = por %p212, %p213
      %p215 = scmp.ne.s32.totalorder %s207, %s209
      %p216 = scmp.eq.s32.totalorder %s47, 1
      %p217 = por %p215, %p216
      %p218 = scmp.ne.s32.totalorder %s209, %s210
      %p219 = scmp.eq.s32.totalorder %s47, 0
      %p220 = por %p218, %p219
      %p221 = scmp.ne.s32.totalorder %s209, %s210
      %p222 = scmp.eq.s32.totalorder %s48, 1
      %p223 = por %p221, %p222
      %p225 = scmp.ne.s32.totalorder %s210, %s224
      %p226 = scmp.eq.s32.totalorder %s48, 0
      %p227 = por %p225, %p226
      %s229 = sadd.s32 %s228, 1
      %p232 = scmp.eq.s32.totalorder %s42, 1
      %p233 = scmp.ne.s32.totalorder %s228, %s230
      %p234 = scmp.eq.s32.totalorder %s42, 0
      %p235 = por %p233, %p234
      %p236 = scmp.ne.s32.totalorder %s228, %s230
      %p237 = scmp.eq.s32.totalorder %s47, 1
      %p238 = por %p236, %p237
      %p239 = scmp.ne.s32.totalorder %s230, %s231
      %p240 = scmp.eq.s32.totalorder %s47, 0
      %p241 = por %p239, %p240
      %p242 = scmp.ne.s32.totalorder %s230, %s231
      %p243 = scmp.eq.s32.totalorder %s48, 1
      %p244 = por %p242, %p243
      %p246 = scmp.ne.s32.totalorder %s231, %s245
      %p247 = scmp.eq.s32.totalorder %s48, 0
      %p248 = por %p246, %p247
      %s250 = sadd.s32 %s249, 1
      %p253 = scmp.eq.s32.totalorder %s42, 1
      %p254 = scmp.ne.s32.totalorder %s249, %s251
      %p255 = scmp.eq.s32.totalorder %s42, 0
      %p256 = por %p254, %p255
      %p257 = scmp.ne.s32.totalorder %s249, %s251
      %p258 = scmp.eq.s32.totalorder %s47, 1
      %p259 = por %p257, %p258
      %p260 = scmp.ne.s32.totalorder %s251, %s252
      %p261 = scmp.eq.s32.totalorder %s47, 0
      %p262 = por %p260, %p261
      %p263 = scmp.ne.s32.totalorder %s251, %s252
      %p264 = scmp.eq.s32.totalorder %s48, 1
      %p265 = por %p263, %p264
      %p267 = scmp.ne.s32.totalorder %s252, %s266
      %p268 = scmp.eq.s32.totalorder %s48, 0
      %p269 = por %p267, %p268
      %s271 = sadd.s32 %s270, 1
      %p274 = scmp.eq.s32.totalorder %s42, 1
      %p275 = scmp.ne.s32.totalorder %s270, %s272
      %p276 = scmp.eq.s32.totalorder %s42, 0
      %p277 = por %p275, %p276
      %p278 = scmp.ne.s32.totalorder %s270, %s272
      %p279 = scmp.eq.s32.totalorder %s47, 1
      %p280 = por %p278, %p279
      %p281 = scmp.ne.s32.totalorder %s272, %s273
      %p282 = scmp.eq.s32.totalorder %s47, 0
      %p283 = por %p281, %p282
      %p284 = scmp.ne.s32.totalorder %s272, %s273
      %p285 = scmp.eq.s32.totalorder %s48, 1
      %p286 = por %p284, %p285
      %p288 = scmp.ne.s32.totalorder %s273, %s287
      %p289 = scmp.eq.s32.totalorder %s48, 0
      %p290 = por %p288, %p289
      %s292 = sadd.s32 %s291, 1
      %p295 = scmp.eq.s32.totalorder %s42, 1
      %p296 = scmp.ne.s32.totalorder %s291, %s293
      %p297 = scmp.eq.s32.totalorder %s42, 0
      %p298 = por %p296, %p297
      %p299 = scmp.ne.s32.totalorder %s291, %s293
      %p300 = scmp.eq.s32.totalorder %s47, 1
      %p301 = por %p299, %p300
      %p302 = scmp.ne.s32.totalorder %s293, %s294
      %p303 = scmp.eq.s32.totalorder %s47, 0
      %p304 = por %p302, %p303
      %p305 = scmp.ne.s32.totalorder %s293, %s294
      %p306 = scmp.eq.s32.totalorder %s48, 1
      %p307 = por %p305, %p306
      %p309 = scmp.ne.s32.totalorder %s294, %s308
      %p310 = scmp.eq.s32.totalorder %s48, 0
      %p311 = por %p309, %p310
      %s313 = sadd.s32 %s312, 1
      %p316 = scmp.eq.s32.totalorder %s42, 1
      %p317 = scmp.ne.s32.totalorder %s312, %s314
      %p318 = scmp.eq.s32.totalorder %s42, 0
      %p319 = por %p317, %p318
      %p320 = scmp.ne.s32.totalorder %s312, %s314
      %p321 = scmp.eq.s32.totalorder %s47, 1
      %p322 = por %p320, %p321
      %p323 = scmp.ne.s32.totalorder %s314, %s315
      %p324 = scmp.eq.s32.totalorder %s47, 0
      %p325 = por %p323, %p324
      %p326 = scmp.ne.s32.totalorder %s314, %s315
      %p327 = scmp.eq.s32.totalorder %s48, 1
      %p328 = por %p326, %p327
      %p330 = scmp.ne.s32.totalorder %s315, %s329
      %p331 = scmp.eq.s32.totalorder %s48, 0
      %p332 = por %p330, %p331
      %s334 = sadd.s32 %s333, 1
      %p337 = scmp.eq.s32.totalorder %s42, 1
      %p338 = scmp.ne.s32.totalorder %s333, %s335
      %p339 = scmp.eq.s32.totalorder %s42, 0
      %p340 = por %p338, %p339
      %p341 = scmp.ne.s32.totalorder %s333, %s335
      %p342 = scmp.eq.s32.totalorder %s47, 1
      %p343 = por %p341, %p342
      %p344 = scmp.ne.s32.totalorder %s335, %s336
      %p345 = scmp.eq.s32.totalorder %s47, 0
      %p346 = por %p344, %p345
      %p347 = scmp.ne.s32.totalorder %s335, %s336
      %p348 = scmp.eq.s32.totalorder %s48, 1
      %p349 = por %p347, %p348
      %p351 = scmp.ne.s32.totalorder %s336, %s350
      %p352 = scmp.eq.s32.totalorder %s48, 0
      %p353 = por %p351, %p352
      %s355 = sadd.s32 %s354, 1
      %p358 = scmp.eq.s32.totalorder %s42, 1
      %p359 = scmp.ne.s32.totalorder %s354, %s356
      %p360 = scmp.eq.s32.totalorder %s42, 0
      %p361 = por %p359, %p360
      %p362 = scmp.ne.s32.totalorder %s354, %s356
      %p363 = scmp.eq.s32.totalorder %s47, 1
      %p364 = por %p362, %p363
      %p365 = scmp.ne.s32.totalorder %s356, %s357
      %p366 = scmp.eq.s32.totalorder %s47, 0
      %p367 = por %p365, %p366
      %p368 = scmp.ne.s32.totalorder %s356, %s357
      %p369 = scmp.eq.s32.totalorder %s48, 1
      %p370 = por %p368, %p369
      %p372 = scmp.ne.s32.totalorder %s357, %s371
      %p373 = scmp.eq.s32.totalorder %s48, 0
      %p374 = por %p372, %p373
      %s376 = sadd.s32 %s375, 1
      %p379 = scmp.eq.s32.totalorder %s42, 1
      %p380 = scmp.ne.s32.totalorder %s375, %s377
      %p381 = scmp.eq.s32.totalorder %s42, 0
      %p382 = por %p380, %p381
      %p383 = scmp.ne.s32.totalorder %s375, %s377
      %p384 = scmp.eq.s32.totalorder %s47, 1
      %p385 = por %p383, %p384
      %p386 = scmp.ne.s32.totalorder %s377, %s378
      %p387 = scmp.eq.s32.totalorder %s47, 0
      %p388 = por %p386, %p387
      %p389 = scmp.ne.s32.totalorder %s377, %s378
      %p390 = scmp.eq.s32.totalorder %s48, 1
      %p391 = por %p389, %p390
      %p393 = scmp.ne.s32.totalorder %s378, %s392
      %p394 = scmp.eq.s32.totalorder %s48, 0
      %p395 = por %p393, %p394
      %s397 = sadd.s32 %s396, 1
      %p400 = scmp.eq.s32.totalorder %s42, 1
      %p401 = scmp.ne.s32.totalorder %s396, %s398
      %p402 = scmp.eq.s32.totalorder %s42, 0
      %p403 = por %p401, %p402
      %p404 = scmp.ne.s32.totalorder %s396, %s398
      %p405 = scmp.eq.s32.totalorder %s47, 1
      %p406 = por %p404, %p405
      %p407 = scmp.ne.s32.totalorder %s398, %s399
      %p408 = scmp.eq.s32.totalorder %s47, 0
      %p409 = por %p407, %p408
      %p410 = scmp.ne.s32.totalorder %s398, %s399
      %p411 = scmp.eq.s32.totalorder %s48, 1
      %p412 = por %p410, %p411
      %p414 = scmp.ne.s32.totalorder %s399, %s413
      %p415 = scmp.eq.s32.totalorder %s48, 0
      %p416 = por %p414, %p415
      %s418 = sadd.s32 %s417, 1
      %p421 = scmp.eq.s32.totalorder %s42, 1
      %p422 = scmp.ne.s32.totalorder %s417, %s419
      %p423 = scmp.eq.s32.totalorder %s42, 0
      %p424 = por %p422, %p423
      %p425 = scmp.ne.s32.totalorder %s417, %s419
      %p426 = scmp.eq.s32.totalorder %s47, 1
      %p427 = por %p425, %p426
      %p428 = scmp.ne.s32.totalorder %s419, %s420
      %p429 = scmp.eq.s32.totalorder %s47, 0
      %p430 = por %p428, %p429
      %p431 = scmp.ne.s32.totalorder %s419, %s420
      %p432 = scmp.eq.s32.totalorder %s48, 1
      %p433 = por %p431, %p432
      %p435 = scmp.ne.s32.totalorder %s420, %s434
      %p436 = scmp.eq.s32.totalorder %s48, 0
      %p437 = por %p435, %p436
      %s438 = ssub.s32 %s42, %s49
      %p439 = scmp.eq.s32.totalorder %s438, 0
      %s441 = sadd.s32 %s440, 1
      %s442 = scalar_select %p439, %s440, %s441
      %p445 = pneg %p439
      %p446 = scmp.eq.s32.totalorder %s42, 1
      %p447 = por %p445, %p446
      %p448 = scmp.ne.s32.totalorder %s440, %s443
      %p449 = scmp.eq.s32.totalorder %s42, 0
      %p450 = por %p448, %p449
      %p451 = scmp.ne.s32.totalorder %s440, %s443
      %p452 = scmp.eq.s32.totalorder %s47, 1
      %p453 = por %p451, %p452
      %p454 = scmp.ne.s32.totalorder %s443, %s444
      %p455 = scmp.eq.s32.totalorder %s47, 0
      %p456 = por %p454, %p455
      %p457 = scmp.ne.s32.totalorder %s443, %s444
      %p458 = scmp.eq.s32.totalorder %s48, 1
      %p459 = por %p457, %p458
      %p461 = scmp.ne.s32.totalorder %s444, %s460
      %p462 = scmp.eq.s32.totalorder %s48, 0
      %p463 = por %p461, %p462
      %s464 = ssub.s32 %s42, %s49
      %p465 = scmp.eq.s32.totalorder %s464, 0
      %s467 = sadd.s32 %s466, 1
      %s468 = scalar_select %p465, %s466, %s467
      %p471 = pneg %p465
      %p472 = scmp.eq.s32.totalorder %s42, 1
      %p473 = por %p471, %p472
      %p474 = scmp.ne.s32.totalorder %s466, %s469
      %p475 = scmp.eq.s32.totalorder %s42, 0
      %p476 = por %p474, %p475
      %p477 = scmp.ne.s32.totalorder %s466, %s469
      %p478 = scmp.eq.s32.totalorder %s47, 1
      %p479 = por %p477, %p478
      %p480 = scmp.ne.s32.totalorder %s469, %s470
      %p481 = scmp.eq.s32.totalorder %s47, 0
      %p482 = por %p480, %p481
      %p483 = scmp.ne.s32.totalorder %s469, %s470
      %p484 = scmp.eq.s32.totalorder %s48, 1
      %p485 = por %p483, %p484
      %p487 = scmp.ne.s32.totalorder %s470, %s486
      %p488 = scmp.eq.s32.totalorder %s48, 0
      %p489 = por %p487, %p488
      %p490 = scmp.le.s32.totalorder 1, %s42
      %p491 = scmp.lt.s32.totalorder %s42, 3
      %p492 = pnand %p490, %p491
      %p493 = pneg %p492
      // Predicated region
      $region9: #{tpu_custom_call.1} parent=5 // pred_check
        _
      $region10: #{tpu_custom_call.1} parent=5 // pred_check_branch
        %495 = sbr.rel (%p492) target = $region12
      $region11: #{tpu_custom_call.1} parent=5 // pred_region
        %s496 = ssub.s32 %s42, 1
        // Predicated region
        $region13: #{tpu_custom_call.1} parent=11 // pred_check
          %p497 = pneg %p115
        $region14: #{tpu_custom_call.1} parent=11 // pred_check_branch
          %499 = sbr.rel (%p497) target = $region16
        $region15: #{tpu_custom_call.1} parent=11 // pred_region
          %501 = vsyncadd [#allocation6], 0
          %s502 = sshll.u32 %s2, 4
          %s503 = int_to_ptr.hbm [resolvable:$true] %s502
          %s504 = sshll.u32 [#allocation7], 4
          %s505 = int_to_ptr.vmem [resolvable:$true] %s504
          %510 = dma.hbm_to_vmem [thread:$0]  %s503, 4096, %s505, [#allocation6], 256, 256, 16
        $region16: #{tpu_custom_call.1} parent=11 // pred_fallthru
          _
        // Predicated region
        $region17: #{tpu_custom_call.1} parent=11 // pred_check
          %p511 = pneg %p136
        $region18: #{tpu_custom_call.1} parent=11 // pred_check_branch
          %513 = sbr.rel (%p511) target = $region20
        $region19: #{tpu_custom_call.1} parent=11 // pred_region
          %515 = vsyncadd [#allocation9], 0
          %s516 = sshll.u32 %s3, 4
          %s517 = int_to_ptr.hbm [resolvable:$true] %s516
          %s518 = sshll.u32 [#allocation8], 4
          %s519 = int_to_ptr.vmem [resolvable:$true] %s518
          %524 = dma.hbm_to_vmem [thread:$0]  %s517, 4096, %s519, [#allocation9], 256, 256, 16
        $region20: #{tpu_custom_call.1} parent=11 // pred_fallthru
          _
        // Predicated region
        $region21: #{tpu_custom_call.1} parent=11 // pred_check
          %p525 = pneg %p157
        $region22: #{tpu_custom_call.1} parent=11 // pred_check_branch
          %527 = sbr.rel (%p525) target = $region24
        $region23: #{tpu_custom_call.1} parent=11 // pred_region
          %529 = vsyncadd [#allocation9], 0
          %s530 = sshll.u32 %s4, 4
          %s531 = int_to_ptr.hbm [resolvable:$true] %s530
          %s532 = sshll.u32 [#allocation10], 4
          %s533 = int_to_ptr.vmem [resolvable:$true] %s532
          %538 = dma.hbm_to_vmem [thread:$0]  %s531, 4096, %s533, [#allocation9], 256, 256, 16
        $region24: #{tpu_custom_call.1} parent=11 // pred_fallthru
          _
        // Predicated region
        $region25: #{tpu_custom_call.1} parent=11 // pred_check
          %p539 = pneg %p178
        $region26: #{tpu_custom_call.1} parent=11 // pred_check_branch
          %541 = sbr.rel (%p539) target = $region28
        $region27: #{tpu_custom_call.1} parent=11 // pred_region
          _
        $region28: #{tpu_custom_call.1} parent=11 // pred_fallthru
          _
        // Predicated region
        $region29: #{tpu_custom_call.1} parent=11 // pred_check
          %p542 = pneg %p199
        $region30: #{tpu_custom_call.1} parent=11 // pred_check_branch
          %544 = sbr.rel (%p542) target = $region32
        $region31: #{tpu_custom_call.1} parent=11 // pred_region
          %546 = vsyncadd [#allocation12], 0
          %s548 = sshll.u32 %s6, 4
          %s549 = int_to_ptr.hbm [resolvable:$true] %s548
          %s550 = sshll.u32 [#allocation11], 4
          %s551 = int_to_ptr.vmem [resolvable:$true] %s550
          %553 = dma.hbm_to_vmem [thread:$0]  %s549, 64, %s551, [#allocation12]
        $region32: #{tpu_custom_call.1} parent=11 // pred_fallthru
          _
        // Predicated region
        $region33: #{tpu_custom_call.1} parent=11 // pred_check
          %p554 = pneg %p220
        $region34: #{tpu_custom_call.1} parent=11 // pred_check_branch
          %556 = sbr.rel (%p554) target = $region36
        $region35: #{tpu_custom_call.1} parent=11 // pred_region
          %558 = vsyncadd [#allocation12], 0
          %s560 = sshll.u32 %s7, 4
          %s561 = int_to_ptr.hbm [resolvable:$true] %s560
          %s562 = sshll.u32 [#allocation13], 4
          %s563 = int_to_ptr.vmem [resolvable:$true] %s562
          %565 = dma.hbm_to_vmem [thread:$0]  %s561, 64, %s563, [#allocation12]
        $region36: #{tpu_custom_call.1} parent=11 // pred_fallthru
          _
        // Predicated region
        $region37: #{tpu_custom_call.1} parent=11 // pred_check
          %p566 = pneg %p241
        $region38: #{tpu_custom_call.1} parent=11 // pred_check_branch
          %568 = sbr.rel (%p566) target = $region40
        $region39: #{tpu_custom_call.1} parent=11 // pred_region
          %570 = vsyncadd [#allocation15], 0
          %s571 = sshll.u32 %s8, 4
          %s572 = int_to_ptr.hbm [resolvable:$true] %s571
          %s573 = sshll.u32 [#allocation14], 4
          %s574 = int_to_ptr.vmem [resolvable:$true] %s573
          %579 = dma.hbm_to_vmem [thread:$0]  %s572, 4096, %s574, [#allocation15], 64, 64, 4
        $region40: #{tpu_custom_call.1} parent=11 // pred_fallthru
          _
        // Predicated region
        $region41: #{tpu_custom_call.1} parent=11 // pred_check
          %p580 = pneg %p262
        $region42: #{tpu_custom_call.1} parent=11 // pred_check_branch
          %582 = sbr.rel (%p580) target = $region44
        $region43: #{tpu_custom_call.1} parent=11 // pred_region
          _
        $region44: #{tpu_custom_call.1} parent=11 // pred_fallthru
          _
        // Predicated region
        $region45: #{tpu_custom_call.1} parent=11 // pred_check
          %p583 = pneg %p283
        $region46: #{tpu_custom_call.1} parent=11 // pred_check_branch
          %585 = sbr.rel (%p583) target = $region48
        $region47: #{tpu_custom_call.1} parent=11 // pred_region
          %587 = vsyncadd [#allocation15], 0
          %s588 = sshll.u32 %s10, 4
          %s589 = int_to_ptr.hbm [resolvable:$true] %s588
          %s590 = sshll.u32 [#allocation16], 4
          %s591 = int_to_ptr.vmem [resolvable:$true] %s590
          %596 = dma.hbm_to_vmem [thread:$0]  %s589, 1024, %s591, [#allocation15], 64, 64, 4
        $region48: #{tpu_custom_call.1} parent=11 // pred_fallthru
          _
        // Predicated region
        $region49: #{tpu_custom_call.1} parent=11 // pred_check
          %p597 = pneg %p304
        $region50: #{tpu_custom_call.1} parent=11 // pred_check_branch
          %599 = sbr.rel (%p597) target = $region52
        $region51: #{tpu_custom_call.1} parent=11 // pred_region
          _
        $region52: #{tpu_custom_call.1} parent=11 // pred_fallthru
          _
        // Predicated region
        $region53: #{tpu_custom_call.1} parent=11 // pred_check
          %p600 = pneg %p325
        $region54: #{tpu_custom_call.1} parent=11 // pred_check_branch
          %602 = sbr.rel (%p600) target = $region56
        $region55: #{tpu_custom_call.1} parent=11 // pred_region
          %604 = vsyncadd [#allocation18], 0
          %s605 = sshll.u32 %s12, 4
          %s606 = int_to_ptr.hbm [resolvable:$true] %s605
          %s607 = sshll.u32 [#allocation17], 4
          %s608 = int_to_ptr.vmem [resolvable:$true] %s607
          %613 = dma.hbm_to_vmem [thread:$0]  %s606, 1024, %s608, [#allocation18], 64, 64, 4
        $region56: #{tpu_custom_call.1} parent=11 // pred_fallthru
          _
        // Predicated region
        $region57: #{tpu_custom_call.1} parent=11 // pred_check
          %p614 = pneg %p346
        $region58: #{tpu_custom_call.1} parent=11 // pred_check_branch
          %616 = sbr.rel (%p614) target = $region60
        $region59: #{tpu_custom_call.1} parent=11 // pred_region
          _
        $region60: #{tpu_custom_call.1} parent=11 // pred_fallthru
          _
        // Predicated region
        $region61: #{tpu_custom_call.1} parent=11 // pred_check
          %p617 = pneg %p367
        $region62: #{tpu_custom_call.1} parent=11 // pred_check_branch
          %619 = sbr.rel (%p617) target = $region64
        $region63: #{tpu_custom_call.1} parent=11 // pred_region
          _
        $region64: #{tpu_custom_call.1} parent=11 // pred_fallthru
          _
        // Predicated region
        $region65: #{tpu_custom_call.1} parent=11 // pred_check
          %p620 = pneg %p388
        $region66: #{tpu_custom_call.1} parent=11 // pred_check_branch
          %622 = sbr.rel (%p620) target = $region68
        $region67: #{tpu_custom_call.1} parent=11 // pred_region
          _
        $region68: #{tpu_custom_call.1} parent=11 // pred_fallthru
          _
        // Predicated region
        $region69: #{tpu_custom_call.1} parent=11 // pred_check
          %p623 = pneg %p409
        $region70: #{tpu_custom_call.1} parent=11 // pred_check_branch
          %625 = sbr.rel (%p623) target = $region72
        $region71: #{tpu_custom_call.1} parent=11 // pred_region
          _
        $region72: #{tpu_custom_call.1} parent=11 // pred_fallthru
          _
        // Predicated region
        $region73: #{tpu_custom_call.1} parent=11 // pred_check
          %p626 = pneg %p430
        $region74: #{tpu_custom_call.1} parent=11 // pred_check_branch
          %628 = sbr.rel (%p626) target = $region76
        $region75: #{tpu_custom_call.1} parent=11 // pred_region
          _
        $region76: #{tpu_custom_call.1} parent=11 // pred_fallthru
          _
      $region12: #{tpu_custom_call.1} parent=5 // pred_fallthru
        _
      %p629 = scmp.lt.s32.totalorder %s42, 2
      // Predicated region
      $region77: #{tpu_custom_call.1} parent=5 // pred_check
        %p630 = pneg %p629
      $region78: #{tpu_custom_call.1} parent=5 // pred_check_branch
        %632 = sbr.rel (%p630) target = $region80
      $region79: #{tpu_custom_call.1} parent=5 // pred_region
        // Predicated region
        $region81: #{tpu_custom_call.1} parent=79 // pred_check
          %p633 = pneg %p62
        $region82: #{tpu_custom_call.1} parent=79 // pred_check_branch
          %635 = sbr.rel (%p633) target = $region84
        $region83: #{tpu_custom_call.1} parent=79 // pred_region
          %s636 = sand.u32 %s52, 1
          %s637 = scalar_lea.sflag [#allocation3], %s636
          %s638 = sand.u32 %s52, 1
          %s639 = smul.addr %s638, 8
          %s640 = scalar_lea.vmem [#allocation2], %s639
          %642 = vsyncadd %s637, 0
          %s643 = smul.addr %s42, 8
          %s644 = scalar_lea.hbm %s0, %s643
          %s646 = sshll.u32 %s644, 4
          %s647 = int_to_ptr.hbm [resolvable:$true] %s646
          %s648 = sshll.u32 %s640, 4
          %s649 = int_to_ptr.vmem [resolvable:$true] %s648
          %651 = dma.hbm_to_vmem [thread:$0]  %s647, 128, %s649, %s637
        $region84: #{tpu_custom_call.1} parent=79 // pred_fallthru
          _
        // Predicated region
        $region85: #{tpu_custom_call.1} parent=79 // pred_check
          %p652 = pneg %p88
        $region86: #{tpu_custom_call.1} parent=79 // pred_check_branch
          %654 = sbr.rel (%p652) target = $region88
        $region87: #{tpu_custom_call.1} parent=79 // pred_region
          %s655 = sand.u32 %s42, 1
          %s656 = scalar_lea.sflag [#allocation6], %s655
          %s657 = sand.u32 %s78, 1
          %s658 = scalar_lea.vmem [#allocation5], %s657
          %660 = vsyncadd %s656, 0
          %s661 = scalar_lea.hbm %s1, %s42
          %s663 = sshll.u32 %s661, 4
          %s664 = int_to_ptr.hbm [resolvable:$true] %s663
          %s665 = sshll.u32 %s658, 4
          %s666 = int_to_ptr.vmem [resolvable:$true] %s665
          %668 = dma.hbm_to_vmem [thread:$0]  %s664, 16, %s666, %s656
        $region88: #{tpu_custom_call.1} parent=79 // pred_fallthru
          _
      $region80: #{tpu_custom_call.1} parent=5 // pred_fallthru
        _
      %p669 = scmp.le.s32.totalorder 1, %s42
      %p670 = scmp.lt.s32.totalorder %s42, 3
      %p671 = pnand %p669, %p670
      %p672 = pneg %p671
      // Predicated region
      $region89: #{tpu_custom_call.1} parent=5 // pred_check
        _
      $region90: #{tpu_custom_call.1} parent=5 // pred_check_branch
        %674 = sbr.rel (%p671) target = $region92
      $region91: #{tpu_custom_call.1} parent=5 // pred_region
        %s675 = ssub.s32 %s42, 1
        %s676 = sand.u32 %s55, 1
        %s677 = scalar_lea.sflag [#allocation3], %s676
        %s678 = sand.u32 %s55, 1
        %s679 = smul.addr %s678, 8
        %s680 = scalar_lea.vmem [#allocation2], %s679
        // Predicated region
        $region93: #{tpu_custom_call.1} parent=91 // pred_check
          %p681 = pneg %p68
        $region94: #{tpu_custom_call.1} parent=91 // pred_check_branch
          %683 = sbr.rel (%p681) target = $region96
        $region95: #{tpu_custom_call.1} parent=91 // pred_region
          %685 = dma.done %s677, 128
        $region96: #{tpu_custom_call.1} parent=91 // pred_fallthru
          _
        %s686 = sand.u32 %s47, 1
        %s687 = scalar_lea.sflag [#allocation6], %s686
        %s688 = sand.u32 %s81, 1
        %s689 = scalar_lea.vmem [#allocation5], %s688
        // Predicated region
        $region97: #{tpu_custom_call.1} parent=91 // pred_check
          %p690 = pneg %p94
        $region98: #{tpu_custom_call.1} parent=91 // pred_check_branch
          %692 = sbr.rel (%p690) target = $region100
        $region99: #{tpu_custom_call.1} parent=91 // pred_region
          %694 = dma.done %s687, 16
        $region100: #{tpu_custom_call.1} parent=91 // pred_fallthru
          _
        // Predicated region
        $region101: #{tpu_custom_call.1} parent=91 // pred_check
          %p695 = pneg %p115
        $region102: #{tpu_custom_call.1} parent=91 // pred_check_branch
          %697 = sbr.rel (%p695) target = $region104
        $region103: #{tpu_custom_call.1} parent=91 // pred_region
          %699 = dma.done [#allocation6], 4096
        $region104: #{tpu_custom_call.1} parent=91 // pred_fallthru
          _
        // Predicated region
        $region105: #{tpu_custom_call.1} parent=91 // pred_check
          %p700 = pneg %p136
        $region106: #{tpu_custom_call.1} parent=91 // pred_check_branch
          %702 = sbr.rel (%p700) target = $region108
        $region107: #{tpu_custom_call.1} parent=91 // pred_region
          %704 = dma.done [#allocation9], 4096
        $region108: #{tpu_custom_call.1} parent=91 // pred_fallthru
          _
        // Predicated region
        $region109: #{tpu_custom_call.1} parent=91 // pred_check
          %p705 = pneg %p157
        $region110: #{tpu_custom_call.1} parent=91 // pred_check_branch
          %707 = sbr.rel (%p705) target = $region112
        $region111: #{tpu_custom_call.1} parent=91 // pred_region
          %709 = dma.done [#allocation9], 4096
        $region112: #{tpu_custom_call.1} parent=91 // pred_fallthru
          _
        // Predicated region
        $region113: #{tpu_custom_call.1} parent=91 // pred_check
          %p710 = pneg %p199
        $region114: #{tpu_custom_call.1} parent=91 // pred_check_branch
          %712 = sbr.rel (%p710) target = $region116
        $region115: #{tpu_custom_call.1} parent=91 // pred_region
          %714 = dma.done [#allocation12], 64
        $region116: #{tpu_custom_call.1} parent=91 // pred_fallthru
          _
        // Predicated region
        $region117: #{tpu_custom_call.1} parent=91 // pred_check
          %p715 = pneg %p220
        $region118: #{tpu_custom_call.1} parent=91 // pred_check_branch
          %717 = sbr.rel (%p715) target = $region120
        $region119: #{tpu_custom_call.1} parent=91 // pred_region
          %719 = dma.done [#allocation12], 64
        $region120: #{tpu_custom_call.1} parent=91 // pred_fallthru
          _
        // Predicated region
        $region121: #{tpu_custom_call.1} parent=91 // pred_check
          %p720 = pneg %p241
        $region122: #{tpu_custom_call.1} parent=91 // pred_check_branch
          %722 = sbr.rel (%p720) target = $region124
        $region123: #{tpu_custom_call.1} parent=91 // pred_region
          %724 = dma.done [#allocation15], 4096
        $region124: #{tpu_custom_call.1} parent=91 // pred_fallthru
          _
        // Predicated region
        $region125: #{tpu_custom_call.1} parent=91 // pred_check
          %p725 = pneg %p283
        $region126: #{tpu_custom_call.1} parent=91 // pred_check_branch
          %727 = sbr.rel (%p725) target = $region128
        $region127: #{tpu_custom_call.1} parent=91 // pred_region
          %729 = dma.done [#allocation15], 1024
        $region128: #{tpu_custom_call.1} parent=91 // pred_fallthru
          _
        // Predicated region
        $region129: #{tpu_custom_call.1} parent=91 // pred_check
          %p730 = pneg %p325
        $region130: #{tpu_custom_call.1} parent=91 // pred_check_branch
          %732 = sbr.rel (%p730) target = $region132
        $region131: #{tpu_custom_call.1} parent=91 // pred_region
          %734 = dma.done [#allocation18], 1024
        $region132: #{tpu_custom_call.1} parent=91 // pred_fallthru
          _
        %s735 = sand.u32 %s55, 1
        %s736 = scalar_lea.sflag [#allocation3], %s735
        %s737 = sand.u32 %s55, 1
        %s738 = smul.addr %s737, 8
        %s739 = scalar_lea.vmem [#allocation2], %s738
        %p740 = pneg %p68
        %p741 = pneg %p65
        %s742 = sand.u32 %s47, 1
        %s743 = scalar_lea.sflag [#allocation6], %s742
        %s744 = sand.u32 %s81, 1
        %s745 = scalar_lea.vmem [#allocation5], %s744
        %p746 = pneg %p94
        %p747 = pneg %p91
        %p748 = pneg %p115
        %p749 = pneg %p112
        %p750 = pneg %p136
        %p751 = pneg %p133
        %p752 = pneg %p157
        %p753 = pneg %p154
        %p754 = pneg %p178
        %p755 = pneg %p175
        %p756 = pneg %p199
        %p757 = pneg %p196
        %p758 = pneg %p220
        %p759 = pneg %p217
        %p760 = pneg %p241
        %p761 = pneg %p238
        %p762 = pneg %p262
        %p763 = pneg %p259
        %p764 = pneg %p283
        %p765 = pneg %p280
        %p766 = pneg %p304
        %p767 = pneg %p301
        %p768 = pneg %p325
        %p769 = pneg %p322
        %p770 = pneg %p346
        %p771 = pneg %p343
        %p772 = pneg %p367
        %p773 = pneg %p364
        %p774 = pneg %p388
        %p775 = pneg %p385
        %p776 = pneg %p409
        %p777 = pneg %p406
        %p778 = pneg %p430
        %p779 = pneg %p427
        %p780 = pneg %p456
        %p781 = pneg %p453
        %s782 = sand.u32 %s443, 1
        %s783 = scalar_lea.sflag [#allocation4], %s782
        %s784 = sand.u32 %s443, 1
        %s785 = smul.addr %s784, 8
        %s786 = scalar_lea.vmem [#allocation19], %s785
        %p787 = pneg %p482
        %p788 = pneg %p479
        %s789 = sand.u32 %s469, 1
        %s790 = scalar_lea.sflag [#allocation21], %s789
        %s791 = sand.u32 %s469, 1
        %s792 = smul.addr %s791, 8
        %s793 = scalar_lea.vmem [#allocation20], %s792
        %v795 = vlaneseq
        %v796 = vand.u32 %v795, 127
        %vm797 = vcmp.lt.s32.totalorder %v796, 32
        %v798 = vsel %vm797, 1, 0
        %v799 = vcvt.s32.f32 %v798
        %v800 = vld [vmem:[%s680] sm:$0xff]
        %v801 = vpack.c.bf16 %v800, %v800
        %v802 = vld [vmem:[%s689] sm:$0x1]
        %v803 = vld [vmem:[#allocation7] sm:$0xff]
        %v804 = vld [vmem:[#allocation7 + $0x8] sm:$0xff]
        %v805 = vld [vmem:[#allocation7 + $0x10] sm:$0xff]
        %v806 = vld [vmem:[#allocation7 + $0x18] sm:$0xff]
        %v807 = vld [vmem:[#allocation7 + $0x20] sm:$0xff]
        %v808 = vld [vmem:[#allocation7 + $0x28] sm:$0xff]
        %v809 = vld [vmem:[#allocation7 + $0x30] sm:$0xff]
        %v810 = vld [vmem:[#allocation7 + $0x38] sm:$0xff]
        %v811 = vld [vmem:[#allocation7 + $0x40] sm:$0xff]
        %v812 = vld [vmem:[#allocation7 + $0x48] sm:$0xff]
        %v813 = vld [vmem:[#allocation7 + $0x50] sm:$0xff]
        %v814 = vld [vmem:[#allocation7 + $0x58] sm:$0xff]
        %v815 = vld [vmem:[#allocation7 + $0x60] sm:$0xff]
        %v816 = vld [vmem:[#allocation7 + $0x68] sm:$0xff]
        %v817 = vld [vmem:[#allocation7 + $0x70] sm:$0xff]
        %v818 = vld [vmem:[#allocation7 + $0x78] sm:$0xff]
        %v819 = vld [vmem:[#allocation7 + $0x80] sm:$0xff]
        %v820 = vld [vmem:[#allocation7 + $0x88] sm:$0xff]
        %v821 = vld [vmem:[#allocation7 + $0x90] sm:$0xff]
        %v822 = vld [vmem:[#allocation7 + $0x98] sm:$0xff]
        %v823 = vld [vmem:[#allocation7 + $0xa0] sm:$0xff]
        %v824 = vld [vmem:[#allocation7 + $0xa8] sm:$0xff]
        %v825 = vld [vmem:[#allocation7 + $0xb0] sm:$0xff]
        %v826 = vld [vmem:[#allocation7 + $0xb8] sm:$0xff]
        %v827 = vld [vmem:[#allocation7 + $0xc0] sm:$0xff]
        %v828 = vld [vmem:[#allocation7 + $0xc8] sm:$0xff]
        %v829 = vld [vmem:[#allocation7 + $0xd0] sm:$0xff]
        %v830 = vld [vmem:[#allocation7 + $0xd8] sm:$0xff]
        %v831 = vld [vmem:[#allocation7 + $0xe0] sm:$0xff]
        %v832 = vld [vmem:[#allocation7 + $0xe8] sm:$0xff]
        %v833 = vld [vmem:[#allocation7 + $0xf0] sm:$0xff]
        %v834 = vld [vmem:[#allocation7 + $0xf8] sm:$0xff]
        %v835 = vld [vmem:[%s5] sm:$0xf]
        %v837 = vperm.slane %v835, 0
        %v838 = vperm.slane %v835, 1
        %v839 = vperm.slane %v835, 2
        %v840 = vperm.slane %v835, 3
        %v877 = vunpack.c.l.b16 %v803
        %v878 = vunpack.c.h.b16 %v803
        %v879 = vunpack.c.l.b16 %v804
        %v880 = vunpack.c.h.b16 %v804
        %v881 = vunpack.c.l.b16 %v805
        %v882 = vunpack.c.h.b16 %v805
        %v883 = vunpack.c.l.b16 %v806
        %v884 = vunpack.c.h.b16 %v806
        %v885 = vunpack.c.l.b16 %v807
        %v886 = vunpack.c.h.b16 %v807
        %v887 = vunpack.c.l.b16 %v808
        %v888 = vunpack.c.h.b16 %v808
        %v889 = vunpack.c.l.b16 %v809
        %v890 = vunpack.c.h.b16 %v809
        %v891 = vunpack.c.l.b16 %v810
        %v892 = vunpack.c.h.b16 %v810
        %v893 = vunpack.c.l.b16 %v811
        %v894 = vunpack.c.h.b16 %v811
        %v895 = vunpack.c.l.b16 %v812
        %v896 = vunpack.c.h.b16 %v812
        %v897 = vunpack.c.l.b16 %v813
        %v898 = vunpack.c.h.b16 %v813
        %v899 = vunpack.c.l.b16 %v814
        %v900 = vunpack.c.h.b16 %v814
        %v901 = vunpack.c.l.b16 %v815
        %v902 = vunpack.c.h.b16 %v815
        %v903 = vunpack.c.l.b16 %v816
        %v904 = vunpack.c.h.b16 %v816
        %v905 = vunpack.c.l.b16 %v817
        %v906 = vunpack.c.h.b16 %v817
        %v907 = vunpack.c.l.b16 %v818
        %v908 = vunpack.c.h.b16 %v818
        %v909 = vunpack.c.l.b16 %v819
        %v910 = vunpack.c.h.b16 %v819
        %v911 = vunpack.c.l.b16 %v820
        %v912 = vunpack.c.h.b16 %v820
        %v913 = vunpack.c.l.b16 %v821
        %v914 = vunpack.c.h.b16 %v821
        %v915 = vunpack.c.l.b16 %v822
        %v916 = vunpack.c.h.b16 %v822
        %v917 = vunpack.c.l.b16 %v823
        %v918 = vunpack.c.h.b16 %v823
        %v919 = vunpack.c.l.b16 %v824
        %v920 = vunpack.c.h.b16 %v824
        %v921 = vunpack.c.l.b16 %v825
        %v922 = vunpack.c.h.b16 %v825
        %v923 = vunpack.c.l.b16 %v826
        %v924 = vunpack.c.h.b16 %v826
        %v925 = vunpack.c.l.b16 %v827
        %v926 = vunpack.c.h.b16 %v827
        %v927 = vunpack.c.l.b16 %v828
        %v928 = vunpack.c.h.b16 %v828
        %v929 = vunpack.c.l.b16 %v829
        %v930 = vunpack.c.h.b16 %v829
        %v931 = vunpack.c.l.b16 %v830
        %v932 = vunpack.c.h.b16 %v830
        %v933 = vunpack.c.l.b16 %v831
        %v934 = vunpack.c.h.b16 %v831
        %v935 = vunpack.c.l.b16 %v832
        %v936 = vunpack.c.h.b16 %v832
        %v937 = vunpack.c.l.b16 %v833
        %v938 = vunpack.c.h.b16 %v833
        %v939 = vunpack.c.l.b16 %v834
        %v940 = vunpack.c.h.b16 %v834
        %v941 = vpack.c.b16 %v881, %v877
        %v942 = vpack.c.b16 %v882, %v878
        %v943 = vpack.c.b16 %v883, %v879
        %v944 = vpack.c.b16 %v884, %v880
        %v945 = vpack.c.b16 %v889, %v885
        %v946 = vpack.c.b16 %v890, %v886
        %v947 = vpack.c.b16 %v891, %v887
        %v948 = vpack.c.b16 %v892, %v888
        %v949 = vpack.c.b16 %v897, %v893
        %v950 = vpack.c.b16 %v898, %v894
        %v951 = vpack.c.b16 %v899, %v895
        %v952 = vpack.c.b16 %v900, %v896
        %v953 = vpack.c.b16 %v905, %v901
        %v954 = vpack.c.b16 %v906, %v902
        %v955 = vpack.c.b16 %v907, %v903
        %v956 = vpack.c.b16 %v908, %v904
        %v957 = vpack.c.b16 %v913, %v909
        %v958 = vpack.c.b16 %v914, %v910
        %v959 = vpack.c.b16 %v915, %v911
        %v960 = vpack.c.b16 %v916, %v912
        %v961 = vpack.c.b16 %v921, %v917
        %v962 = vpack.c.b16 %v922, %v918
        %v963 = vpack.c.b16 %v923, %v919
        %v964 = vpack.c.b16 %v924, %v920
        %v965 = vpack.c.b16 %v929, %v925
        %v966 = vpack.c.b16 %v930, %v926
        %v967 = vpack.c.b16 %v931, %v927
        %v968 = vpack.c.b16 %v932, %v928
        %v969 = vpack.c.b16 %v937, %v933
        %v970 = vpack.c.b16 %v938, %v934
        %v971 = vpack.c.b16 %v939, %v935
        %v972 = vpack.c.b16 %v940, %v936
        %1005 = vmatpush.bf16.msra.mxu0 %v969
        %1006 = vmatpush.bf16.msra.mxu0 %v965
        %1007 = vmatpush.bf16.msra.mxu0 %v961
        %1008 = vmatpush.bf16.msra.mxu0 %v957
        %1009 = vmatpush.bf16.msra.mxu0 %v953
        %1010 = vmatpush.bf16.msra.mxu0 %v949
        %1011 = vmatpush.bf16.msra.mxu0 %v945
        %1012 = vmatpush.bf16.msra.mxu0 %v941
        %1013 = vmatmul.bf16.gmra.mxu0 %v801
        %v1014 = vpop.f32.mrf.mxu0
        %v1015 = vadd.f32 %v837, %v1014
        %v1016 = vpop.f32.mrf.mxu0
        %1017 = vdwg.mxu0
        %1018 = vmatpush.bf16.msra.mxu0 %v970
        %1019 = vmatpush.bf16.msra.mxu0 %v966
        %1020 = vmatpush.bf16.msra.mxu0 %v962
        %1021 = vmatpush.bf16.msra.mxu0 %v958
        %1022 = vmatpush.bf16.msra.mxu0 %v954
        %1023 = vmatpush.bf16.msra.mxu0 %v950
        %1024 = vmatpush.bf16.msra.mxu0 %v946
        %1025 = vmatpush.bf16.msra.mxu0 %v942
        %1026 = vmatmul.bf16.gmra.mxu0 %v801
        %v1027 = vpop.f32.mrf.mxu0
        %v1028 = vadd.f32 %v838, %v1027
        %v1029 = vpop.f32.mrf.mxu0
        %1030 = vdwg.mxu0
        %1031 = vmatpush.bf16.msra.mxu0 %v971
        %1032 = vmatpush.bf16.msra.mxu0 %v967
        %1033 = vmatpush.bf16.msra.mxu0 %v963
        %1034 = vmatpush.bf16.msra.mxu0 %v959
        %1035 = vmatpush.bf16.msra.mxu0 %v955
        %1036 = vmatpush.bf16.msra.mxu0 %v951
        %1037 = vmatpush.bf16.msra.mxu0 %v947
        %1038 = vmatpush.bf16.msra.mxu0 %v943
        %1039 = vmatmul.bf16.gmra.mxu0 %v801
        %v1040 = vpop.f32.mrf.mxu0
        %v1041 = vadd.f32 %v839, %v1040
        %v1042 = vpop.f32.mrf.mxu0
        %1043 = vdwg.mxu0
        %1044 = vmatpush.bf16.msra.mxu0 %v972
        %1045 = vmatpush.bf16.msra.mxu0 %v968
        %1046 = vmatpush.bf16.msra.mxu0 %v964
        %1047 = vmatpush.bf16.msra.mxu0 %v960
        %1048 = vmatpush.bf16.msra.mxu0 %v956
        %1049 = vmatpush.bf16.msra.mxu0 %v952
        %1050 = vmatpush.bf16.msra.mxu0 %v948
        %1051 = vmatpush.bf16.msra.mxu0 %v944
        %1052 = vmatmul.bf16.gmra.mxu0 %v801
        %v1053 = vpop.f32.mrf.mxu0
        %v1054 = vadd.f32 %v840, %v1053
        %v1055 = vpop.f32.mrf.mxu0
        %1056 = vdwg.mxu0
        %v1057 = vld [vmem:[#allocation8] sm:$0xff]
        %v1058 = vld [vmem:[#allocation8 + $0x8] sm:$0xff]
        %v1059 = vld [vmem:[#allocation8 + $0x10] sm:$0xff]
        %v1060 = vld [vmem:[#allocation8 + $0x18] sm:$0xff]
        %v1061 = vld [vmem:[#allocation8 + $0x20] sm:$0xff]
        %v1062 = vld [vmem:[#allocation8 + $0x28] sm:$0xff]
        %v1063 = vld [vmem:[#allocation8 + $0x30] sm:$0xff]
        %v1064 = vld [vmem:[#allocation8 + $0x38] sm:$0xff]
        %v1065 = vld [vmem:[#allocation8 + $0x40] sm:$0xff]
        %v1066 = vld [vmem:[#allocation8 + $0x48] sm:$0xff]
        %v1067 = vld [vmem:[#allocation8 + $0x50] sm:$0xff]
        %v1068 = vld [vmem:[#allocation8 + $0x58] sm:$0xff]
        %v1069 = vld [vmem:[#allocation8 + $0x60] sm:$0xff]
        %v1070 = vld [vmem:[#allocation8 + $0x68] sm:$0xff]
        %v1071 = vld [vmem:[#allocation8 + $0x70] sm:$0xff]
        %v1072 = vld [vmem:[#allocation8 + $0x78] sm:$0xff]
        %v1073 = vld [vmem:[#allocation8 + $0x80] sm:$0xff]
        %v1074 = vld [vmem:[#allocation8 + $0x88] sm:$0xff]
        %v1075 = vld [vmem:[#allocation8 + $0x90] sm:$0xff]
        %v1076 = vld [vmem:[#allocation8 + $0x98] sm:$0xff]
        %v1077 = vld [vmem:[#allocation8 + $0xa0] sm:$0xff]
        %v1078 = vld [vmem:[#allocation8 + $0xa8] sm:$0xff]
        %v1079 = vld [vmem:[#allocation8 + $0xb0] sm:$0xff]
        %v1080 = vld [vmem:[#allocation8 + $0xb8] sm:$0xff]
        %v1081 = vld [vmem:[#allocation8 + $0xc0] sm:$0xff]
        %v1082 = vld [vmem:[#allocation8 + $0xc8] sm:$0xff]
        %v1083 = vld [vmem:[#allocation8 + $0xd0] sm:$0xff]
        %v1084 = vld [vmem:[#allocation8 + $0xd8] sm:$0xff]
        %v1085 = vld [vmem:[#allocation8 + $0xe0] sm:$0xff]
        %v1086 = vld [vmem:[#allocation8 + $0xe8] sm:$0xff]
        %v1087 = vld [vmem:[#allocation8 + $0xf0] sm:$0xff]
        %v1088 = vld [vmem:[#allocation8 + $0xf8] sm:$0xff]
        %v1089 = vld [vmem:[#allocation11] sm:$0xf]
        %v1091 = vperm.slane %v1089, 0
        %v1092 = vperm.slane %v1089, 1
        %v1093 = vperm.slane %v1089, 2
        %v1094 = vperm.slane %v1089, 3
        %v1131 = vunpack.c.l.b16 %v1057
        %v1132 = vunpack.c.h.b16 %v1057
        %v1133 = vunpack.c.l.b16 %v1058
        %v1134 = vunpack.c.h.b16 %v1058
        %v1135 = vunpack.c.l.b16 %v1059
        %v1136 = vunpack.c.h.b16 %v1059
        %v1137 = vunpack.c.l.b16 %v1060
        %v1138 = vunpack.c.h.b16 %v1060
        %v1139 = vunpack.c.l.b16 %v1061
        %v1140 = vunpack.c.h.b16 %v1061
        %v1141 = vunpack.c.l.b16 %v1062
        %v1142 = vunpack.c.h.b16 %v1062
        %v1143 = vunpack.c.l.b16 %v1063
        %v1144 = vunpack.c.h.b16 %v1063
        %v1145 = vunpack.c.l.b16 %v1064
        %v1146 = vunpack.c.h.b16 %v1064
        %v1147 = vunpack.c.l.b16 %v1065
        %v1148 = vunpack.c.h.b16 %v1065
        %v1149 = vunpack.c.l.b16 %v1066
        %v1150 = vunpack.c.h.b16 %v1066
        %v1151 = vunpack.c.l.b16 %v1067
        %v1152 = vunpack.c.h.b16 %v1067
        %v1153 = vunpack.c.l.b16 %v1068
        %v1154 = vunpack.c.h.b16 %v1068
        %v1155 = vunpack.c.l.b16 %v1069
        %v1156 = vunpack.c.h.b16 %v1069
        %v1157 = vunpack.c.l.b16 %v1070
        %v1158 = vunpack.c.h.b16 %v1070
        %v1159 = vunpack.c.l.b16 %v1071
        %v1160 = vunpack.c.h.b16 %v1071
        %v1161 = vunpack.c.l.b16 %v1072
        %v1162 = vunpack.c.h.b16 %v1072
        %v1163 = vunpack.c.l.b16 %v1073
        %v1164 = vunpack.c.h.b16 %v1073
        %v1165 = vunpack.c.l.b16 %v1074
        %v1166 = vunpack.c.h.b16 %v1074
        %v1167 = vunpack.c.l.b16 %v1075
        %v1168 = vunpack.c.h.b16 %v1075
        %v1169 = vunpack.c.l.b16 %v1076
        %v1170 = vunpack.c.h.b16 %v1076
        %v1171 = vunpack.c.l.b16 %v1077
        %v1172 = vunpack.c.h.b16 %v1077
        %v1173 = vunpack.c.l.b16 %v1078
        %v1174 = vunpack.c.h.b16 %v1078
        %v1175 = vunpack.c.l.b16 %v1079
        %v1176 = vunpack.c.h.b16 %v1079
        %v1177 = vunpack.c.l.b16 %v1080
        %v1178 = vunpack.c.h.b16 %v1080
        %v1179 = vunpack.c.l.b16 %v1081
        %v1180 = vunpack.c.h.b16 %v1081
        %v1181 = vunpack.c.l.b16 %v1082
        %v1182 = vunpack.c.h.b16 %v1082
        %v1183 = vunpack.c.l.b16 %v1083
        %v1184 = vunpack.c.h.b16 %v1083
        %v1185 = vunpack.c.l.b16 %v1084
        %v1186 = vunpack.c.h.b16 %v1084
        %v1187 = vunpack.c.l.b16 %v1085
        %v1188 = vunpack.c.h.b16 %v1085
        %v1189 = vunpack.c.l.b16 %v1086
        %v1190 = vunpack.c.h.b16 %v1086
        %v1191 = vunpack.c.l.b16 %v1087
        %v1192 = vunpack.c.h.b16 %v1087
        %v1193 = vunpack.c.l.b16 %v1088
        %v1194 = vunpack.c.h.b16 %v1088
        %v1195 = vpack.c.b16 %v1135, %v1131
        %v1196 = vpack.c.b16 %v1136, %v1132
        %v1197 = vpack.c.b16 %v1137, %v1133
        %v1198 = vpack.c.b16 %v1138, %v1134
        %v1199 = vpack.c.b16 %v1143, %v1139
        %v1200 = vpack.c.b16 %v1144, %v1140
        %v1201 = vpack.c.b16 %v1145, %v1141
        %v1202 = vpack.c.b16 %v1146, %v1142
        %v1203 = vpack.c.b16 %v1151, %v1147
        %v1204 = vpack.c.b16 %v1152, %v1148
        %v1205 = vpack.c.b16 %v1153, %v1149
        %v1206 = vpack.c.b16 %v1154, %v1150
        %v1207 = vpack.c.b16 %v1159, %v1155
        %v1208 = vpack.c.b16 %v1160, %v1156
        %v1209 = vpack.c.b16 %v1161, %v1157
        %v1210 = vpack.c.b16 %v1162, %v1158
        %v1211 = vpack.c.b16 %v1167, %v1163
        %v1212 = vpack.c.b16 %v1168, %v1164
        %v1213 = vpack.c.b16 %v1169, %v1165
        %v1214 = vpack.c.b16 %v1170, %v1166
        %v1215 = vpack.c.b16 %v1175, %v1171
        %v1216 = vpack.c.b16 %v1176, %v1172
        %v1217 = vpack.c.b16 %v1177, %v1173
        %v1218 = vpack.c.b16 %v1178, %v1174
        %v1219 = vpack.c.b16 %v1183, %v1179
        %v1220 = vpack.c.b16 %v1184, %v1180
        %v1221 = vpack.c.b16 %v1185, %v1181
        %v1222 = vpack.c.b16 %v1186, %v1182
        %v1223 = vpack.c.b16 %v1191, %v1187
        %v1224 = vpack.c.b16 %v1192, %v1188
        %v1225 = vpack.c.b16 %v1193, %v1189
        %v1226 = vpack.c.b16 %v1194, %v1190
        %1259 = vmatpush.bf16.msra.mxu0 %v1223
        %1260 = vmatpush.bf16.msra.mxu0 %v1219
        %1261 = vmatpush.bf16.msra.mxu0 %v1215
        %1262 = vmatpush.bf16.msra.mxu0 %v1211
        %1263 = vmatpush.bf16.msra.mxu0 %v1207
        %1264 = vmatpush.bf16.msra.mxu0 %v1203
        %1265 = vmatpush.bf16.msra.mxu0 %v1199
        %1266 = vmatpush.bf16.msra.mxu0 %v1195
        %1267 = vmatmul.bf16.gmra.mxu0 %v801
        %v1268 = vpop.f32.mrf.mxu0
        %v1269 = vadd.f32 %v1091, %v1268
        %v1270 = vpop.f32.mrf.mxu0
        %1271 = vdwg.mxu0
        %1272 = vmatpush.bf16.msra.mxu0 %v1224
        %1273 = vmatpush.bf16.msra.mxu0 %v1220
        %1274 = vmatpush.bf16.msra.mxu0 %v1216
        %1275 = vmatpush.bf16.msra.mxu0 %v1212
        %1276 = vmatpush.bf16.msra.mxu0 %v1208
        %1277 = vmatpush.bf16.msra.mxu0 %v1204
        %1278 = vmatpush.bf16.msra.mxu0 %v1200
        %1279 = vmatpush.bf16.msra.mxu0 %v1196
        %1280 = vmatmul.bf16.gmra.mxu0 %v801
        %v1281 = vpop.f32.mrf.mxu0
        %v1282 = vadd.f32 %v1092, %v1281
        %v1283 = vpop.f32.mrf.mxu0
        %1284 = vdwg.mxu0
        %1285 = vmatpush.bf16.msra.mxu0 %v1225
        %1286 = vmatpush.bf16.msra.mxu0 %v1221
        %1287 = vmatpush.bf16.msra.mxu0 %v1217
        %1288 = vmatpush.bf16.msra.mxu0 %v1213
        %1289 = vmatpush.bf16.msra.mxu0 %v1209
        %1290 = vmatpush.bf16.msra.mxu0 %v1205
        %1291 = vmatpush.bf16.msra.mxu0 %v1201
        %1292 = vmatpush.bf16.msra.mxu0 %v1197
        %1293 = vmatmul.bf16.gmra.mxu0 %v801
        %v1294 = vpop.f32.mrf.mxu0
        %v1295 = vadd.f32 %v1093, %v1294
        %v1296 = vpop.f32.mrf.mxu0
        %1297 = vdwg.mxu0
        %1298 = vmatpush.bf16.msra.mxu0 %v1226
        %1299 = vmatpush.bf16.msra.mxu0 %v1222
        %1300 = vmatpush.bf16.msra.mxu0 %v1218
        %1301 = vmatpush.bf16.msra.mxu0 %v1214
        %1302 = vmatpush.bf16.msra.mxu0 %v1210
        %1303 = vmatpush.bf16.msra.mxu0 %v1206
        %1304 = vmatpush.bf16.msra.mxu0 %v1202
        %1305 = vmatpush.bf16.msra.mxu0 %v1198
        %1306 = vmatmul.bf16.gmra.mxu0 %v801
        %v1307 = vpop.f32.mrf.mxu0
        %v1308 = vadd.f32 %v1094, %v1307
        %v1309 = vpop.f32.mrf.mxu0
        %1310 = vdwg.mxu0
        %v1311 = vld [vmem:[#allocation10] sm:$0xff]
        %v1312 = vld [vmem:[#allocation10 + $0x8] sm:$0xff]
        %v1313 = vld [vmem:[#allocation10 + $0x10] sm:$0xff]
        %v1314 = vld [vmem:[#allocation10 + $0x18] sm:$0xff]
        %v1315 = vld [vmem:[#allocation10 + $0x20] sm:$0xff]
        %v1316 = vld [vmem:[#allocation10 + $0x28] sm:$0xff]
        %v1317 = vld [vmem:[#allocation10 + $0x30] sm:$0xff]
        %v1318 = vld [vmem:[#allocation10 + $0x38] sm:$0xff]
        %v1319 = vld [vmem:[#allocation10 + $0x40] sm:$0xff]
        %v1320 = vld [vmem:[#allocation10 + $0x48] sm:$0xff]
        %v1321 = vld [vmem:[#allocation10 + $0x50] sm:$0xff]
        %v1322 = vld [vmem:[#allocation10 + $0x58] sm:$0xff]
        %v1323 = vld [vmem:[#allocation10 + $0x60] sm:$0xff]
        %v1324 = vld [vmem:[#allocation10 + $0x68] sm:$0xff]
        %v1325 = vld [vmem:[#allocation10 + $0x70] sm:$0xff]
        %v1326 = vld [vmem:[#allocation10 + $0x78] sm:$0xff]
        %v1327 = vld [vmem:[#allocation10 + $0x80] sm:$0xff]
        %v1328 = vld [vmem:[#allocation10 + $0x88] sm:$0xff]
        %v1329 = vld [vmem:[#allocation10 + $0x90] sm:$0xff]
        %v1330 = vld [vmem:[#allocation10 + $0x98] sm:$0xff]
        %v1331 = vld [vmem:[#allocation10 + $0xa0] sm:$0xff]
        %v1332 = vld [vmem:[#allocation10 + $0xa8] sm:$0xff]
        %v1333 = vld [vmem:[#allocation10 + $0xb0] sm:$0xff]
        %v1334 = vld [vmem:[#allocation10 + $0xb8] sm:$0xff]
        %v1335 = vld [vmem:[#allocation10 + $0xc0] sm:$0xff]
        %v1336 = vld [vmem:[#allocation10 + $0xc8] sm:$0xff]
        %v1337 = vld [vmem:[#allocation10 + $0xd0] sm:$0xff]
        %v1338 = vld [vmem:[#allocation10 + $0xd8] sm:$0xff]
        %v1339 = vld [vmem:[#allocation10 + $0xe0] sm:$0xff]
        %v1340 = vld [vmem:[#allocation10 + $0xe8] sm:$0xff]
        %v1341 = vld [vmem:[#allocation10 + $0xf0] sm:$0xff]
        %v1342 = vld [vmem:[#allocation10 + $0xf8] sm:$0xff]
        %v1343 = vld [vmem:[#allocation13] sm:$0xf]
        %v1345 = vperm.slane %v1343, 0
        %v1346 = vperm.slane %v1343, 1
        %v1347 = vperm.slane %v1343, 2
        %v1348 = vperm.slane %v1343, 3
        %v1385 = vunpack.c.l.b16 %v1311
        %v1386 = vunpack.c.h.b16 %v1311
        %v1387 = vunpack.c.l.b16 %v1312
        %v1388 = vunpack.c.h.b16 %v1312
        %v1389 = vunpack.c.l.b16 %v1313
        %v1390 = vunpack.c.h.b16 %v1313
        %v1391 = vunpack.c.l.b16 %v1314
        %v1392 = vunpack.c.h.b16 %v1314
        %v1393 = vunpack.c.l.b16 %v1315
        %v1394 = vunpack.c.h.b16 %v1315
        %v1395 = vunpack.c.l.b16 %v1316
        %v1396 = vunpack.c.h.b16 %v1316
        %v1397 = vunpack.c.l.b16 %v1317
        %v1398 = vunpack.c.h.b16 %v1317
        %v1399 = vunpack.c.l.b16 %v1318
        %v1400 = vunpack.c.h.b16 %v1318
        %v1401 = vunpack.c.l.b16 %v1319
        %v1402 = vunpack.c.h.b16 %v1319
        %v1403 = vunpack.c.l.b16 %v1320
        %v1404 = vunpack.c.h.b16 %v1320
        %v1405 = vunpack.c.l.b16 %v1321
        %v1406 = vunpack.c.h.b16 %v1321
        %v1407 = vunpack.c.l.b16 %v1322
        %v1408 = vunpack.c.h.b16 %v1322
        %v1409 = vunpack.c.l.b16 %v1323
        %v1410 = vunpack.c.h.b16 %v1323
        %v1411 = vunpack.c.l.b16 %v1324
        %v1412 = vunpack.c.h.b16 %v1324
        %v1413 = vunpack.c.l.b16 %v1325
        %v1414 = vunpack.c.h.b16 %v1325
        %v1415 = vunpack.c.l.b16 %v1326
        %v1416 = vunpack.c.h.b16 %v1326
        %v1417 = vunpack.c.l.b16 %v1327
        %v1418 = vunpack.c.h.b16 %v1327
        %v1419 = vunpack.c.l.b16 %v1328
        %v1420 = vunpack.c.h.b16 %v1328
        %v1421 = vunpack.c.l.b16 %v1329
        %v1422 = vunpack.c.h.b16 %v1329
        %v1423 = vunpack.c.l.b16 %v1330
        %v1424 = vunpack.c.h.b16 %v1330
        %v1425 = vunpack.c.l.b16 %v1331
        %v1426 = vunpack.c.h.b16 %v1331
        %v1427 = vunpack.c.l.b16 %v1332
        %v1428 = vunpack.c.h.b16 %v1332
        %v1429 = vunpack.c.l.b16 %v1333
        %v1430 = vunpack.c.h.b16 %v1333
        %v1431 = vunpack.c.l.b16 %v1334
        %v1432 = vunpack.c.h.b16 %v1334
        %v1433 = vunpack.c.l.b16 %v1335
        %v1434 = vunpack.c.h.b16 %v1335
        %v1435 = vunpack.c.l.b16 %v1336
        %v1436 = vunpack.c.h.b16 %v1336
        %v1437 = vunpack.c.l.b16 %v1337
        %v1438 = vunpack.c.h.b16 %v1337
        %v1439 = vunpack.c.l.b16 %v1338
        %v1440 = vunpack.c.h.b16 %v1338
        %v1441 = vunpack.c.l.b16 %v1339
        %v1442 = vunpack.c.h.b16 %v1339
        %v1443 = vunpack.c.l.b16 %v1340
        %v1444 = vunpack.c.h.b16 %v1340
        %v1445 = vunpack.c.l.b16 %v1341
        %v1446 = vunpack.c.h.b16 %v1341
        %v1447 = vunpack.c.l.b16 %v1342
        %v1448 = vunpack.c.h.b16 %v1342
        %v1449 = vpack.c.b16 %v1389, %v1385
        %v1450 = vpack.c.b16 %v1390, %v1386
        %v1451 = vpack.c.b16 %v1391, %v1387
        %v1452 = vpack.c.b16 %v1392, %v1388
        %v1453 = vpack.c.b16 %v1397, %v1393
        %v1454 = vpack.c.b16 %v1398, %v1394
        %v1455 = vpack.c.b16 %v1399, %v1395
        %v1456 = vpack.c.b16 %v1400, %v1396
        %v1457 = vpack.c.b16 %v1405, %v1401
        %v1458 = vpack.c.b16 %v1406, %v1402
        %v1459 = vpack.c.b16 %v1407, %v1403
        %v1460 = vpack.c.b16 %v1408, %v1404
        %v1461 = vpack.c.b16 %v1413, %v1409
        %v1462 = vpack.c.b16 %v1414, %v1410
        %v1463 = vpack.c.b16 %v1415, %v1411
        %v1464 = vpack.c.b16 %v1416, %v1412
        %v1465 = vpack.c.b16 %v1421, %v1417
        %v1466 = vpack.c.b16 %v1422, %v1418
        %v1467 = vpack.c.b16 %v1423, %v1419
        %v1468 = vpack.c.b16 %v1424, %v1420
        %v1469 = vpack.c.b16 %v1429, %v1425
        %v1470 = vpack.c.b16 %v1430, %v1426
        %v1471 = vpack.c.b16 %v1431, %v1427
        %v1472 = vpack.c.b16 %v1432, %v1428
        %v1473 = vpack.c.b16 %v1437, %v1433
        %v1474 = vpack.c.b16 %v1438, %v1434
        %v1475 = vpack.c.b16 %v1439, %v1435
        %v1476 = vpack.c.b16 %v1440, %v1436
        %v1477 = vpack.c.b16 %v1445, %v1441
        %v1478 = vpack.c.b16 %v1446, %v1442
        %v1479 = vpack.c.b16 %v1447, %v1443
        %v1480 = vpack.c.b16 %v1448, %v1444
        %1513 = vmatpush.bf16.msra.mxu0 %v1477
        %1514 = vmatpush.bf16.msra.mxu0 %v1473
        %1515 = vmatpush.bf16.msra.mxu0 %v1469
        %1516 = vmatpush.bf16.msra.mxu0 %v1465
        %1517 = vmatpush.bf16.msra.mxu0 %v1461
        %1518 = vmatpush.bf16.msra.mxu0 %v1457
        %1519 = vmatpush.bf16.msra.mxu0 %v1453
        %1520 = vmatpush.bf16.msra.mxu0 %v1449
        %1521 = vmatmul.bf16.gmra.mxu0 %v801
        %v1522 = vpop.f32.mrf.mxu0
        %v1523 = vadd.f32 %v1345, %v1522
        %v1524 = vpop.f32.mrf.mxu0
        %1525 = vdwg.mxu0
        %1526 = vmatpush.bf16.msra.mxu0 %v1478
        %1527 = vmatpush.bf16.msra.mxu0 %v1474
        %1528 = vmatpush.bf16.msra.mxu0 %v1470
        %1529 = vmatpush.bf16.msra.mxu0 %v1466
        %1530 = vmatpush.bf16.msra.mxu0 %v1462
        %1531 = vmatpush.bf16.msra.mxu0 %v1458
        %1532 = vmatpush.bf16.msra.mxu0 %v1454
        %1533 = vmatpush.bf16.msra.mxu0 %v1450
        %1534 = vmatmul.bf16.gmra.mxu0 %v801
        %v1535 = vpop.f32.mrf.mxu0
        %v1536 = vadd.f32 %v1346, %v1535
        %v1537 = vpop.f32.mrf.mxu0
        %1538 = vdwg.mxu0
        %1539 = vmatpush.bf16.msra.mxu0 %v1479
        %1540 = vmatpush.bf16.msra.mxu0 %v1475
        %1541 = vmatpush.bf16.msra.mxu0 %v1471
        %1542 = vmatpush.bf16.msra.mxu0 %v1467
        %1543 = vmatpush.bf16.msra.mxu0 %v1463
        %1544 = vmatpush.bf16.msra.mxu0 %v1459
        %1545 = vmatpush.bf16.msra.mxu0 %v1455
        %1546 = vmatpush.bf16.msra.mxu0 %v1451
        %1547 = vmatmul.bf16.gmra.mxu0 %v801
        %v1548 = vpop.f32.mrf.mxu0
        %v1549 = vadd.f32 %v1347, %v1548
        %v1550 = vpop.f32.mrf.mxu0
        %1551 = vdwg.mxu0
        %1552 = vmatpush.bf16.msra.mxu0 %v1480
        %1553 = vmatpush.bf16.msra.mxu0 %v1476
        %1554 = vmatpush.bf16.msra.mxu0 %v1472
        %1555 = vmatpush.bf16.msra.mxu0 %v1468
        %1556 = vmatpush.bf16.msra.mxu0 %v1464
        %1557 = vmatpush.bf16.msra.mxu0 %v1460
        %1558 = vmatpush.bf16.msra.mxu0 %v1456
        %1559 = vmatpush.bf16.msra.mxu0 %v1452
        %1560 = vmatmul.bf16.gmra.mxu0 %v801
        %v1561 = vpop.f32.mrf.mxu0
        %v1562 = vadd.f32 %v1348, %v1561
        %v1563 = vpop.f32.mrf.mxu0
        %1564 = vdwg.mxu0
        %v1565 = vpack.c.bf16 %v1028, %v1015
        %v1566 = vpack.c.bf16 %v1054, %v1041
        %v1568 = vrot.slane %v1565, 4
        %v1570 = vrot.slane %v1566, 4
        %v1573 = vpack.i.b16 %v1568, %v1565
        %v1574 = vshrl.u32 %v1565, 16
        %v1575 = vshrl.u32 %v1568, 16
        %v1576 = vpack.i.b16 %v1575, %v1574
        %v1579 = vpack.i.b16 %v1570, %v1566
        %v1580 = vshrl.u32 %v1566, 16
        %v1581 = vshrl.u32 %v1570, 16
        %v1582 = vpack.i.b16 %v1581, %v1580
        %v1585 = vunpack.c.l.s4 1983009808
        %v1586 = vunpack.c.0.s8 %v1585
        %v1587 = vperm.slane %v1573, %v1586
        %v1590 = vunpack.c.l.s4 1983009808
        %v1591 = vunpack.c.0.s8 %v1590
        %v1592 = vperm.slane %v1579, %v1591
        %v1593 = vrot.slane %v1592, 4
        %vm1594 = vcmask 1047556
        %v1595 = vsel %vm1594, %v1593, %v1587
        %v1596 = vrot.slane %v1587, 4
        %v1597 = vsel %vm1594, %v1592, %v1596
        %v1599 = vunpack.c.l.s4 1934713408
        %v1600 = vunpack.c.0.s8 %v1599
        %v1601 = vperm.slane %v1595, %v1600
        %v1603 = vunpack.c.l.s4 1934713408
        %v1604 = vunpack.c.0.s8 %v1603
        %v1605 = vperm.slane %v1597, %v1604
        %v1606 = vrot.slane %v1601, 4
        %v1607 = vsel %vm1594, 0, %v1606
        %v1608 = vrot.slane %v1605, 4
        %v1609 = vsel %vm1594, 0, %v1608
        %v1612 = vunpack.c.l.s4 1983009808
        %v1613 = vunpack.c.0.s8 %v1612
        %v1614 = vperm.slane %v1576, %v1613
        %v1617 = vunpack.c.l.s4 1983009808
        %v1618 = vunpack.c.0.s8 %v1617
        %v1619 = vperm.slane %v1582, %v1618
        %v1620 = vrot.slane %v1619, 4
        %v1621 = vsel %vm1594, %v1620, %v1614
        %v1622 = vrot.slane %v1614, 4
        %v1623 = vsel %vm1594, %v1619, %v1622
        %v1625 = vunpack.c.l.s4 1934713408
        %v1626 = vunpack.c.0.s8 %v1625
        %v1627 = vperm.slane %v1621, %v1626
        %v1629 = vunpack.c.l.s4 1934713408
        %v1630 = vunpack.c.0.s8 %v1629
        %v1631 = vperm.slane %v1623, %v1630
        %v1632 = vrot.slane %v1627, 4
        %v1633 = vsel %vm1594, 0, %v1632
        %v1634 = vrot.slane %v1631, 4
        %v1635 = vsel %vm1594, 0, %v1634
        %v1636 = vsel %vm1594, %v1608, %v1601
        %v1638 = vunpack.c.l.s4 1983009808
        %v1639 = vunpack.c.0.s8 %v1638
        %v1640 = vperm.slane %v1636, %v1639
        %v1641 = vrot.slane %v1609, 4
        %v1642 = vsel %vm1594, %v1641, %v1607
        %v1644 = vunpack.c.l.s4 1983009808
        %v1645 = vunpack.c.0.s8 %v1644
        %v1646 = vperm.slane %v1642, %v1645
        %v1647 = vrot.slane %v1646, 4
        %v1648 = vsel %vm1594, %v1647, %v1640
        %v1650 = vunpack.c.l.s4 1934713408
        %v1651 = vunpack.c.0.s8 %v1650
        %v1652 = vperm.slane %v1648, %v1651
        %v1653 = vrot.slane %v1652, 4
        %v1654 = vsel %vm1594, 0, %v1653
        %v1655 = vsel %vm1594, %v1634, %v1627
        %v1657 = vunpack.c.l.s4 1983009808
        %v1658 = vunpack.c.0.s8 %v1657
        %v1659 = vperm.slane %v1655, %v1658
        %v1660 = vrot.slane %v1635, 4
        %v1661 = vsel %vm1594, %v1660, %v1633
        %v1663 = vunpack.c.l.s4 1983009808
        %v1664 = vunpack.c.0.s8 %v1663
        %v1665 = vperm.slane %v1661, %v1664
        %v1666 = vrot.slane %v1665, 4
        %v1667 = vsel %vm1594, %v1666, %v1659
        %v1669 = vunpack.c.l.s4 1934713408
        %v1670 = vunpack.c.0.s8 %v1669
        %v1671 = vperm.slane %v1667, %v1670
        %v1672 = vrot.slane %v1671, 4
        %v1673 = vsel %vm1594, 0, %v1672
        %v1676 = vpack.i.b16 %v1671, %v1652
        %v1678 = vshrl.u32 %v1652, 16
        %v1679 = vshrl.u32 %v1671, 16
        %v1680 = vpack.i.b16 %v1679, %v1678
        %v1684 = vpack.i.b16 %v1673, %v1654
        %v1686 = vshrl.u32 %v1654, 16
        %v1687 = vshrl.u32 %v1673, 16
        %v1688 = vpack.i.b16 %v1687, %v1686
        %v1690 = vpack.c.bf16 %v1282, %v1269
        %v1691 = vpack.c.bf16 %v1308, %v1295
        %v1693 = vrot.slane %v1690, 4
        %v1695 = vrot.slane %v1691, 4
        %v1698 = vpack.i.b16 %v1693, %v1690
        %v1699 = vshrl.u32 %v1690, 16
        %v1700 = vshrl.u32 %v1693, 16
        %v1701 = vpack.i.b16 %v1700, %v1699
        %v1704 = vpack.i.b16 %v1695, %v1691
        %v1705 = vshrl.u32 %v1691, 16
        %v1706 = vshrl.u32 %v1695, 16
        %v1707 = vpack.i.b16 %v1706, %v1705
        %v1710 = vunpack.c.l.s4 1983009808
        %v1711 = vunpack.c.0.s8 %v1710
        %v1712 = vperm.slane %v1698, %v1711
        %v1715 = vunpack.c.l.s4 1983009808
        %v1716 = vunpack.c.0.s8 %v1715
        %v1717 = vperm.slane %v1704, %v1716
        %v1718 = vrot.slane %v1717, 4
        %v1719 = vsel %vm1594, %v1718, %v1712
        %v1720 = vrot.slane %v1712, 4
        %v1721 = vsel %vm1594, %v1717, %v1720
        %v1723 = vunpack.c.l.s4 1934713408
        %v1724 = vunpack.c.0.s8 %v1723
        %v1725 = vperm.slane %v1719, %v1724
        %v1727 = vunpack.c.l.s4 1934713408
        %v1728 = vunpack.c.0.s8 %v1727
        %v1729 = vperm.slane %v1721, %v1728
        %v1730 = vrot.slane %v1725, 4
        %v1731 = vsel %vm1594, 0, %v1730
        %v1732 = vrot.slane %v1729, 4
        %v1733 = vsel %vm1594, 0, %v1732
        %v1736 = vunpack.c.l.s4 1983009808
        %v1737 = vunpack.c.0.s8 %v1736
        %v1738 = vperm.slane %v1701, %v1737
        %v1741 = vunpack.c.l.s4 1983009808
        %v1742 = vunpack.c.0.s8 %v1741
        %v1743 = vperm.slane %v1707, %v1742
        %v1744 = vrot.slane %v1743, 4
        %v1745 = vsel %vm1594, %v1744, %v1738
        %v1746 = vrot.slane %v1738, 4
        %v1747 = vsel %vm1594, %v1743, %v1746
        %v1749 = vunpack.c.l.s4 1934713408
        %v1750 = vunpack.c.0.s8 %v1749
        %v1751 = vperm.slane %v1745, %v1750
        %v1753 = vunpack.c.l.s4 1934713408
        %v1754 = vunpack.c.0.s8 %v1753
        %v1755 = vperm.slane %v1747, %v1754
        %v1756 = vrot.slane %v1751, 4
        %v1757 = vsel %vm1594, 0, %v1756
        %v1758 = vrot.slane %v1755, 4
        %v1759 = vsel %vm1594, 0, %v1758
        %v1760 = vsel %vm1594, %v1732, %v1725
        %v1762 = vunpack.c.l.s4 1983009808
        %v1763 = vunpack.c.0.s8 %v1762
        %v1764 = vperm.slane %v1760, %v1763
        %v1765 = vrot.slane %v1733, 4
        %v1766 = vsel %vm1594, %v1765, %v1731
        %v1768 = vunpack.c.l.s4 1983009808
        %v1769 = vunpack.c.0.s8 %v1768
        %v1770 = vperm.slane %v1766, %v1769
        %v1771 = vrot.slane %v1770, 4
        %v1772 = vsel %vm1594, %v1771, %v1764
        %v1774 = vunpack.c.l.s4 1934713408
        %v1775 = vunpack.c.0.s8 %v1774
        %v1776 = vperm.slane %v1772, %v1775
        %v1777 = vrot.slane %v1776, 4
        %v1778 = vsel %vm1594, 0, %v1777
        %v1779 = vsel %vm1594, %v1758, %v1751
        %v1781 = vunpack.c.l.s4 1983009808
        %v1782 = vunpack.c.0.s8 %v1781
        %v1783 = vperm.slane %v1779, %v1782
        %v1784 = vrot.slane %v1759, 4
        %v1785 = vsel %vm1594, %v1784, %v1757
        %v1787 = vunpack.c.l.s4 1983009808
        %v1788 = vunpack.c.0.s8 %v1787
        %v1789 = vperm.slane %v1785, %v1788
        %v1790 = vrot.slane %v1789, 4
        %v1791 = vsel %vm1594, %v1790, %v1783
        %v1793 = vunpack.c.l.s4 1934713408
        %v1794 = vunpack.c.0.s8 %v1793
        %v1795 = vperm.slane %v1791, %v1794
        %v1796 = vrot.slane %v1795, 4
        %v1797 = vsel %vm1594, 0, %v1796
        %v1800 = vpack.i.b16 %v1795, %v1776
        %v1802 = vshrl.u32 %v1776, 16
        %v1803 = vshrl.u32 %v1795, 16
        %v1804 = vpack.i.b16 %v1803, %v1802
        %v1808 = vpack.i.b16 %v1797, %v1778
        %v1810 = vshrl.u32 %v1778, 16
        %v1811 = vshrl.u32 %v1797, 16
        %v1812 = vpack.i.b16 %v1811, %v1810
        %v1814 = vpack.c.bf16 %v1536, %v1523
        %v1815 = vpack.c.bf16 %v1562, %v1549
        %v1817 = vrot.slane %v1814, 4
        %v1819 = vrot.slane %v1815, 4
        %v1822 = vpack.i.b16 %v1817, %v1814
        %v1823 = vshrl.u32 %v1814, 16
        %v1824 = vshrl.u32 %v1817, 16
        %v1825 = vpack.i.b16 %v1824, %v1823
        %v1828 = vpack.i.b16 %v1819, %v1815
        %v1829 = vshrl.u32 %v1815, 16
        %v1830 = vshrl.u32 %v1819, 16
        %v1831 = vpack.i.b16 %v1830, %v1829
        %v1834 = vunpack.c.l.s4 1983009808
        %v1835 = vunpack.c.0.s8 %v1834
        %v1836 = vperm.slane %v1822, %v1835
        %v1839 = vunpack.c.l.s4 1983009808
        %v1840 = vunpack.c.0.s8 %v1839
        %v1841 = vperm.slane %v1828, %v1840
        %v1842 = vrot.slane %v1841, 4
        %v1843 = vsel %vm1594, %v1842, %v1836
        %v1844 = vrot.slane %v1836, 4
        %v1845 = vsel %vm1594, %v1841, %v1844
        %v1847 = vunpack.c.l.s4 1934713408
        %v1848 = vunpack.c.0.s8 %v1847
        %v1849 = vperm.slane %v1843, %v1848
        %v1851 = vunpack.c.l.s4 1934713408
        %v1852 = vunpack.c.0.s8 %v1851
        %v1853 = vperm.slane %v1845, %v1852
        %v1854 = vrot.slane %v1849, 4
        %v1855 = vsel %vm1594, 0, %v1854
        %v1856 = vrot.slane %v1853, 4
        %v1857 = vsel %vm1594, 0, %v1856
        %v1860 = vunpack.c.l.s4 1983009808
        %v1861 = vunpack.c.0.s8 %v1860
        %v1862 = vperm.slane %v1825, %v1861
        %v1865 = vunpack.c.l.s4 1983009808
        %v1866 = vunpack.c.0.s8 %v1865
        %v1867 = vperm.slane %v1831, %v1866
        %v1868 = vrot.slane %v1867, 4
        %v1869 = vsel %vm1594, %v1868, %v1862
        %v1870 = vrot.slane %v1862, 4
        %v1871 = vsel %vm1594, %v1867, %v1870
        %v1873 = vunpack.c.l.s4 1934713408
        %v1874 = vunpack.c.0.s8 %v1873
        %v1875 = vperm.slane %v1869, %v1874
        %v1877 = vunpack.c.l.s4 1934713408
        %v1878 = vunpack.c.0.s8 %v1877
        %v1879 = vperm.slane %v1871, %v1878
        %v1880 = vrot.slane %v1875, 4
        %v1881 = vsel %vm1594, 0, %v1880
        %v1882 = vrot.slane %v1879, 4
        %v1883 = vsel %vm1594, 0, %v1882
        %v1884 = vsel %vm1594, %v1856, %v1849
        %v1886 = vunpack.c.l.s4 1983009808
        %v1887 = vunpack.c.0.s8 %v1886
        %v1888 = vperm.slane %v1884, %v1887
        %v1889 = vrot.slane %v1857, 4
        %v1890 = vsel %vm1594, %v1889, %v1855
        %v1892 = vunpack.c.l.s4 1983009808
        %v1893 = vunpack.c.0.s8 %v1892
        %v1894 = vperm.slane %v1890, %v1893
        %v1895 = vrot.slane %v1894, 4
        %v1896 = vsel %vm1594, %v1895, %v1888
        %v1898 = vunpack.c.l.s4 1934713408
        %v1899 = vunpack.c.0.s8 %v1898
        %v1900 = vperm.slane %v1896, %v1899
        %v1901 = vrot.slane %v1900, 4
        %v1902 = vsel %vm1594, 0, %v1901
        %v1903 = vsel %vm1594, %v1882, %v1875
        %v1905 = vunpack.c.l.s4 1983009808
        %v1906 = vunpack.c.0.s8 %v1905
        %v1907 = vperm.slane %v1903, %v1906
        %v1908 = vrot.slane %v1883, 4
        %v1909 = vsel %vm1594, %v1908, %v1881
        %v1911 = vunpack.c.l.s4 1983009808
        %v1912 = vunpack.c.0.s8 %v1911
        %v1913 = vperm.slane %v1909, %v1912
        %v1914 = vrot.slane %v1913, 4
        %v1915 = vsel %vm1594, %v1914, %v1907
        %v1917 = vunpack.c.l.s4 1934713408
        %v1918 = vunpack.c.0.s8 %v1917
        %v1919 = vperm.slane %v1915, %v1918
        %v1920 = vrot.slane %v1919, 4
        %v1921 = vsel %vm1594, 0, %v1920
        %v1924 = vpack.i.b16 %v1919, %v1900
        %v1925 = vshrl.u32 %v1900, 16
        %v1926 = vshrl.u32 %v1919, 16
        %v1927 = vpack.i.b16 %v1926, %v1925
        %v1930 = vpack.i.b16 %v1921, %v1902
        %v1931 = vshrl.u32 %v1902, 16
        %v1932 = vshrl.u32 %v1921, 16
        %v1933 = vpack.i.b16 %v1932, %v1931
        %v1935 = vperm.slane %v802, 0
        %1937 = vmatpush.bf16.xpose.msra.mxu0 0
        %1938 = vmatpush.bf16.xpose.msra.mxu0 0
        %1939 = vmatpush.bf16.xpose.msra.mxu0 0
        %1940 = vmatpush.bf16.xpose.msra.mxu0 0
        %1941 = vmatpush.bf16.xpose.msra.mxu0 0
        %1942 = vmatpush.bf16.xpose.msra.mxu0 0
        %1943 = vmatpush.bf16.xpose.msra.mxu0 0
        %1944 = vmatpush.bf16.xpose.msra.mxu0 %v1800
        %1945 = vmatmul.bf16.gmra.mxu0 %v1676
        %v1946 = vpop.f32.mrf.mxu0
        %v1947 = vadd.f32 %v1935, %v1946
        %v1948 = vpop.f32.mrf.mxu0
        %1949 = vdwg.mxu0
        %1950 = vmatpush.bf16.xpose.msra.mxu0 0
        %1951 = vmatpush.bf16.xpose.msra.mxu0 0
        %1952 = vmatpush.bf16.xpose.msra.mxu0 0
        %1953 = vmatpush.bf16.xpose.msra.mxu0 0
        %1954 = vmatpush.bf16.xpose.msra.mxu0 0
        %1955 = vmatpush.bf16.xpose.msra.mxu0 0
        %1956 = vmatpush.bf16.xpose.msra.mxu0 0
        %1957 = vmatpush.bf16.xpose.msra.mxu0 %v1804
        %1958 = vmatmul.bf16.gmra.mxu0 %v1680
        %v1959 = vpop.f32.mrf.mxu0
        %v1960 = vadd.f32 %v1935, %v1959
        %v1961 = vpop.f32.mrf.mxu0
        %1962 = vdwg.mxu0
        %1963 = vmatpush.bf16.xpose.msra.mxu0 0
        %1964 = vmatpush.bf16.xpose.msra.mxu0 0
        %1965 = vmatpush.bf16.xpose.msra.mxu0 0
        %1966 = vmatpush.bf16.xpose.msra.mxu0 0
        %1967 = vmatpush.bf16.xpose.msra.mxu0 0
        %1968 = vmatpush.bf16.xpose.msra.mxu0 0
        %1969 = vmatpush.bf16.xpose.msra.mxu0 0
        %1970 = vmatpush.bf16.xpose.msra.mxu0 %v1808
        %1971 = vmatmul.bf16.gmra.mxu0 %v1684
        %v1972 = vpop.f32.mrf.mxu0
        %v1973 = vadd.f32 %v1935, %v1972
        %v1974 = vpop.f32.mrf.mxu0
        %1975 = vdwg.mxu0
        %1976 = vmatpush.bf16.xpose.msra.mxu0 0
        %1977 = vmatpush.bf16.xpose.msra.mxu0 0
        %1978 = vmatpush.bf16.xpose.msra.mxu0 0
        %1979 = vmatpush.bf16.xpose.msra.mxu0 0
        %1980 = vmatpush.bf16.xpose.msra.mxu0 0
        %1981 = vmatpush.bf16.xpose.msra.mxu0 0
        %1982 = vmatpush.bf16.xpose.msra.mxu0 0
        %1983 = vmatpush.bf16.xpose.msra.mxu0 %v1812
        %1984 = vmatmul.bf16.gmra.mxu0 %v1688
        %v1985 = vpop.f32.mrf.mxu0
        %v1986 = vadd.f32 %v1935, %v1985
        %v1987 = vpop.f32.mrf.mxu0
        %1988 = vdwg.mxu0
        %vm1989 = vcmask 64512
        %v1990 = vsel %vm1989, %v1947, -inf
        %1991 = vmax.xlane.f32.xlu0 %v1990
        %v1992 = vpop.xlane.xlu0 %1991
        %v1993 = vsel %vm1989, %v1960, -inf
        %1994 = vmax.xlane.f32.xlu0 %v1993
        %v1995 = vpop.xlane.xlu0 %1994
        %v1996 = vsel %vm1989, %v1973, -inf
        %1997 = vmax.xlane.f32.xlu0 %v1996
        %v1998 = vpop.xlane.xlu0 %1997
        %v1999 = vsel %vm1989, %v1986, -inf
        %2000 = vmax.xlane.f32.xlu0 %v1999
        %v2001 = vpop.xlane.xlu0 %2000
        %v2002 = vsub.f32 %v1947, %v1992
        %v2003 = vsub.f32 %v1960, %v1995
        %v2004 = vsub.f32 %v1973, %v1998
        %v2005 = vsub.f32 %v1986, %v2001
        %v2006 = vmul.f32 %v2002, 1.442695
        %v2007 = vpow.pop %v2006
        %v2008 = vmul.f32 %v2003, 1.442695
        %v2009 = vpow.pop %v2008
        %v2010 = vmul.f32 %v2004, 1.442695
        %v2011 = vpow.pop %v2010
        %v2012 = vmul.f32 %v2005, 1.442695
        %v2013 = vpow.pop %v2012
        %v2014 = vsel %vm1989, %v2007, 0.0
        %2015 = vadd.xlane.f32.xlu0 %v2014
        %v2016 = vpop.xlane.xlu0 %2015
        %v2017 = vsel %vm1989, %v2009, 0.0
        %2018 = vadd.xlane.f32.xlu0 %v2017
        %v2019 = vpop.xlane.xlu0 %2018
        %v2020 = vsel %vm1989, %v2011, 0.0
        %2021 = vadd.xlane.f32.xlu0 %v2020
        %v2022 = vpop.xlane.xlu0 %2021
        %v2023 = vsel %vm1989, %v2013, 0.0
        %2024 = vadd.xlane.f32.xlu0 %v2023
        %v2025 = vpop.xlane.xlu0 %2024
        %v2026 = vrcp.pop %v2016
        %v2027 = vrcp.pop %v2019
        %v2028 = vrcp.pop %v2022
        %v2029 = vrcp.pop %v2025
        %v2030 = vmul.f32 %v2007, %v2026
        %v2031 = vmul.f32 %v2009, %v2027
        %v2032 = vmul.f32 %v2011, %v2028
        %v2033 = vmul.f32 %v2013, %v2029
        %v2034 = vpack.c.bf16 %v2030, %v2030
        %v2035 = vpack.c.bf16 %v2031, %v2031
        %v2036 = vpack.c.bf16 %v2032, %v2032
        %v2037 = vpack.c.bf16 %v2033, %v2033
        %v2039 = vsel %vm1989, %v2034, 0
        %vm2041 = vcmask 1043456
        %v2043 = vsel %vm2041, %v1924, 0
        %2045 = vmatpush.bf16.msra.mxu0 0
        %2046 = vmatpush.bf16.msra.mxu0 0
        %2047 = vmatpush.bf16.msra.mxu0 0
        %2048 = vmatpush.bf16.msra.mxu0 0
        %2049 = vmatpush.bf16.msra.mxu0 0
        %2050 = vmatpush.bf16.msra.mxu0 0
        %2051 = vmatpush.bf16.msra.mxu0 0
        %2052 = vmatpush.bf16.msra.mxu0 %v2043
        %2053 = vmatmul.bf16.gmra.mxu0 %v2039
        %v2054 = vpop.f32.mrf.mxu0
        %v2055 = vadd.f32 0.0, %v2054
        %v2056 = vpop.f32.mrf.mxu0
        %2057 = vdwg.mxu0
        %v2059 = vsel %vm1989, %v2035, 0
        %v2062 = vsel %vm2041, %v1927, 0
        %2064 = vmatpush.bf16.msra.mxu0 0
        %2065 = vmatpush.bf16.msra.mxu0 0
        %2066 = vmatpush.bf16.msra.mxu0 0
        %2067 = vmatpush.bf16.msra.mxu0 0
        %2068 = vmatpush.bf16.msra.mxu0 0
        %2069 = vmatpush.bf16.msra.mxu0 0
        %2070 = vmatpush.bf16.msra.mxu0 0
        %2071 = vmatpush.bf16.msra.mxu0 %v2062
        %2072 = vmatmul.bf16.gmra.mxu0 %v2059
        %v2073 = vpop.f32.mrf.mxu0
        %v2074 = vadd.f32 0.0, %v2073
        %v2075 = vpop.f32.mrf.mxu0
        %2076 = vdwg.mxu0
        %v2078 = vsel %vm1989, %v2036, 0
        %v2081 = vsel %vm2041, %v1930, 0
        %2083 = vmatpush.bf16.msra.mxu0 0
        %2084 = vmatpush.bf16.msra.mxu0 0
        %2085 = vmatpush.bf16.msra.mxu0 0
        %2086 = vmatpush.bf16.msra.mxu0 0
        %2087 = vmatpush.bf16.msra.mxu0 0
        %2088 = vmatpush.bf16.msra.mxu0 0
        %2089 = vmatpush.bf16.msra.mxu0 0
        %2090 = vmatpush.bf16.msra.mxu0 %v2081
        %2091 = vmatmul.bf16.gmra.mxu0 %v2078
        %v2092 = vpop.f32.mrf.mxu0
        %v2093 = vadd.f32 0.0, %v2092
        %v2094 = vpop.f32.mrf.mxu0
        %2095 = vdwg.mxu0
        %v2097 = vsel %vm1989, %v2037, 0
        %v2100 = vsel %vm2041, %v1933, 0
        %2102 = vmatpush.bf16.msra.mxu0 0
        %2103 = vmatpush.bf16.msra.mxu0 0
        %2104 = vmatpush.bf16.msra.mxu0 0
        %2105 = vmatpush.bf16.msra.mxu0 0
        %2106 = vmatpush.bf16.msra.mxu0 0
        %2107 = vmatpush.bf16.msra.mxu0 0
        %2108 = vmatpush.bf16.msra.mxu0 0
        %2109 = vmatpush.bf16.msra.mxu0 %v2100
        %2110 = vmatmul.bf16.gmra.mxu0 %v2097
        %v2111 = vpop.f32.mrf.mxu0
        %v2112 = vadd.f32 0.0, %v2111
        %v2113 = vpop.f32.mrf.mxu0
        %2114 = vdwg.mxu0
        %v2115 = vrot.slane %v2093, 4
        %vm2116 = vcmask 1047556
        %v2117 = vsel %vm2116, %v2115, %v2055
        %v2118 = vrot.slane %v2055, 4
        %v2119 = vsel %vm2116, %v2093, %v2118
        %v2121 = vunpack.c.l.s4 1983009808
        %v2122 = vunpack.c.0.s8 %v2121
        %v2123 = vperm.slane %v2117, %v2122
        %v2125 = vunpack.c.l.s4 1983009808
        %v2126 = vunpack.c.0.s8 %v2125
        %v2127 = vperm.slane %v2119, %v2126
        %v2128 = vrot.slane %v2112, 4
        %v2129 = vsel %vm2116, %v2128, %v2074
        %v2130 = vrot.slane %v2074, 4
        %v2131 = vsel %vm2116, %v2112, %v2130
        %v2133 = vunpack.c.l.s4 1983009808
        %v2134 = vunpack.c.0.s8 %v2133
        %v2135 = vperm.slane %v2129, %v2134
        %v2137 = vunpack.c.l.s4 1983009808
        %v2138 = vunpack.c.0.s8 %v2137
        %v2139 = vperm.slane %v2131, %v2138
        %v2140 = vrot.slane %v2135, 4
        %v2141 = vsel %vm2116, %v2140, %v2123
        %v2142 = vrot.slane %v2123, 4
        %v2143 = vsel %vm2116, %v2135, %v2142
        %v2145 = vunpack.c.l.s4 1934713408
        %v2146 = vunpack.c.0.s8 %v2145
        %v2147 = vperm.slane %v2141, %v2146
        %v2149 = vunpack.c.l.s4 1934713408
        %v2150 = vunpack.c.0.s8 %v2149
        %v2151 = vperm.slane %v2143, %v2150
        %v2152 = vrot.slane %v2139, 4
        %v2153 = vsel %vm2116, %v2152, %v2127
        %v2154 = vrot.slane %v2127, 4
        %v2155 = vsel %vm2116, %v2139, %v2154
        %v2157 = vunpack.c.l.s4 1934713408
        %v2158 = vunpack.c.0.s8 %v2157
        %v2159 = vperm.slane %v2153, %v2158
        %v2161 = vunpack.c.l.s4 1934713408
        %v2162 = vunpack.c.0.s8 %v2161
        %v2163 = vperm.slane %v2155, %v2162
        %v2164 = vrot.slane %v2147, 4
        %v2165 = vsel %vm2116, 0.0, %v2164
        %v2166 = vrot.slane %v2151, 4
        %v2167 = vsel %vm2116, 0.0, %v2166
        %v2168 = vrot.slane %v2159, 4
        %v2169 = vsel %vm2116, 0.0, %v2168
        %v2170 = vrot.slane %v2163, 4
        %v2171 = vsel %vm2116, 0.0, %v2170
        %v2172 = vsel %vm2116, %v2166, %v2147
        %v2174 = vunpack.c.l.s4 1983009808
        %v2175 = vunpack.c.0.s8 %v2174
        %v2176 = vperm.slane %v2172, %v2175
        %v2177 = vrot.slane %v2167, 4
        %v2178 = vsel %vm2116, %v2177, %v2165
        %v2180 = vunpack.c.l.s4 1983009808
        %v2181 = vunpack.c.0.s8 %v2180
        %v2182 = vperm.slane %v2178, %v2181
        %v2183 = vsel %vm2116, %v2170, %v2159
        %v2185 = vunpack.c.l.s4 1983009808
        %v2186 = vunpack.c.0.s8 %v2185
        %v2187 = vperm.slane %v2183, %v2186
        %v2188 = vrot.slane %v2171, 4
        %v2189 = vsel %vm2116, %v2188, %v2169
        %v2191 = vunpack.c.l.s4 1983009808
        %v2192 = vunpack.c.0.s8 %v2191
        %v2193 = vperm.slane %v2189, %v2192
        %v2194 = vrot.slane %v2182, 4
        %v2195 = vsel %vm2116, %v2194, %v2176
        %v2196 = vrot.slane %v2176, 4
        %v2197 = vsel %vm2116, %v2182, %v2196
        %v2199 = vunpack.c.l.s4 1934713408
        %v2200 = vunpack.c.0.s8 %v2199
        %v2201 = vperm.slane %v2195, %v2200
        %v2203 = vunpack.c.l.s4 1934713408
        %v2204 = vunpack.c.0.s8 %v2203
        %v2205 = vperm.slane %v2197, %v2204
        %v2206 = vrot.slane %v2193, 4
        %v2207 = vsel %vm2116, %v2206, %v2187
        %v2208 = vrot.slane %v2187, 4
        %v2209 = vsel %vm2116, %v2193, %v2208
        %v2211 = vunpack.c.l.s4 1934713408
        %v2212 = vunpack.c.0.s8 %v2211
        %v2213 = vperm.slane %v2207, %v2212
        %v2215 = vunpack.c.l.s4 1934713408
        %v2216 = vunpack.c.0.s8 %v2215
        %v2217 = vperm.slane %v2209, %v2216
        %v2218 = vrot.slane %v2213, 4
        %v2219 = vsel %vm2116, %v2218, %v2201
        %v2220 = vrot.slane %v2201, 4
        %v2221 = vsel %vm2116, %v2213, %v2220
        %v2222 = vrot.slane %v2217, 4
        %v2223 = vsel %vm2116, %v2222, %v2205
        %v2224 = vrot.slane %v2205, 4
        %v2225 = vsel %vm2116, %v2217, %v2224
        %v2226 = vpack.c.bf16 %v2219, %v2219
        %v2227 = vpack.c.bf16 %v2221, %v2221
        %v2228 = vpack.c.bf16 %v2223, %v2223
        %v2229 = vpack.c.bf16 %v2225, %v2225
        %v2230 = vld [vmem:[#allocation14] sm:$0xf]
        %v2231 = vld [vmem:[#allocation14 + $0x4] sm:$0xf]
        %v2232 = vld [vmem:[#allocation14 + $0x8] sm:$0xf]
        %v2233 = vld [vmem:[#allocation14 + $0xc] sm:$0xf]
        %v2234 = vld [vmem:[#allocation14 + $0x10] sm:$0xf]
        %v2235 = vld [vmem:[#allocation14 + $0x14] sm:$0xf]
        %v2236 = vld [vmem:[#allocation14 + $0x18] sm:$0xf]
        %v2237 = vld [vmem:[#allocation14 + $0x1c] sm:$0xf]
        %v2238 = vld [vmem:[#allocation14 + $0x20] sm:$0xf]
        %v2239 = vld [vmem:[#allocation14 + $0x24] sm:$0xf]
        %v2240 = vld [vmem:[#allocation14 + $0x28] sm:$0xf]
        %v2241 = vld [vmem:[#allocation14 + $0x2c] sm:$0xf]
        %v2242 = vld [vmem:[#allocation14 + $0x30] sm:$0xf]
        %v2243 = vld [vmem:[#allocation14 + $0x34] sm:$0xf]
        %v2244 = vld [vmem:[#allocation14 + $0x38] sm:$0xf]
        %v2245 = vld [vmem:[#allocation14 + $0x3c] sm:$0xf]
        %v2246 = vld [vmem:[#allocation14 + $0x40] sm:$0xf]
        %v2247 = vld [vmem:[#allocation14 + $0x44] sm:$0xf]
        %v2248 = vld [vmem:[#allocation14 + $0x48] sm:$0xf]
        %v2249 = vld [vmem:[#allocation14 + $0x4c] sm:$0xf]
        %v2250 = vld [vmem:[#allocation14 + $0x50] sm:$0xf]
        %v2251 = vld [vmem:[#allocation14 + $0x54] sm:$0xf]
        %v2252 = vld [vmem:[#allocation14 + $0x58] sm:$0xf]
        %v2253 = vld [vmem:[#allocation14 + $0x5c] sm:$0xf]
        %v2254 = vld [vmem:[#allocation14 + $0x60] sm:$0xf]
        %v2255 = vld [vmem:[#allocation14 + $0x64] sm:$0xf]
        %v2256 = vld [vmem:[#allocation14 + $0x68] sm:$0xf]
        %v2257 = vld [vmem:[#allocation14 + $0x6c] sm:$0xf]
        %v2258 = vld [vmem:[#allocation14 + $0x70] sm:$0xf]
        %v2259 = vld [vmem:[#allocation14 + $0x74] sm:$0xf]
        %v2260 = vld [vmem:[#allocation14 + $0x78] sm:$0xf]
        %v2261 = vld [vmem:[#allocation14 + $0x7c] sm:$0xf]
        %v2262 = vld [vmem:[#allocation14 + $0x80] sm:$0xf]
        %v2263 = vld [vmem:[#allocation14 + $0x84] sm:$0xf]
        %v2264 = vld [vmem:[#allocation14 + $0x88] sm:$0xf]
        %v2265 = vld [vmem:[#allocation14 + $0x8c] sm:$0xf]
        %v2266 = vld [vmem:[#allocation14 + $0x90] sm:$0xf]
        %v2267 = vld [vmem:[#allocation14 + $0x94] sm:$0xf]
        %v2268 = vld [vmem:[#allocation14 + $0x98] sm:$0xf]
        %v2269 = vld [vmem:[#allocation14 + $0x9c] sm:$0xf]
        %v2270 = vld [vmem:[#allocation14 + $0xa0] sm:$0xf]
        %v2271 = vld [vmem:[#allocation14 + $0xa4] sm:$0xf]
        %v2272 = vld [vmem:[#allocation14 + $0xa8] sm:$0xf]
        %v2273 = vld [vmem:[#allocation14 + $0xac] sm:$0xf]
        %v2274 = vld [vmem:[#allocation14 + $0xb0] sm:$0xf]
        %v2275 = vld [vmem:[#allocation14 + $0xb4] sm:$0xf]
        %v2276 = vld [vmem:[#allocation14 + $0xb8] sm:$0xf]
        %v2277 = vld [vmem:[#allocation14 + $0xbc] sm:$0xf]
        %v2278 = vld [vmem:[#allocation14 + $0xc0] sm:$0xf]
        %v2279 = vld [vmem:[#allocation14 + $0xc4] sm:$0xf]
        %v2280 = vld [vmem:[#allocation14 + $0xc8] sm:$0xf]
        %v2281 = vld [vmem:[#allocation14 + $0xcc] sm:$0xf]
        %v2282 = vld [vmem:[#allocation14 + $0xd0] sm:$0xf]
        %v2283 = vld [vmem:[#allocation14 + $0xd4] sm:$0xf]
        %v2284 = vld [vmem:[#allocation14 + $0xd8] sm:$0xf]
        %v2285 = vld [vmem:[#allocation14 + $0xdc] sm:$0xf]
        %v2286 = vld [vmem:[#allocation14 + $0xe0] sm:$0xf]
        %v2287 = vld [vmem:[#allocation14 + $0xe4] sm:$0xf]
        %v2288 = vld [vmem:[#allocation14 + $0xe8] sm:$0xf]
        %v2289 = vld [vmem:[#allocation14 + $0xec] sm:$0xf]
        %v2290 = vld [vmem:[#allocation14 + $0xf0] sm:$0xf]
        %v2291 = vld [vmem:[#allocation14 + $0xf4] sm:$0xf]
        %v2292 = vld [vmem:[#allocation14 + $0xf8] sm:$0xf]
        %v2293 = vld [vmem:[#allocation14 + $0xfc] sm:$0xf]
        %v2294 = vld [vmem:[%s9] sm:$0x1]
        %v2296 = vperm.slane %v2294, 0
        %v2362 = vunpack.c.l.b16 %v2230
        %v2363 = vunpack.c.l.b16 %v2231
        %v2364 = vunpack.c.l.b16 %v2232
        %v2365 = vunpack.c.l.b16 %v2233
        %v2366 = vunpack.c.l.b16 %v2234
        %v2367 = vunpack.c.l.b16 %v2235
        %v2368 = vunpack.c.l.b16 %v2236
        %v2369 = vunpack.c.l.b16 %v2237
        %v2370 = vunpack.c.l.b16 %v2238
        %v2371 = vunpack.c.l.b16 %v2239
        %v2372 = vunpack.c.l.b16 %v2240
        %v2373 = vunpack.c.l.b16 %v2241
        %v2374 = vunpack.c.l.b16 %v2242
        %v2375 = vunpack.c.l.b16 %v2243
        %v2376 = vunpack.c.l.b16 %v2244
        %v2377 = vunpack.c.l.b16 %v2245
        %v2378 = vunpack.c.l.b16 %v2246
        %v2379 = vunpack.c.l.b16 %v2247
        %v2380 = vunpack.c.l.b16 %v2248
        %v2381 = vunpack.c.l.b16 %v2249
        %v2382 = vunpack.c.l.b16 %v2250
        %v2383 = vunpack.c.l.b16 %v2251
        %v2384 = vunpack.c.l.b16 %v2252
        %v2385 = vunpack.c.l.b16 %v2253
        %v2386 = vunpack.c.l.b16 %v2254
        %v2387 = vunpack.c.l.b16 %v2255
        %v2388 = vunpack.c.l.b16 %v2256
        %v2389 = vunpack.c.l.b16 %v2257
        %v2390 = vunpack.c.l.b16 %v2258
        %v2391 = vunpack.c.l.b16 %v2259
        %v2392 = vunpack.c.l.b16 %v2260
        %v2393 = vunpack.c.l.b16 %v2261
        %v2394 = vunpack.c.l.b16 %v2262
        %v2395 = vunpack.c.l.b16 %v2263
        %v2396 = vunpack.c.l.b16 %v2264
        %v2397 = vunpack.c.l.b16 %v2265
        %v2398 = vunpack.c.l.b16 %v2266
        %v2399 = vunpack.c.l.b16 %v2267
        %v2400 = vunpack.c.l.b16 %v2268
        %v2401 = vunpack.c.l.b16 %v2269
        %v2402 = vunpack.c.l.b16 %v2270
        %v2403 = vunpack.c.l.b16 %v2271
        %v2404 = vunpack.c.l.b16 %v2272
        %v2405 = vunpack.c.l.b16 %v2273
        %v2406 = vunpack.c.l.b16 %v2274
        %v2407 = vunpack.c.l.b16 %v2275
        %v2408 = vunpack.c.l.b16 %v2276
        %v2409 = vunpack.c.l.b16 %v2277
        %v2410 = vunpack.c.l.b16 %v2278
        %v2411 = vunpack.c.l.b16 %v2279
        %v2412 = vunpack.c.l.b16 %v2280
        %v2413 = vunpack.c.l.b16 %v2281
        %v2414 = vunpack.c.l.b16 %v2282
        %v2415 = vunpack.c.l.b16 %v2283
        %v2416 = vunpack.c.l.b16 %v2284
        %v2417 = vunpack.c.l.b16 %v2285
        %v2418 = vunpack.c.l.b16 %v2286
        %v2419 = vunpack.c.l.b16 %v2287
        %v2420 = vunpack.c.l.b16 %v2288
        %v2421 = vunpack.c.l.b16 %v2289
        %v2422 = vunpack.c.l.b16 %v2290
        %v2423 = vunpack.c.l.b16 %v2291
        %v2424 = vunpack.c.l.b16 %v2292
        %v2425 = vunpack.c.l.b16 %v2293
        %v2426 = vpack.c.b16 %v2363, %v2362
        %v2427 = vpack.c.b16 %v2365, %v2364
        %v2428 = vpack.c.b16 %v2367, %v2366
        %v2429 = vpack.c.b16 %v2369, %v2368
        %v2430 = vpack.c.b16 %v2371, %v2370
        %v2431 = vpack.c.b16 %v2373, %v2372
        %v2432 = vpack.c.b16 %v2375, %v2374
        %v2433 = vpack.c.b16 %v2377, %v2376
        %v2434 = vpack.c.b16 %v2379, %v2378
        %v2435 = vpack.c.b16 %v2381, %v2380
        %v2436 = vpack.c.b16 %v2383, %v2382
        %v2437 = vpack.c.b16 %v2385, %v2384
        %v2438 = vpack.c.b16 %v2387, %v2386
        %v2439 = vpack.c.b16 %v2389, %v2388
        %v2440 = vpack.c.b16 %v2391, %v2390
        %v2441 = vpack.c.b16 %v2393, %v2392
        %v2442 = vpack.c.b16 %v2395, %v2394
        %v2443 = vpack.c.b16 %v2397, %v2396
        %v2444 = vpack.c.b16 %v2399, %v2398
        %v2445 = vpack.c.b16 %v2401, %v2400
        %v2446 = vpack.c.b16 %v2403, %v2402
        %v2447 = vpack.c.b16 %v2405, %v2404
        %v2448 = vpack.c.b16 %v2407, %v2406
        %v2449 = vpack.c.b16 %v2409, %v2408
        %v2450 = vpack.c.b16 %v2411, %v2410
        %v2451 = vpack.c.b16 %v2413, %v2412
        %v2452 = vpack.c.b16 %v2415, %v2414
        %v2453 = vpack.c.b16 %v2417, %v2416
        %v2454 = vpack.c.b16 %v2419, %v2418
        %v2455 = vpack.c.b16 %v2421, %v2420
        %v2456 = vpack.c.b16 %v2423, %v2422
        %v2457 = vpack.c.b16 %v2425, %v2424
        %2490 = vmatpush.bf16.msra.mxu0 %v2433
        %2491 = vmatpush.bf16.msra.mxu0 %v2432
        %2492 = vmatpush.bf16.msra.mxu0 %v2431
        %2493 = vmatpush.bf16.msra.mxu0 %v2430
        %2494 = vmatpush.bf16.msra.mxu0 %v2429
        %2495 = vmatpush.bf16.msra.mxu0 %v2428
        %2496 = vmatpush.bf16.msra.mxu0 %v2427
        %2497 = vmatpush.bf16.msra.mxu0 %v2426
        %2498 = vmatmul.bf16.gmra.mxu0 %v2226
        %v2499 = vpop.f32.mrf.mxu0
        %v2500 = vadd.f32 %v2296, %v2499
        %v2501 = vpop.f32.mrf.mxu0
        %2502 = vdwg.mxu0
        %2503 = vmatpush.bf16.msra.mxu0 %v2441
        %2504 = vmatpush.bf16.msra.mxu0 %v2440
        %2505 = vmatpush.bf16.msra.mxu0 %v2439
        %2506 = vmatpush.bf16.msra.mxu0 %v2438
        %2507 = vmatpush.bf16.msra.mxu0 %v2437
        %2508 = vmatpush.bf16.msra.mxu0 %v2436
        %2509 = vmatpush.bf16.msra.mxu0 %v2435
        %2510 = vmatpush.bf16.msra.mxu0 %v2434
        %2511 = vmatmul.bf16.gmra.mxu0 %v2227
        %v2512 = vpop.f32.mrf.mxu0
        %v2513 = vadd.f32 %v2500, %v2512
        %v2514 = vpop.f32.mrf.mxu0
        %2515 = vdwg.mxu0
        %2516 = vmatpush.bf16.msra.mxu0 %v2449
        %2517 = vmatpush.bf16.msra.mxu0 %v2448
        %2518 = vmatpush.bf16.msra.mxu0 %v2447
        %2519 = vmatpush.bf16.msra.mxu0 %v2446
        %2520 = vmatpush.bf16.msra.mxu0 %v2445
        %2521 = vmatpush.bf16.msra.mxu0 %v2444
        %2522 = vmatpush.bf16.msra.mxu0 %v2443
        %2523 = vmatpush.bf16.msra.mxu0 %v2442
        %2524 = vmatmul.bf16.gmra.mxu0 %v2228
        %v2525 = vpop.f32.mrf.mxu0
        %v2526 = vadd.f32 %v2513, %v2525
        %v2527 = vpop.f32.mrf.mxu0
        %2528 = vdwg.mxu0
        %2529 = vmatpush.bf16.msra.mxu0 %v2457
        %2530 = vmatpush.bf16.msra.mxu0 %v2456
        %2531 = vmatpush.bf16.msra.mxu0 %v2455
        %2532 = vmatpush.bf16.msra.mxu0 %v2454
        %2533 = vmatpush.bf16.msra.mxu0 %v2453
        %2534 = vmatpush.bf16.msra.mxu0 %v2452
        %2535 = vmatpush.bf16.msra.mxu0 %v2451
        %2536 = vmatpush.bf16.msra.mxu0 %v2450
        %2537 = vmatmul.bf16.gmra.mxu0 %v2229
        %v2538 = vpop.f32.mrf.mxu0
        %v2539 = vadd.f32 %v2526, %v2538
        %v2540 = vpop.f32.mrf.mxu0
        %2541 = vdwg.mxu0
        %v2542 = vadd.f32 %v800, %v2539
        %v2543 = vld [vmem:[%s14] sm:$0x1]
        %v2544 = vld [vmem:[%s15] sm:$0x1]
        %2545 = vadd.xlane.f32.xlu0 %v2542
        %v2546 = vpop.xlane.xlu0 %2545
        %v2547 = vmul.f32 %v2546, 0.03125
        %v2548 = vsub.f32 %v2542, %v2547
        %v2549 = vmul.f32 %v2548, %v799
        %v2550 = vmul.f32 %v2549, %v2549
        %2551 = vadd.xlane.f32.xlu0 %v2550
        %v2552 = vpop.xlane.xlu0 %2551
        %v2553 = vmul.f32 %v2552, 0.03125
        %v2554 = vadd.f32 %v2553, 1e-05
        %v2555 = vrsqrt.pop %v2554
        %v2556 = vmul.f32 %v2555, %v2554
        %v2557 = vmul.f32 %v2556, %v2555
        %v2558 = vmul.f32 0.5, %v2557
        %v2559 = vsub.f32 1.5, %v2558
        %v2560 = vmul.f32 %v2555, %v2559
        %vm2561 = vweird.f32 %v2554
        %vm2562 = vweird.f32 %v2555
        %vm2563 = vmor %vm2561, %vm2562
        %v2564 = vsel %vm2563, %v2555, %v2560
        %v2565 = vmul.f32 %v2549, %v2564
        %v2567 = vperm.slane %v2543, 0
        %v2569 = vmul.f32 %v2565, %v2567
        %v2571 = vperm.slane %v2544, 0
        %v2573 = vadd.f32 %v2569, %v2571
        %v2574 = vpack.c.bf16 %v2573, %v2573
        %v2575 = vld [vmem:[#allocation16] sm:$0xf]
        %v2576 = vld [vmem:[#allocation16 + $0x4] sm:$0xf]
        %v2577 = vld [vmem:[#allocation16 + $0x8] sm:$0xf]
        %v2578 = vld [vmem:[#allocation16 + $0xc] sm:$0xf]
        %v2579 = vld [vmem:[#allocation16 + $0x10] sm:$0xf]
        %v2580 = vld [vmem:[#allocation16 + $0x14] sm:$0xf]
        %v2581 = vld [vmem:[#allocation16 + $0x18] sm:$0xf]
        %v2582 = vld [vmem:[#allocation16 + $0x1c] sm:$0xf]
        %v2583 = vld [vmem:[#allocation16 + $0x20] sm:$0xf]
        %v2584 = vld [vmem:[#allocation16 + $0x24] sm:$0xf]
        %v2585 = vld [vmem:[#allocation16 + $0x28] sm:$0xf]
        %v2586 = vld [vmem:[#allocation16 + $0x2c] sm:$0xf]
        %v2587 = vld [vmem:[#allocation16 + $0x30] sm:$0xf]
        %v2588 = vld [vmem:[#allocation16 + $0x34] sm:$0xf]
        %v2589 = vld [vmem:[#allocation16 + $0x38] sm:$0xf]
        %v2590 = vld [vmem:[#allocation16 + $0x3c] sm:$0xf]
        %v2591 = vld [vmem:[%s11] sm:$0x1]
        %v2593 = vperm.slane %v2591, 0
        %v2611 = vunpack.c.l.b16 %v2575
        %v2612 = vunpack.c.l.b16 %v2576
        %v2613 = vunpack.c.l.b16 %v2577
        %v2614 = vunpack.c.l.b16 %v2578
        %v2615 = vunpack.c.l.b16 %v2579
        %v2616 = vunpack.c.l.b16 %v2580
        %v2617 = vunpack.c.l.b16 %v2581
        %v2618 = vunpack.c.l.b16 %v2582
        %v2619 = vunpack.c.l.b16 %v2583
        %v2620 = vunpack.c.l.b16 %v2584
        %v2621 = vunpack.c.l.b16 %v2585
        %v2622 = vunpack.c.l.b16 %v2586
        %v2623 = vunpack.c.l.b16 %v2587
        %v2624 = vunpack.c.l.b16 %v2588
        %v2625 = vunpack.c.l.b16 %v2589
        %v2626 = vunpack.c.l.b16 %v2590
        %v2627 = vpack.c.b16 %v2612, %v2611
        %v2628 = vpack.c.b16 %v2614, %v2613
        %v2629 = vpack.c.b16 %v2616, %v2615
        %v2630 = vpack.c.b16 %v2618, %v2617
        %v2631 = vpack.c.b16 %v2620, %v2619
        %v2632 = vpack.c.b16 %v2622, %v2621
        %v2633 = vpack.c.b16 %v2624, %v2623
        %v2634 = vpack.c.b16 %v2626, %v2625
        %2643 = vmatpush.bf16.msra.mxu0 %v2634
        %2644 = vmatpush.bf16.msra.mxu0 %v2633
        %2645 = vmatpush.bf16.msra.mxu0 %v2632
        %2646 = vmatpush.bf16.msra.mxu0 %v2631
        %2647 = vmatpush.bf16.msra.mxu0 %v2630
        %2648 = vmatpush.bf16.msra.mxu0 %v2629
        %2649 = vmatpush.bf16.msra.mxu0 %v2628
        %2650 = vmatpush.bf16.msra.mxu0 %v2627
        %2651 = vmatmul.bf16.gmra.mxu0 %v2574
        %v2652 = vpop.f32.mrf.mxu0
        %v2653 = vadd.f32 %v2593, %v2652
        %v2654 = vpop.f32.mrf.mxu0
        %2655 = vdwg.mxu0
        %v2656 = vmax.f32 %v2653, 0.0
        %v2657 = vpack.c.bf16 %v2656, %v2656
        %v2658 = vld [vmem:[#allocation17] sm:$0xf]
        %v2659 = vld [vmem:[#allocation17 + $0x4] sm:$0xf]
        %v2660 = vld [vmem:[#allocation17 + $0x8] sm:$0xf]
        %v2661 = vld [vmem:[#allocation17 + $0xc] sm:$0xf]
        %v2662 = vld [vmem:[#allocation17 + $0x10] sm:$0xf]
        %v2663 = vld [vmem:[#allocation17 + $0x14] sm:$0xf]
        %v2664 = vld [vmem:[#allocation17 + $0x18] sm:$0xf]
        %v2665 = vld [vmem:[#allocation17 + $0x1c] sm:$0xf]
        %v2666 = vld [vmem:[#allocation17 + $0x20] sm:$0xf]
        %v2667 = vld [vmem:[#allocation17 + $0x24] sm:$0xf]
        %v2668 = vld [vmem:[#allocation17 + $0x28] sm:$0xf]
        %v2669 = vld [vmem:[#allocation17 + $0x2c] sm:$0xf]
        %v2670 = vld [vmem:[#allocation17 + $0x30] sm:$0xf]
        %v2671 = vld [vmem:[#allocation17 + $0x34] sm:$0xf]
        %v2672 = vld [vmem:[#allocation17 + $0x38] sm:$0xf]
        %v2673 = vld [vmem:[#allocation17 + $0x3c] sm:$0xf]
        %v2674 = vld [vmem:[%s13] sm:$0x1]
        %v2676 = vperm.slane %v2674, 0
        %v2694 = vunpack.c.l.b16 %v2658
        %v2695 = vunpack.c.l.b16 %v2659
        %v2696 = vunpack.c.l.b16 %v2660
        %v2697 = vunpack.c.l.b16 %v2661
        %v2698 = vunpack.c.l.b16 %v2662
        %v2699 = vunpack.c.l.b16 %v2663
        %v2700 = vunpack.c.l.b16 %v2664
        %v2701 = vunpack.c.l.b16 %v2665
        %v2702 = vunpack.c.l.b16 %v2666
        %v2703 = vunpack.c.l.b16 %v2667
        %v2704 = vunpack.c.l.b16 %v2668
        %v2705 = vunpack.c.l.b16 %v2669
        %v2706 = vunpack.c.l.b16 %v2670
        %v2707 = vunpack.c.l.b16 %v2671
        %v2708 = vunpack.c.l.b16 %v2672
        %v2709 = vunpack.c.l.b16 %v2673
        %v2710 = vpack.c.b16 %v2695, %v2694
        %v2711 = vpack.c.b16 %v2697, %v2696
        %v2712 = vpack.c.b16 %v2699, %v2698
        %v2713 = vpack.c.b16 %v2701, %v2700
        %v2714 = vpack.c.b16 %v2703, %v2702
        %v2715 = vpack.c.b16 %v2705, %v2704
        %v2716 = vpack.c.b16 %v2707, %v2706
        %v2717 = vpack.c.b16 %v2709, %v2708
        %2726 = vmatpush.bf16.msra.mxu0 %v2717
        %2727 = vmatpush.bf16.msra.mxu0 %v2716
        %2728 = vmatpush.bf16.msra.mxu0 %v2715
        %2729 = vmatpush.bf16.msra.mxu0 %v2714
        %2730 = vmatpush.bf16.msra.mxu0 %v2713
        %2731 = vmatpush.bf16.msra.mxu0 %v2712
        %2732 = vmatpush.bf16.msra.mxu0 %v2711
        %2733 = vmatpush.bf16.msra.mxu0 %v2710
        %2734 = vmatmul.bf16.gmra.mxu0 %v2657
        %v2735 = vpop.f32.mrf.mxu0
        %v2736 = vadd.f32 %v2676, %v2735
        %v2737 = vpop.f32.mrf.mxu0
        %2738 = vdwg.mxu0
        %v2739 = vadd.f32 %v2573, %v2736
        %v2740 = vld [vmem:[%s16] sm:$0x1]
        %v2741 = vld [vmem:[%s17] sm:$0x1]
        %2742 = vadd.xlane.f32.xlu0 %v2739
        %v2743 = vpop.xlane.xlu0 %2742
        %v2744 = vmul.f32 %v2743, 0.03125
        %v2745 = vsub.f32 %v2739, %v2744
        %v2746 = vmul.f32 %v2745, %v799
        %v2747 = vmul.f32 %v2746, %v2746
        %2748 = vadd.xlane.f32.xlu0 %v2747
        %v2749 = vpop.xlane.xlu0 %2748
        %v2750 = vmul.f32 %v2749, 0.03125
        %v2751 = vadd.f32 %v2750, 1e-05
        %v2752 = vrsqrt.pop %v2751
        %v2753 = vmul.f32 %v2752, %v2751
        %v2754 = vmul.f32 %v2753, %v2752
        %v2755 = vmul.f32 0.5, %v2754
        %v2756 = vsub.f32 1.5, %v2755
        %v2757 = vmul.f32 %v2752, %v2756
        %vm2758 = vweird.f32 %v2751
        %vm2759 = vweird.f32 %v2752
        %vm2760 = vmor %vm2758, %vm2759
        %v2761 = vsel %vm2760, %v2752, %v2757
        %v2762 = vmul.f32 %v2746, %v2761
        %v2764 = vperm.slane %v2740, 0
        %v2766 = vmul.f32 %v2762, %v2764
        %v2768 = vperm.slane %v2741, 0
        %v2770 = vadd.f32 %v2766, %v2768
        %2771 = vst [vmem:[%s786] sm:$0xff] %v2770
        %v2772 = vsel %vm1989, %v2030, 0.0
        %v2773 = vsel %vm1989, %v2031, 0.0
        %v2774 = vadd.f32 %v2772, %v2773
        %v2775 = vsel %vm1989, %v2032, 0.0
        %v2776 = vadd.f32 %v2774, %v2775
        %v2777 = vsel %vm1989, %v2033, 0.0
        %v2778 = vadd.f32 %v2776, %v2777
        %v2779 = vmul.f32 %v2778, 0.25
        %v2780 = vsel %vm1989, %v2779, 0.0
        %2781 = vst [vmem:[%s793] sm:$0xff] %v2780
        %s2782 = sand.u32 %s443, 1
        %s2783 = scalar_lea.sflag [#allocation4], %s2782
        %s2784 = sand.u32 %s443, 1
        %s2785 = smul.addr %s2784, 8
        %s2786 = scalar_lea.vmem [#allocation19], %s2785
        %s2787 = sand.u32 %s469, 1
        %s2788 = scalar_lea.sflag [#allocation21], %s2787
        %s2789 = sand.u32 %s469, 1
        %s2790 = smul.addr %s2789, 8
        %s2791 = scalar_lea.vmem [#allocation20], %s2790
        // Predicated region
        $region133: #{tpu_custom_call.1} parent=91 // pred_check
          %p2792 = pneg %p453
        $region134: #{tpu_custom_call.1} parent=91 // pred_check_branch
          %2794 = sbr.rel (%p2792) target = $region136
        $region135: #{tpu_custom_call.1} parent=91 // pred_region
          %2796 = vsyncadd %s2783, 0
          %s2797 = smul.addr %s47, 8
          %s2798 = scalar_lea.hbm %s18, %s2797
          %s2800 = sshll.u32 %s2786, 4
          %s2801 = int_to_ptr.vmem [resolvable:$true] %s2800
          %s2802 = sshll.u32 %s2798, 4
          %s2803 = int_to_ptr.hbm [resolvable:$true] %s2802
          %2805 = dma.vmem_to_hbm [thread:$0]  %s2801, 128, %s2803, %s2783
        $region136: #{tpu_custom_call.1} parent=91 // pred_fallthru
          _
        // Predicated region
        $region137: #{tpu_custom_call.1} parent=91 // pred_check
          %p2806 = pneg %p479
        $region138: #{tpu_custom_call.1} parent=91 // pred_check_branch
          %2808 = sbr.rel (%p2806) target = $region140
        $region139: #{tpu_custom_call.1} parent=91 // pred_region
          %2810 = vsyncadd %s2788, 0
          %s2811 = smul.addr %s47, 8
          %s2812 = scalar_lea.hbm %s19, %s2811
          %s2814 = sshll.u32 %s2791, 4
          %s2815 = int_to_ptr.vmem [resolvable:$true] %s2814
          %s2816 = sshll.u32 %s2812, 4
          %s2817 = int_to_ptr.hbm [resolvable:$true] %s2816
          %2819 = dma.vmem_to_hbm [thread:$0]  %s2815, 128, %s2817, %s2788
        $region140: #{tpu_custom_call.1} parent=91 // pred_fallthru
          _
      $region92: #{tpu_custom_call.1} parent=5 // pred_fallthru
        _
      %p2820 = scmp.le.s32.totalorder 2, %s42
      // Predicated region
      $region141: #{tpu_custom_call.1} parent=5 // pred_check
        %p2821 = pneg %p2820
      $region142: #{tpu_custom_call.1} parent=5 // pred_check_branch
        %2823 = sbr.rel (%p2821) target = $region144
      $region143: #{tpu_custom_call.1} parent=5 // pred_region
        %s2824 = ssub.s32 %s42, 2
        // Predicated region
        $region145: #{tpu_custom_call.1} parent=143 // pred_check
          %p2825 = pneg %p459
        $region146: #{tpu_custom_call.1} parent=143 // pred_check_branch
          %2827 = sbr.rel (%p2825) target = $region148
        $region147: #{tpu_custom_call.1} parent=143 // pred_region
          %s2828 = sand.u32 %s444, 1
          %s2829 = scalar_lea.sflag [#allocation4], %s2828
          %s2830 = sand.u32 %s444, 1
          %s2831 = smul.addr %s2830, 8
          %s2832 = scalar_lea.vmem [#allocation19], %s2831
          %2834 = dma.done %s2829, 128
        $region148: #{tpu_custom_call.1} parent=143 // pred_fallthru
          _
        // Predicated region
        $region149: #{tpu_custom_call.1} parent=143 // pred_check
          %p2835 = pneg %p485
        $region150: #{tpu_custom_call.1} parent=143 // pred_check_branch
          %2837 = sbr.rel (%p2835) target = $region152
        $region151: #{tpu_custom_call.1} parent=143 // pred_region
          %s2838 = sand.u32 %s470, 1
          %s2839 = scalar_lea.sflag [#allocation21], %s2838
          %s2840 = sand.u32 %s470, 1
          %s2841 = smul.addr %s2840, 8
          %s2842 = scalar_lea.vmem [#allocation20], %s2841
          %2844 = dma.done %s2839, 128
        $region152: #{tpu_custom_call.1} parent=143 // pred_fallthru
          _
      $region144: #{tpu_custom_call.1} parent=5 // pred_fallthru
        _
    $region6: #{tpu_custom_call.1} parent=1 // loop_footer
      %s46 = sadd.s32 1, %s42
    $region7: #{tpu_custom_call.1} parent=1 // loop_footer_branch
      %41 = sbr.rel target = $region3
    $region8: #{tpu_custom_call.1} parent=1 // loop_exit
      _
    %2845 = vsyncpa [#allocation3], 1
    %s2846 = scalar_lea.sflag [#allocation3], 1
    %2847 = vsyncpa %s2846, 1
    %2848 = vsyncpa [#allocation6], 1
    %s2849 = scalar_lea.sflag [#allocation6], 1
    %2850 = vsyncpa %s2849, 1
    %2851 = vsyncpa [#allocation9], 1
    %2852 = vsyncpa [#allocation12], 1
    %2853 = vsyncpa [#allocation15], 1
    %2854 = vsyncpa [#allocation18], 1
    %2855 = vsyncpa [#allocation4], 1
    %s2856 = scalar_lea.sflag [#allocation4], 1
    %2857 = vsyncpa %s2856, 1
    %2858 = vsyncpa [#allocation21], 1
    %s2859 = scalar_lea.sflag [#allocation21], 1
    %2860 = vsyncpa %s2859, 1

</llo_original>
